<compile_context>
chip_gen: v7x
topology: tpu7x:2x2x1
jax: 0.10.0
libtpu: 0.0.40
codegen_flags: <defaults>
</compile_context>

<pallas_src>
import numpy as np
import jax
import jax.numpy as jnp
from jax import lax
from jax.experimental import pallas as pl
from jax.experimental.pallas import tpu as pltpu

# ----------------------------- configuration -------------------------------
B = 2          # batch
L = 16         # sequence length (num_res)
C_S = 32       # node embedding dim (c_s)
C_P = 64       # edge embedding dim (c_p)
FEAT_DIM = 32  # feat_dim
NUM_BINS = 16  # num_bins
MAX_LEN_EMB = 2056                              # hardcoded in get_index_embedding
TOTAL_FEATS = FEAT_DIM * 3 + NUM_BINS * 2       # = 128 (full W1 K dim)
NB2 = 2 * NUM_BINS                              # 32 distogram lanes (t | sc)
N_EDGES = B * L * L                             # 512 = matmul M dim

assert L % 8 == 0            # keeps all in-kernel reshapes as free sublane folds
assert TOTAL_FEATS == 128

# ---------------- host-side (trace-time) constant tables --------------------
_INV_FREQ = (np.pi / (MAX_LEN_EMB ** (2.0 * np.arange(FEAT_DIM // 2) / FEAT_DIM))
             ).astype(np.float32)                                   # (FD/2,)
_LOWER = np.linspace(0.001, 20.0, NUM_BINS).astype(np.float32)      # (NB,)
_UPPER = np.concatenate([_LOWER[1:], np.array([1e8], np.float32)])  # (NB,)

# Relative-position sinusoidal table (batch independent) -> [L*L, FEAT_DIM].
_pos = np.arange(L, dtype=np.float32)
_rel = _pos[:, None] - _pos[None, :]
_ang = _rel[..., None] * _INV_FREQ
_POS_EMB = np.concatenate([np.sin(_ang), np.cos(_ang)], axis=-1
                          ).reshape(L * L, FEAT_DIM).astype(np.float32)

# Constant-slab rows 4/5: squared bin edges placed in the 32 distogram lanes.
_CROWS = np.zeros((4, C_P), np.float32)
_CROWS[0, :NB2] = np.concatenate([_LOWER ** 2, _LOWER ** 2])
_CROWS[1, :NB2] = np.concatenate([_UPPER ** 2, _UPPER ** 2])


# ------------------------------- the kernel --------------------------------
def edge_kernel(uv_ref, relb_ref, d2_ref, m_ref, w_ref, c_ref, out_ref):
    f32, bf16 = jnp.float32, jnp.bfloat16
    _, B_, Lk, CP = uv_ref.shape
    NLL = Lk * Lk
    N = B_ * NLL                       # B*L*L rows (grid collapsed to 1 step)

    # ---- precomputed layer-1 contributions (f32): u[b,i] + v[b,j] + relpos + b1
    u = uv_ref[0]                                            # [B, L, CP]
    v = uv_ref[1]                                            # [B, L, CP]
    bias1 = (u[:, :, None, :] + v[:, None, :, :]).reshape(B_, NLL, CP)
    bias1 = (bias1 + relb_ref[...]).reshape(N, CP)           # relb bcasts over B

    # ---- distogram indicators: squared-distance bin test (exact 0/1 in bf16)
    lo2 = c_ref[4:5, 0:NB2]
    hi2 = c_ref[5:6, 0:NB2]
    d2 = d2_ref[...]                                         # [N, 32] pre-placed
    dist = jnp.logical_and(d2 > lo2, d2 < hi2).astype(bf16)

    # ---- edge MLP: explicit single-pass bf16 MXU matmuls, f32 accumulate ----
    # (On v6e/v7x these K=32/64 matmuls use a fraction of the 256-wide MXU;
    #  the MXU is nowhere near the binding slot here.)
    w1d = w_ref[0:NB2, :]                                    # [32, CP] bf16
    w2 = w_ref[NB2:NB2 + CP, :]                              # [CP, CP] bf16
    w3 = w_ref[NB2 + CP:NB2 + 2 * CP, :]                     # [CP, CP] bf16
    b2, b3 = c_ref[0:1, :], c_ref[1:2, :]
    g, beta = c_ref[2:3, :], c_ref[3:4, :]

    h = jnp.maximum(jnp.dot(dist, w1d, preferred_element_type=f32) + bias1, 0.0)
    h = jnp.maximum(jnp.dot(h.astype(bf16), w2, preferred_element_type=f32) + b2, 0.0)
    h = jnp.dot(h.astype(bf16), w3, preferred_element_type=f32) + b3

    # ---- LayerNorm over C_P: fused moments (one pass: mean and E[x^2]) ------
    mean = jnp.mean(h, axis=-1, keepdims=True)
    ex2 = jnp.mean(h * h, axis=-1, keepdims=True)
    h = (h - mean) * lax.rsqrt(ex2 - mean * mean + 1e-5) * g + beta

    # ---- edge mask applied twice (fwd_2d's p_mask + forward()'s edge_mask),
    #      exact for any (even non-binary) node mask.
    m = m_ref[...]                                           # [B, L, 1]
    em = (m[:, :, None, :] * m[:, None, :, :]).reshape(N, 1)
    out_ref[...] = (h * (em * em)).astype(out_ref.dtype)


# ------------------------------ JAX wrapper ---------------------------------
def fwd_2d_pallas(params, node_embed, translations, trans_sc, node_mask):
    f32 = jnp.float32
    hi = lax.Precision.HIGHEST
    Bn, Ln, _ = node_embed.shape
    NLL = Ln * Ln
    N = Bn * NLL

    # Split W1 by feature group (rows: row-copy | col-copy | relpos | distograms).
    w1 = params["w1"]
    w1_row = w1[0:FEAT_DIM]
    w1_col = w1[FEAT_DIM:2 * FEAT_DIM]
    w1_rel = w1[2 * FEAT_DIM:3 * FEAT_DIM]
    w1_dist = w1[3 * FEAT_DIM:]

    # Per-node linear_s_p, pre-multiplied by its W1 block.  Kept at HIGHEST
    # precision: these carry the bulk of layer 1, so computing them in f32
    # outside the kernel improves end-to-end accuracy at negligible cost.
    p_i = (jnp.einsum("blc,cf->blf", node_embed, params["w_sp"], precision=hi)
           + params["b_sp"])                                        # [B, L, FD]
    uv = jnp.stack([jnp.einsum("blf,fc->blc", p_i, w1_row, precision=hi),
                    jnp.einsum("blf,fc->blc", p_i, w1_col, precision=hi)],
                   axis=0)                                          # [2, B, L, CP]

    # Relative-position term (batch independent): sin/cos table is a host
    # constant; linear_relpos, its W1 block and b1 are folded in here.
    relf = (jnp.einsum("xf,fg->xg", jnp.asarray(_POS_EMB), params["w_rel"],
                       precision=hi) + params["b_rel"])             # [LL, FD]
    relb = (jnp.einsum("xg,gc->xc", relf, w1_rel, precision=hi)
            + params["b1"])                                         # [LL, CP]

    # Pairwise squared distances, pre-placed in the 32 distogram bin lanes
    # (backbone in lanes 0:16, side chain in 16:32).  Squared comparison is
    # order-equivalent to the reference's sqrt-then-compare.
    def pd2(x):
        d = x[:, :, None, :] - x[:, None, :, :]
        return jnp.sum(d * d, axis=-1).reshape(N, 1)
    d2 = jnp.concatenate(
        [jnp.broadcast_to(pd2(translations), (N, NUM_BINS)),
         jnp.broadcast_to(pd2(trans_sc), (N, NUM_BINS))], axis=-1)  # [N, 32]

    mask3 = node_mask[..., None].astype(f32)                        # [B, L, 1]

    # Packed weight slab (bf16: single MXU pass on all generations, half the
    # DMA bytes) and constant slab (f32: biases, LN params, squared bin edges).
    wslab = jnp.concatenate([w1_dist, params["w2"], params["w3"]], axis=0
                            ).astype(jnp.bfloat16)                  # [160, CP]
    cslab = jnp.concatenate([params["b2"], params["b3"], params["ln_g"],
                             params["ln_b"], jnp.asarray(_CROWS)],
                            axis=0)                                 # [8, CP]

    def full_spec(shape):
        n = len(shape)
        return pl.BlockSpec(shape, lambda i: (0,) * n)

    # NOTE on scaling (v7x): a full-N activation slab is fine at L=16; for
    # large L tile the LxL edge grid (N_tile <~ 16-32K edges per step, e.g.
    # 128x128 row/col tiles) and set vmem_limit_bytes against 64 MiB VMEM.
    out = pl.pallas_call(
        edge_kernel,
        out_shape=jax.ShapeDtypeStruct((N, C_P), f32),
        grid_spec=pltpu.PrefetchScalarGridSpec(
            num_scalar_prefetch=0,
            grid=(1,),                 # single step: B folded into the M dim
            in_specs=[full_spec(uv.shape), full_spec(relb.shape),
                      full_spec(d2.shape), full_spec(mask3.shape),
                      full_spec(wslab.shape), full_spec(cslab.shape)],
            out_specs=full_spec((N, C_P)),
        ),
        compiler_params=pltpu.CompilerParams(
            dimension_semantics=("arbitrary",)),
    )(uv, relb, d2, mask3, wslab, cslab)
    return out.reshape(Bn, Ln, Ln, C_P)      # free leading-dim split


def edge_embedder_forward(params, node_embed, translations, trans_sc, node_mask,
                          edge_embed=None, edge_mask=None, mode="orig_2d_bias"):
    """Mirrors EdgeEmbedder.forward().  Returns (edge_embed, z1, z2, edge_mask)."""
    if mode in ("orig_no_bias", "flash_no_bias"):
        return None, None, None, None
    if mode != "orig_2d_bias":
        # TODO(synk): flash_1d_bias / flash_2d_factorize_bias not ported (see header).
        raise NotImplementedError(mode)

    derived = edge_mask is None
    if derived:
        edge_mask = node_mask[:, None, :] * node_mask[:, :, None]
    if edge_embed is None:
        if derived:
            # Fused path: the kernel applies the node-mask outer product twice
            # (fwd_2d's p_mask multiply + forward()'s edge_mask multiply).
            edge_embed = fwd_2d_pallas(params, node_embed, translations,
                                       trans_sc, node_mask)
            return edge_embed, None, None, edge_mask
        # Custom edge_mask: compute unmasked, apply fwd_2d's mask here.
        edge_embed = fwd_2d_pallas(params, node_embed, translations, trans_sc,
                                   jnp.ones_like(node_mask)) * edge_mask[..., None]
    edge_embed = edge_embed * edge_mask[..., None]
    return edge_embed, None, None, edge_mask


# --------------------------- pure-JAX reference ------------------------------
def reference_forward(params, node_embed, t, sc, node_mask):
    f32 = jnp.float32
    hi = lax.Precision.HIGHEST
    Bn, Ln, _ = node_embed.shape
    p_i = jnp.einsum("blc,cf->blf", node_embed, params["w_sp"],
                     precision=hi) + params["b_sp"]
    cross = jnp.concatenate([jnp.tile(p_i[:, :, None, :], (1, 1, Ln, 1)),
                             jnp.tile(p_i[:, None, :, :], (1, Ln, 1, 1))], axis=-1)
    pos = jnp.tile(jnp.arange(Ln, dtype=f32)[None, :], (Bn, 1))
    rel = pos[:, :, None] - pos[:, None, :]
    ang = rel[..., None] * jnp.asarray(_INV_FREQ)
    pos_emb = jnp.concatenate([jnp.sin(ang), jnp.cos(ang)], axis=-1)
    relf = jnp.einsum("blmf,fg->blmg", pos_emb, params["w_rel"],
                      precision=hi) + params["b_rel"][0]

    def dgram(x):
        d = jnp.sqrt(jnp.sum((x[:, :, None, :] - x[:, None, :, :]) ** 2,
                             axis=-1))[..., None]
        return jnp.logical_and(d > jnp.asarray(_LOWER),
                               d < jnp.asarray(_UPPER)).astype(f32)

    feats = jnp.concatenate([cross, relf, dgram(t), dgram(sc)], axis=-1)
    h = jnp.maximum(jnp.einsum("blmf,fc->blmc", feats, params["w1"],
                               precision=hi) + params["b1"][0], 0.0)
    h = jnp.maximum(jnp.einsum("blmc,cd->blmd", h, params["w2"],
                               precision=hi) + params["b2"][0], 0.0)
    h = jnp.einsum("blmc,cd->blmd", h, params["w3"], precision=hi) + params["b3"][0]
    mean = jnp.mean(h, axis=-1, keepdims=True)
    var = jnp.mean((h - mean) ** 2, axis=-1, keepdims=True)
    h = (h - mean) * lax.rsqrt(var + 1e-5) * params["ln_g"][0] + params["ln_b"][0]
    em = node_mask[:, None, :] * node_mask[:, :, None]
    h = h * em[..., None]   # inside fwd_2d
    h = h * em[..., None]   # again in forward()
    return h


# ----------------------------------- main ------------------------------------
if __name__ == "__main__":
    key = jax.random.PRNGKey(0)
    ks = jax.random.split(key, 16)

    def init(k, shape, scale=0.1):
        return (scale * jax.random.normal(k, shape)).astype(jnp.float32)

    params = {
        "w_sp":  init(ks[0], (C_S, FEAT_DIM)),
        "b_sp":  init(ks[1], (FEAT_DIM,)),
        "w_rel": init(ks[2], (FEAT_DIM, FEAT_DIM)),
        "b_rel": init(ks[3], (1, FEAT_DIM)),
        "w1":    init(ks[4], (TOTAL_FEATS, C_P)),
        "b1":    init(ks[5], (1, C_P)),
        "w2":    init(ks[6], (C_P, C_P)),
        "b2":    init(ks[7], (1, C_P)),
        "w3":    init(ks[8], (C_P, C_P)),
        "b3":    init(ks[9], (1, C_P)),
        "ln_g":  (1.0 + 0.1 * jax.random.normal(ks[10], (1, C_P))).astype(jnp.float32),
        "ln_b":  init(ks[11], (1, C_P)),
    }

    node_embed = jax.random.normal(ks[12], (B, L, C_S), dtype=jnp.float32)
    translations = 5.0 * jax.random.normal(ks[13], (B, L, 3), dtype=jnp.float32)
    trans_sc = 5.0 * jax.random.normal(ks[14], (B, L, 3), dtype=jnp.float32)
    node_mask = jax.random.bernoulli(ks[15], 0.85, (B, L)).astype(jnp.float32)

    fwd = jax.jit(edge_embedder_forward, static_argnames=("mode",))
    edge_embed, z1, z2, edge_mask = fwd(params, node_embed, translations,
                                        trans_sc, node_mask, mode="orig_2d_bias")
    edge_embed = jax.block_until_ready(edge_embed)

    ref = reference_forward(params, node_embed, translations, trans_sc, node_mask)
    assert edge_embed.shape == (B, L, L, C_P)
    # Tolerance covers the explicit-bf16 MXU matmuls (layers 2/3 + the
    # distogram part of layer 1) vs the f32 HIGHEST reference, amplified by
    # LayerNorm's rsqrt(var); it is now conservative because the dominant
    # layer-1 terms are computed in f32 outside the kernel.  A genuine logic
    # error would produce O(0.1-1) deviations.
    np.testing.assert_allclose(np.asarray(edge_embed), np.asarray(ref),
                               rtol=5e-2, atol=5e-2)
    print("KERNEL_OK")
</pallas_src>

<mosaic_0001>
module attributes {stable_mosaic.version = 11 : i64} {
  func.func @edge_kernel(%arg0: i32, %arg1: memref<2x2x16x64xf32, #tpu.memory_space<vmem>>, %arg2: memref<256x64xf32, #tpu.memory_space<vmem>>, %arg3: memref<512x32xf32, #tpu.memory_space<vmem>>, %arg4: memref<2x16x1xf32, #tpu.memory_space<vmem>>, %arg5: memref<160x64xbf16, #tpu.memory_space<vmem>>, %arg6: memref<8x64xf32, #tpu.memory_space<vmem>>, %arg7: memref<512x64xf32, #tpu.memory_space<vmem>>) attributes {dimension_semantics = [#tpu.dimension_semantics<arbitrary>], iteration_bounds = array<i64: 1>, scalar_prefetch = 0 : i64, scratch_operands = 0 : i64, tpu.core_type = #tpu.core_type<tc>, window_params = [{pipeline_mode = #tpu.pipeline_mode<synchronous>, transform_indices = @transform_0, window_bounds = array<i64: 2, 2, 16, 64>}, {pipeline_mode = #tpu.pipeline_mode<synchronous>, transform_indices = @transform_1, window_bounds = array<i64: 256, 64>}, {pipeline_mode = #tpu.pipeline_mode<synchronous>, transform_indices = @transform_2, window_bounds = array<i64: 512, 32>}, {pipeline_mode = #tpu.pipeline_mode<synchronous>, transform_indices = @transform_3, window_bounds = array<i64: 2, 16, 1>}, {pipeline_mode = #tpu.pipeline_mode<synchronous>, transform_indices = @transform_4, window_bounds = array<i64: 160, 64>}, {pipeline_mode = #tpu.pipeline_mode<synchronous>, transform_indices = @transform_5, window_bounds = array<i64: 8, 64>}, {pipeline_mode = #tpu.pipeline_mode<synchronous>, transform_indices = @transform_6, window_bounds = array<i64: 512, 64>}]} {
    %c0 = arith.constant 0 : index
    %c0_0 = arith.constant 0 : index
    %c0_1 = arith.constant 0 : index
    %c0_2 = arith.constant 0 : index
    %0 = vector.load %arg1[%c0, %c0_0, %c0_1, %c0_2] : memref<2x2x16x64xf32, #tpu.memory_space<vmem>>, vector<1x2x16x64xf32>
    %1 = vector.shape_cast %0 : vector<1x2x16x64xf32> to vector<2x16x64xf32>
    %c1 = arith.constant 1 : index
    %c0_3 = arith.constant 0 : index
    %c0_4 = arith.constant 0 : index
    %c0_5 = arith.constant 0 : index
    %2 = vector.load %arg1[%c1, %c0_3, %c0_4, %c0_5] : memref<2x2x16x64xf32, #tpu.memory_space<vmem>>, vector<1x2x16x64xf32>
    %3 = vector.shape_cast %2 : vector<1x2x16x64xf32> to vector<2x16x64xf32>
    %4 = vector.shape_cast %1 : vector<2x16x64xf32> to vector<2x16x1x64xf32>
    %5 = vector.shape_cast %3 : vector<2x16x64xf32> to vector<2x1x16x64xf32>
    %6 = vector.broadcast %4 : vector<2x16x1x64xf32> to vector<2x16x16x64xf32>
    %7 = vector.broadcast %5 : vector<2x1x16x64xf32> to vector<2x16x16x64xf32>
    %8 = arith.addf %6, %7 : vector<2x16x16x64xf32>
    %9 = vector.shape_cast %8 : vector<2x16x16x64xf32> to vector<2x256x64xf32>
    %c0_6 = arith.constant 0 : index
    %c0_7 = arith.constant 0 : index
    %10 = vector.load %arg2[%c0_6, %c0_7] : memref<256x64xf32, #tpu.memory_space<vmem>>, vector<256x64xf32>
    %11 = vector.shape_cast %10 : vector<256x64xf32> to vector<1x256x64xf32>
    %12 = vector.broadcast %11 : vector<1x256x64xf32> to vector<2x256x64xf32>
    %13 = arith.addf %9, %12 : vector<2x256x64xf32>
    %14 = vector.shape_cast %13 : vector<2x256x64xf32> to vector<512x64xf32>
    %c4 = arith.constant 4 : index
    %c0_8 = arith.constant 0 : index
    %15 = vector.load %arg6[%c4, %c0_8] : memref<8x64xf32, #tpu.memory_space<vmem>>, vector<1x32xf32>
    %c5 = arith.constant 5 : index
    %c0_9 = arith.constant 0 : index
    %16 = vector.load %arg6[%c5, %c0_9] : memref<8x64xf32, #tpu.memory_space<vmem>>, vector<1x32xf32>
    %c0_10 = arith.constant 0 : index
    %c0_11 = arith.constant 0 : index
    %17 = vector.load %arg3[%c0_10, %c0_11] : memref<512x32xf32, #tpu.memory_space<vmem>>, vector<512x32xf32>
    %18 = vector.broadcast %15 : vector<1x32xf32> to vector<512x32xf32>
    %19 = arith.cmpf ogt, %17, %18 : vector<512x32xf32>
    %20 = vector.broadcast %16 : vector<1x32xf32> to vector<512x32xf32>
    %21 = arith.cmpf olt, %17, %20 : vector<512x32xf32>
    %22 = arith.andi %19, %21 : vector<512x32xi1>
    %23 = arith.extui %22 : vector<512x32xi1> to vector<512x32xi32>
    %24 = arith.sitofp %23 : vector<512x32xi32> to vector<512x32xf32>
    %25 = arith.truncf %24 : vector<512x32xf32> to vector<512x32xbf16>
    %c0_12 = arith.constant 0 : index
    %c0_13 = arith.constant 0 : index
    %26 = vector.load %arg5[%c0_12, %c0_13] : memref<160x64xbf16, #tpu.memory_space<vmem>>, vector<32x64xbf16>
    %c32 = arith.constant 32 : index
    %c0_14 = arith.constant 0 : index
    %27 = vector.load %arg5[%c32, %c0_14] : memref<160x64xbf16, #tpu.memory_space<vmem>>, vector<64x64xbf16>
    %c96 = arith.constant 96 : index
    %c0_15 = arith.constant 0 : index
    %28 = vector.load %arg5[%c96, %c0_15] : memref<160x64xbf16, #tpu.memory_space<vmem>>, vector<64x64xbf16>
    %c0_16 = arith.constant 0 : index
    %c0_17 = arith.constant 0 : index
    %29 = vector.load %arg6[%c0_16, %c0_17] : memref<8x64xf32, #tpu.memory_space<vmem>>, vector<1x64xf32>
    %c1_18 = arith.constant 1 : index
    %c0_19 = arith.constant 0 : index
    %30 = vector.load %arg6[%c1_18, %c0_19] : memref<8x64xf32, #tpu.memory_space<vmem>>, vector<1x64xf32>
    %c2 = arith.constant 2 : index
    %c0_20 = arith.constant 0 : index
    %31 = vector.load %arg6[%c2, %c0_20] : memref<8x64xf32, #tpu.memory_space<vmem>>, vector<1x64xf32>
    %c3 = arith.constant 3 : index
    %c0_21 = arith.constant 0 : index
    %32 = vector.load %arg6[%c3, %c0_21] : memref<8x64xf32, #tpu.memory_space<vmem>>, vector<1x64xf32>
    %cst = arith.constant dense<0.000000e+00> : vector<512x64xf32>
    %33 = tpu.matmul %25, %26, %cst {dimension_numbers = #tpu.dot_dimension_numbers<[1], [0], [0], [1], [0, 0, 1, 1], [], []>} : vector<512x32xbf16>, vector<32x64xbf16>, vector<512x64xf32> -> vector<512x64xf32>
    %34 = arith.addf %33, %14 : vector<512x64xf32>
    %cst_22 = arith.constant 0.000000e+00 : f32
    %35 = vector.broadcast %cst_22 : f32 to vector<512x64xf32>
    %36 = arith.maximumf %34, %35 : vector<512x64xf32>
    %37 = arith.truncf %36 : vector<512x64xf32> to vector<512x64xbf16>
    %cst_23 = arith.constant dense<0.000000e+00> : vector<512x64xf32>
    %38 = tpu.matmul %37, %27, %cst_23 {dimension_numbers = #tpu.dot_dimension_numbers<[1], [0], [0], [1], [0, 0, 1, 1], [], []>} : vector<512x64xbf16>, vector<64x64xbf16>, vector<512x64xf32> -> vector<512x64xf32>
    %39 = vector.broadcast %29 : vector<1x64xf32> to vector<512x64xf32>
    %40 = arith.addf %38, %39 : vector<512x64xf32>
    %cst_24 = arith.constant 0.000000e+00 : f32
    %41 = vector.broadcast %cst_24 : f32 to vector<512x64xf32>
    %42 = arith.maximumf %40, %41 : vector<512x64xf32>
    %43 = arith.truncf %42 : vector<512x64xf32> to vector<512x64xbf16>
    %cst_25 = arith.constant dense<0.000000e+00> : vector<512x64xf32>
    %44 = tpu.matmul %43, %28, %cst_25 {dimension_numbers = #tpu.dot_dimension_numbers<[1], [0], [0], [1], [0, 0, 1, 1], [], []>} : vector<512x64xbf16>, vector<64x64xbf16>, vector<512x64xf32> -> vector<512x64xf32>
    %45 = vector.broadcast %30 : vector<1x64xf32> to vector<512x64xf32>
    %46 = arith.addf %44, %45 : vector<512x64xf32>
    %cst_26 = arith.constant dense<0.000000e+00> : vector<512xf32>
    %47 = vector.multi_reduction <add>, %46, %cst_26 [1] : vector<512x64xf32> to vector<512xf32>
    %48 = vector.shape_cast %47 : vector<512xf32> to vector<512x1xf32>
    %cst_27 = arith.constant 6.400000e+01 : f32
    %49 = vector.broadcast %cst_27 : f32 to vector<512x1xf32>
    %50 = arith.divf %48, %49 : vector<512x1xf32>
    %51 = arith.mulf %46, %46 : vector<512x64xf32>
    %cst_28 = arith.constant dense<0.000000e+00> : vector<512xf32>
    %52 = vector.multi_reduction <add>, %51, %cst_28 [1] : vector<512x64xf32> to vector<512xf32>
    %53 = vector.shape_cast %52 : vector<512xf32> to vector<512x1xf32>
    %cst_29 = arith.constant 6.400000e+01 : f32
    %54 = vector.broadcast %cst_29 : f32 to vector<512x1xf32>
    %55 = arith.divf %53, %54 : vector<512x1xf32>
    %56 = vector.broadcast %50 : vector<512x1xf32> to vector<512x64xf32>
    %57 = arith.subf %46, %56 : vector<512x64xf32>
    %58 = arith.mulf %50, %50 : vector<512x1xf32>
    %59 = arith.subf %55, %58 : vector<512x1xf32>
    %cst_30 = arith.constant 9.99999974E-6 : f32
    %60 = vector.broadcast %cst_30 : f32 to vector<512x1xf32>
    %61 = arith.addf %59, %60 : vector<512x1xf32>
    %62 = math.rsqrt %61 : vector<512x1xf32>
    %63 = vector.broadcast %62 : vector<512x1xf32> to vector<512x64xf32>
    %64 = arith.mulf %57, %63 : vector<512x64xf32>
    %65 = vector.broadcast %31 : vector<1x64xf32> to vector<512x64xf32>
    %66 = arith.mulf %64, %65 : vector<512x64xf32>
    %67 = vector.broadcast %32 : vector<1x64xf32> to vector<512x64xf32>
    %68 = arith.addf %66, %67 : vector<512x64xf32>
    %c0_31 = arith.constant 0 : index
    %c0_32 = arith.constant 0 : index
    %c0_33 = arith.constant 0 : index
    %69 = vector.load %arg4[%c0_31, %c0_32, %c0_33] : memref<2x16x1xf32, #tpu.memory_space<vmem>>, vector<2x16x1xf32>
    %70 = vector.shape_cast %69 : vector<2x16x1xf32> to vector<2x16x1x1xf32>
    %71 = vector.shape_cast %69 : vector<2x16x1xf32> to vector<2x1x16x1xf32>
    %72 = vector.broadcast %70 : vector<2x16x1x1xf32> to vector<2x16x16x1xf32>
    %73 = vector.broadcast %71 : vector<2x1x16x1xf32> to vector<2x16x16x1xf32>
    %74 = arith.mulf %72, %73 : vector<2x16x16x1xf32>
    %75 = vector.shape_cast %74 : vector<2x16x16x1xf32> to vector<512x1xf32>
    %76 = arith.mulf %75, %75 : vector<512x1xf32>
    %77 = vector.broadcast %76 : vector<512x1xf32> to vector<512x64xf32>
    %78 = arith.mulf %68, %77 : vector<512x64xf32>
    %c0_34 = arith.constant 0 : index
    %c0_35 = arith.constant 0 : index
    %79 = vector.load %arg7[%c0_34, %c0_35] : memref<512x64xf32, #tpu.memory_space<vmem>>, vector<512x64xf32>
    tpu.vector_store %arg7[%c0_34, %c0_35], %78 {strides = array<i32>} : memref<512x64xf32, #tpu.memory_space<vmem>>, vector<512x64xf32>,
    return
  }
  func.func @transform_0(%arg0: i32) -> (i32, i32, i32, i32) {
    %c0_i32 = arith.constant 0 : i32
    %c0_i32_0 = arith.constant 0 : i32
    %c0_i32_1 = arith.constant 0 : i32
    %c0_i32_2 = arith.constant 0 : i32
    %c0_i32_3 = arith.constant 0 : i32
    return %c0_i32, %c0_i32_0, %c0_i32_1, %c0_i32_2 : i32, i32, i32, i32
  }
  func.func @transform_1(%arg0: i32) -> (i32, i32) {
    %c0_i32 = arith.constant 0 : i32
    %c0_i32_0 = arith.constant 0 : i32
    %c0_i32_1 = arith.constant 0 : i32
    return %c0_i32, %c0_i32_0 : i32, i32
  }
  func.func @transform_2(%arg0: i32) -> (i32, i32) {
    %c0_i32 = arith.constant 0 : i32
    %c0_i32_0 = arith.constant 0 : i32
    %c0_i32_1 = arith.constant 0 : i32
    return %c0_i32, %c0_i32_0 : i32, i32
  }
  func.func @transform_3(%arg0: i32) -> (i32, i32, i32) {
    %c0_i32 = arith.constant 0 : i32
    %c0_i32_0 = arith.constant 0 : i32
    %c0_i32_1 = arith.constant 0 : i32
    %c0_i32_2 = arith.constant 0 : i32
    return %c0_i32, %c0_i32_0, %c0_i32_1 : i32, i32, i32
  }
  func.func @transform_4(%arg0: i32) -> (i32, i32) {
    %c0_i32 = arith.constant 0 : i32
    %c0_i32_0 = arith.constant 0 : i32
    %c0_i32_1 = arith.constant 0 : i32
    return %c0_i32, %c0_i32_0 : i32, i32
  }
  func.func @transform_5(%arg0: i32) -> (i32, i32) {
    %c0_i32 = arith.constant 0 : i32
    %c0_i32_0 = arith.constant 0 : i32
    %c0_i32_1 = arith.constant 0 : i32
    return %c0_i32, %c0_i32_0 : i32, i32
  }
  func.func @transform_6(%arg0: i32) -> (i32, i32) {
    %c0_i32 = arith.constant 0 : i32
    %c0_i32_0 = arith.constant 0 : i32
    %c0_i32_1 = arith.constant 0 : i32
    return %c0_i32, %c0_i32_0 : i32, i32
  }
}

</mosaic_0001>

<llo_original>
// kernel: edge_embedder_forward.1
$region0: #{edge_embedder_forward.1}
  #allocation0 [shape = 'u32[]', space=smem, size = 0x4, offset = 0x4, fixed_abs, tag = 'smem constant byte address 0x4 - core index']
  #allocation1 [shape = 'u32[144,128]{1,0:T(1,128)}', space=vmem, size = 0x12000, scoped, tag = 'internal scratch']
  %s0 = inlined_call_operand.vmem [shape: f32[2,2,16,64], index: 0, kind: input, shape index: {}]
  %s1 = inlined_call_operand.vmem [shape: f32[256,64], index: 1, kind: input, shape index: {}]
  %s2 = inlined_call_operand.vmem [shape: f32[512,32], index: 2, kind: input, shape index: {}]
  %s3 = inlined_call_operand.vmem [shape: f32[2,16,1], index: 3, kind: input, shape index: {}]
  %s4 = inlined_call_operand.vmem [shape: bf16[160,64], index: 4, kind: input, shape index: {}]
  %s5 = inlined_call_operand.vmem [shape: f32[8,64], index: 5, kind: input, shape index: {}]
  %s6 = inlined_call_operand.hbm [shape: f32[512,64], index: 6, kind: output, shape index: {}]
  %s7 = sld [smem:[#allocation0]]
  $region34: #{edge_embedder_forward.1} parent=0
    _
  %s9 = ssub.s32 1, %s7
  %s10 = scalar_select 0, %s9, %s7
  $region1: #{edge_embedder_forward.1} parent=0
    #allocation2 [shape = 'u8[262144]{0}', space=vmem, size = 0x40000, scoped, tag = 'output window, operand 0, single buffered']
    #allocation3 [shape = 's32[1]{0}', space=sflag, size = 0x4, scoped, tag = 'scoped memory for edge_embedder_forward.1']
    %11 = vsyncpa [#allocation3], 0
    // Predicated region
    $region2: #{edge_embedder_forward.1} parent=1 // pred_check
      _
    $region3: #{edge_embedder_forward.1} parent=1 // pred_check_branch
      %13 = sbr.rel (0) target = $region5
    $region4: #{edge_embedder_forward.1} parent=1 // pred_region
      _
    $region5: #{edge_embedder_forward.1} parent=1 // pred_fallthru
      _
    // Predicated region
    $region6: #{edge_embedder_forward.1} parent=1 // pred_check
      _
    $region7: #{edge_embedder_forward.1} parent=1 // pred_check_branch
      %15 = sbr.rel (0) target = $region9
    $region8: #{edge_embedder_forward.1} parent=1 // pred_region
      _
    $region9: #{edge_embedder_forward.1} parent=1 // pred_fallthru
      _
    // Predicated region
    $region10: #{edge_embedder_forward.1} parent=1 // pred_check
      _
    $region11: #{edge_embedder_forward.1} parent=1 // pred_check_branch
      %17 = sbr.rel (0) target = $region13
    $region12: #{edge_embedder_forward.1} parent=1 // pred_region
      _
    $region13: #{edge_embedder_forward.1} parent=1 // pred_fallthru
      _
    // Predicated region
    $region14: #{edge_embedder_forward.1} parent=1 // pred_check
      _
    $region15: #{edge_embedder_forward.1} parent=1 // pred_check_branch
      %19 = sbr.rel (0) target = $region17
    $region16: #{edge_embedder_forward.1} parent=1 // pred_region
      _
    $region17: #{edge_embedder_forward.1} parent=1 // pred_fallthru
      _
    // Predicated region
    $region18: #{edge_embedder_forward.1} parent=1 // pred_check
      _
    $region19: #{edge_embedder_forward.1} parent=1 // pred_check_branch
      %21 = sbr.rel (0) target = $region21
    $region20: #{edge_embedder_forward.1} parent=1 // pred_region
      _
    $region21: #{edge_embedder_forward.1} parent=1 // pred_fallthru
      _
    // Predicated region
    $region22: #{edge_embedder_forward.1} parent=1 // pred_check
      _
    $region23: #{edge_embedder_forward.1} parent=1 // pred_check_branch
      %23 = sbr.rel (0) target = $region25
    $region24: #{edge_embedder_forward.1} parent=1 // pred_region
      _
    $region25: #{edge_embedder_forward.1} parent=1 // pred_fallthru
      _
    %v25 = vld [vmem:[%s0] sm:$0xff]
    %v26 = vld [vmem:[%s0 + $0x8] sm:$0xff]
    %v27 = vld [vmem:[%s0 + $0x10] sm:$0xff]
    %v28 = vld [vmem:[%s0 + $0x18] sm:$0xff]
    %s29 = scalar_lea.vmem %s0, 32
    %v30 = vld [vmem:[%s29] sm:$0xff]
    %v31 = vld [vmem:[%s29 + $0x8] sm:$0xff]
    %v32 = vld [vmem:[%s29 + $0x10] sm:$0xff]
    %v33 = vld [vmem:[%s29 + $0x18] sm:$0xff]
    %v38 = vcombine.high %v25, %v25
    %v40 = vunpack.c.l.s4 1966171168
    %v41 = vunpack.c.0.s8 %v40
    %v42 = vlaneseq
    %v43 = vshrl.u32 %v42, 7
    %v44 = vsub.s32 %v41, %v43
    %v45 = vrot.slane %v25, %v44
    %v47 = vunpack.c.l.s4 1966171168
    %v48 = vunpack.c.0.s8 %v47
    %v49 = vlaneseq
    %v50 = vshrl.u32 %v49, 7
    %v51 = vsub.s32 %v48, %v50
    %v52 = vrot.slane %v38, %v51
    %v53 = vcombine.high %v45, %v45
    %v54 = vcombine.high %v52, %v52
    %v56 = vunpack.c.l.s4 1966171168
    %v57 = vunpack.c.0.s8 %v56
    %v58 = vlaneseq
    %v59 = vshrl.u32 %v58, 7
    %v60 = vsub.s32 %v57, %v59
    %v61 = vrot.slane %v45, %v60
    %v63 = vunpack.c.l.s4 1966171168
    %v64 = vunpack.c.0.s8 %v63
    %v65 = vlaneseq
    %v66 = vshrl.u32 %v65, 7
    %v67 = vsub.s32 %v64, %v66
    %v68 = vrot.slane %v52, %v67
    %v70 = vunpack.c.l.s4 1966171168
    %v71 = vunpack.c.0.s8 %v70
    %v72 = vlaneseq
    %v73 = vshrl.u32 %v72, 7
    %v74 = vsub.s32 %v71, %v73
    %v75 = vrot.slane %v53, %v74
    %v77 = vunpack.c.l.s4 1966171168
    %v78 = vunpack.c.0.s8 %v77
    %v79 = vlaneseq
    %v80 = vshrl.u32 %v79, 7
    %v81 = vsub.s32 %v78, %v80
    %v82 = vrot.slane %v54, %v81
    %v83 = vcombine.high %v61, %v61
    %v84 = vcombine.high %v68, %v68
    %v85 = vcombine.high %v75, %v75
    %v86 = vcombine.high %v82, %v82
    %v87 = vcombine.high %v26, %v26
    %v89 = vunpack.c.l.s4 1966171168
    %v90 = vunpack.c.0.s8 %v89
    %v91 = vlaneseq
    %v92 = vshrl.u32 %v91, 7
    %v93 = vsub.s32 %v90, %v92
    %v94 = vrot.slane %v26, %v93
    %v96 = vunpack.c.l.s4 1966171168
    %v97 = vunpack.c.0.s8 %v96
    %v98 = vlaneseq
    %v99 = vshrl.u32 %v98, 7
    %v100 = vsub.s32 %v97, %v99
    %v101 = vrot.slane %v87, %v100
    %v102 = vcombine.high %v94, %v94
    %v103 = vcombine.high %v101, %v101
    %v105 = vunpack.c.l.s4 1966171168
    %v106 = vunpack.c.0.s8 %v105
    %v107 = vlaneseq
    %v108 = vshrl.u32 %v107, 7
    %v109 = vsub.s32 %v106, %v108
    %v110 = vrot.slane %v94, %v109
    %v112 = vunpack.c.l.s4 1966171168
    %v113 = vunpack.c.0.s8 %v112
    %v114 = vlaneseq
    %v115 = vshrl.u32 %v114, 7
    %v116 = vsub.s32 %v113, %v115
    %v117 = vrot.slane %v101, %v116
    %v119 = vunpack.c.l.s4 1966171168
    %v120 = vunpack.c.0.s8 %v119
    %v121 = vlaneseq
    %v122 = vshrl.u32 %v121, 7
    %v123 = vsub.s32 %v120, %v122
    %v124 = vrot.slane %v102, %v123
    %v126 = vunpack.c.l.s4 1966171168
    %v127 = vunpack.c.0.s8 %v126
    %v128 = vlaneseq
    %v129 = vshrl.u32 %v128, 7
    %v130 = vsub.s32 %v127, %v129
    %v131 = vrot.slane %v103, %v130
    %v132 = vcombine.high %v110, %v110
    %v133 = vcombine.high %v117, %v117
    %v134 = vcombine.high %v124, %v124
    %v135 = vcombine.high %v131, %v131
    %v136 = vcombine.high %v27, %v27
    %v138 = vunpack.c.l.s4 1966171168
    %v139 = vunpack.c.0.s8 %v138
    %v140 = vlaneseq
    %v141 = vshrl.u32 %v140, 7
    %v142 = vsub.s32 %v139, %v141
    %v143 = vrot.slane %v27, %v142
    %v145 = vunpack.c.l.s4 1966171168
    %v146 = vunpack.c.0.s8 %v145
    %v147 = vlaneseq
    %v148 = vshrl.u32 %v147, 7
    %v149 = vsub.s32 %v146, %v148
    %v150 = vrot.slane %v136, %v149
    %v151 = vcombine.high %v143, %v143
    %v152 = vcombine.high %v150, %v150
    %v154 = vunpack.c.l.s4 1966171168
    %v155 = vunpack.c.0.s8 %v154
    %v156 = vlaneseq
    %v157 = vshrl.u32 %v156, 7
    %v158 = vsub.s32 %v155, %v157
    %v159 = vrot.slane %v143, %v158
    %v161 = vunpack.c.l.s4 1966171168
    %v162 = vunpack.c.0.s8 %v161
    %v163 = vlaneseq
    %v164 = vshrl.u32 %v163, 7
    %v165 = vsub.s32 %v162, %v164
    %v166 = vrot.slane %v150, %v165
    %v168 = vunpack.c.l.s4 1966171168
    %v169 = vunpack.c.0.s8 %v168
    %v170 = vlaneseq
    %v171 = vshrl.u32 %v170, 7
    %v172 = vsub.s32 %v169, %v171
    %v173 = vrot.slane %v151, %v172
    %v175 = vunpack.c.l.s4 1966171168
    %v176 = vunpack.c.0.s8 %v175
    %v177 = vlaneseq
    %v178 = vshrl.u32 %v177, 7
    %v179 = vsub.s32 %v176, %v178
    %v180 = vrot.slane %v152, %v179
    %v181 = vcombine.high %v159, %v159
    %v182 = vcombine.high %v166, %v166
    %v183 = vcombine.high %v173, %v173
    %v184 = vcombine.high %v180, %v180
    %v185 = vcombine.high %v28, %v28
    %v187 = vunpack.c.l.s4 1966171168
    %v188 = vunpack.c.0.s8 %v187
    %v189 = vlaneseq
    %v190 = vshrl.u32 %v189, 7
    %v191 = vsub.s32 %v188, %v190
    %v192 = vrot.slane %v28, %v191
    %v194 = vunpack.c.l.s4 1966171168
    %v195 = vunpack.c.0.s8 %v194
    %v196 = vlaneseq
    %v197 = vshrl.u32 %v196, 7
    %v198 = vsub.s32 %v195, %v197
    %v199 = vrot.slane %v185, %v198
    %v200 = vcombine.high %v192, %v192
    %v201 = vcombine.high %v199, %v199
    %v203 = vunpack.c.l.s4 1966171168
    %v204 = vunpack.c.0.s8 %v203
    %v205 = vlaneseq
    %v206 = vshrl.u32 %v205, 7
    %v207 = vsub.s32 %v204, %v206
    %v208 = vrot.slane %v192, %v207
    %v210 = vunpack.c.l.s4 1966171168
    %v211 = vunpack.c.0.s8 %v210
    %v212 = vlaneseq
    %v213 = vshrl.u32 %v212, 7
    %v214 = vsub.s32 %v211, %v213
    %v215 = vrot.slane %v199, %v214
    %v217 = vunpack.c.l.s4 1966171168
    %v218 = vunpack.c.0.s8 %v217
    %v219 = vlaneseq
    %v220 = vshrl.u32 %v219, 7
    %v221 = vsub.s32 %v218, %v220
    %v222 = vrot.slane %v200, %v221
    %v224 = vunpack.c.l.s4 1966171168
    %v225 = vunpack.c.0.s8 %v224
    %v226 = vlaneseq
    %v227 = vshrl.u32 %v226, 7
    %v228 = vsub.s32 %v225, %v227
    %v229 = vrot.slane %v201, %v228
    %v230 = vcombine.high %v208, %v208
    %v231 = vcombine.high %v215, %v215
    %v232 = vcombine.high %v222, %v222
    %v233 = vcombine.high %v229, %v229
    %v234 = vlaneseq
    %v235 = vshrl.u32 %v234, 7
    %v236 = vsub.s32 0, %v235
    %v237 = vrot.slane %v61, %v236
    %v238 = vlaneseq
    %v239 = vshrl.u32 %v238, 7
    %v240 = vsub.s32 0, %v239
    %v241 = vrot.slane %v75, %v240
    %v242 = vlaneseq
    %v243 = vshrl.u32 %v242, 7
    %v244 = vsub.s32 0, %v243
    %v245 = vrot.slane %v83, %v244
    %v246 = vlaneseq
    %v247 = vshrl.u32 %v246, 7
    %v248 = vsub.s32 0, %v247
    %v249 = vrot.slane %v85, %v248
    %v250 = vlaneseq
    %v251 = vshrl.u32 %v250, 7
    %v252 = vsub.s32 0, %v251
    %v253 = vrot.slane %v68, %v252
    %v254 = vlaneseq
    %v255 = vshrl.u32 %v254, 7
    %v256 = vsub.s32 0, %v255
    %v257 = vrot.slane %v82, %v256
    %v258 = vlaneseq
    %v259 = vshrl.u32 %v258, 7
    %v260 = vsub.s32 0, %v259
    %v261 = vrot.slane %v84, %v260
    %v262 = vlaneseq
    %v263 = vshrl.u32 %v262, 7
    %v264 = vsub.s32 0, %v263
    %v265 = vrot.slane %v86, %v264
    %v266 = vlaneseq
    %v267 = vshrl.u32 %v266, 7
    %v268 = vsub.s32 0, %v267
    %v269 = vrot.slane %v110, %v268
    %v270 = vlaneseq
    %v271 = vshrl.u32 %v270, 7
    %v272 = vsub.s32 0, %v271
    %v273 = vrot.slane %v124, %v272
    %v274 = vlaneseq
    %v275 = vshrl.u32 %v274, 7
    %v276 = vsub.s32 0, %v275
    %v277 = vrot.slane %v132, %v276
    %v278 = vlaneseq
    %v279 = vshrl.u32 %v278, 7
    %v280 = vsub.s32 0, %v279
    %v281 = vrot.slane %v134, %v280
    %v282 = vlaneseq
    %v283 = vshrl.u32 %v282, 7
    %v284 = vsub.s32 0, %v283
    %v285 = vrot.slane %v117, %v284
    %v286 = vlaneseq
    %v287 = vshrl.u32 %v286, 7
    %v288 = vsub.s32 0, %v287
    %v289 = vrot.slane %v131, %v288
    %v290 = vlaneseq
    %v291 = vshrl.u32 %v290, 7
    %v292 = vsub.s32 0, %v291
    %v293 = vrot.slane %v133, %v292
    %v294 = vlaneseq
    %v295 = vshrl.u32 %v294, 7
    %v296 = vsub.s32 0, %v295
    %v297 = vrot.slane %v135, %v296
    %v298 = vlaneseq
    %v299 = vshrl.u32 %v298, 7
    %v300 = vsub.s32 0, %v299
    %v301 = vrot.slane %v159, %v300
    %v302 = vlaneseq
    %v303 = vshrl.u32 %v302, 7
    %v304 = vsub.s32 0, %v303
    %v305 = vrot.slane %v173, %v304
    %v306 = vlaneseq
    %v307 = vshrl.u32 %v306, 7
    %v308 = vsub.s32 0, %v307
    %v309 = vrot.slane %v181, %v308
    %v310 = vlaneseq
    %v311 = vshrl.u32 %v310, 7
    %v312 = vsub.s32 0, %v311
    %v313 = vrot.slane %v183, %v312
    %v314 = vlaneseq
    %v315 = vshrl.u32 %v314, 7
    %v316 = vsub.s32 0, %v315
    %v317 = vrot.slane %v166, %v316
    %v318 = vlaneseq
    %v319 = vshrl.u32 %v318, 7
    %v320 = vsub.s32 0, %v319
    %v321 = vrot.slane %v180, %v320
    %v322 = vlaneseq
    %v323 = vshrl.u32 %v322, 7
    %v324 = vsub.s32 0, %v323
    %v325 = vrot.slane %v182, %v324
    %v326 = vlaneseq
    %v327 = vshrl.u32 %v326, 7
    %v328 = vsub.s32 0, %v327
    %v329 = vrot.slane %v184, %v328
    %v330 = vlaneseq
    %v331 = vshrl.u32 %v330, 7
    %v332 = vsub.s32 0, %v331
    %v333 = vrot.slane %v208, %v332
    %v334 = vlaneseq
    %v335 = vshrl.u32 %v334, 7
    %v336 = vsub.s32 0, %v335
    %v337 = vrot.slane %v222, %v336
    %v338 = vlaneseq
    %v339 = vshrl.u32 %v338, 7
    %v340 = vsub.s32 0, %v339
    %v341 = vrot.slane %v230, %v340
    %v342 = vlaneseq
    %v343 = vshrl.u32 %v342, 7
    %v344 = vsub.s32 0, %v343
    %v345 = vrot.slane %v232, %v344
    %v346 = vlaneseq
    %v347 = vshrl.u32 %v346, 7
    %v348 = vsub.s32 0, %v347
    %v349 = vrot.slane %v215, %v348
    %v350 = vlaneseq
    %v351 = vshrl.u32 %v350, 7
    %v352 = vsub.s32 0, %v351
    %v353 = vrot.slane %v229, %v352
    %v354 = vlaneseq
    %v355 = vshrl.u32 %v354, 7
    %v356 = vsub.s32 0, %v355
    %v357 = vrot.slane %v231, %v356
    %v358 = vlaneseq
    %v359 = vshrl.u32 %v358, 7
    %v360 = vsub.s32 0, %v359
    %v361 = vrot.slane %v233, %v360
    %v394 = vadd.f32 %v237, %v30
    %v395 = vadd.f32 %v237, %v31
    %v396 = vadd.f32 %v241, %v30
    %v397 = vadd.f32 %v241, %v31
    %v398 = vadd.f32 %v245, %v30
    %v399 = vadd.f32 %v245, %v31
    %v400 = vadd.f32 %v249, %v30
    %v401 = vadd.f32 %v249, %v31
    %v402 = vadd.f32 %v253, %v30
    %v403 = vadd.f32 %v253, %v31
    %v404 = vadd.f32 %v257, %v30
    %v405 = vadd.f32 %v257, %v31
    %v406 = vadd.f32 %v261, %v30
    %v407 = vadd.f32 %v261, %v31
    %v408 = vadd.f32 %v265, %v30
    %v409 = vadd.f32 %v265, %v31
    %v410 = vadd.f32 %v269, %v30
    %v411 = vadd.f32 %v269, %v31
    %v412 = vadd.f32 %v273, %v30
    %v413 = vadd.f32 %v273, %v31
    %v414 = vadd.f32 %v277, %v30
    %v415 = vadd.f32 %v277, %v31
    %v416 = vadd.f32 %v281, %v30
    %v417 = vadd.f32 %v281, %v31
    %v418 = vadd.f32 %v285, %v30
    %v419 = vadd.f32 %v285, %v31
    %v420 = vadd.f32 %v289, %v30
    %v421 = vadd.f32 %v289, %v31
    %v422 = vadd.f32 %v293, %v30
    %v423 = vadd.f32 %v293, %v31
    %v424 = vadd.f32 %v297, %v30
    %v425 = vadd.f32 %v297, %v31
    %v426 = vadd.f32 %v301, %v32
    %v427 = vadd.f32 %v301, %v33
    %v428 = vadd.f32 %v305, %v32
    %v429 = vadd.f32 %v305, %v33
    %v430 = vadd.f32 %v309, %v32
    %v431 = vadd.f32 %v309, %v33
    %v432 = vadd.f32 %v313, %v32
    %v433 = vadd.f32 %v313, %v33
    %v434 = vadd.f32 %v317, %v32
    %v435 = vadd.f32 %v317, %v33
    %v436 = vadd.f32 %v321, %v32
    %v437 = vadd.f32 %v321, %v33
    %v438 = vadd.f32 %v325, %v32
    %v439 = vadd.f32 %v325, %v33
    %v440 = vadd.f32 %v329, %v32
    %v441 = vadd.f32 %v329, %v33
    %v442 = vadd.f32 %v333, %v32
    %v443 = vadd.f32 %v333, %v33
    %v444 = vadd.f32 %v337, %v32
    %v445 = vadd.f32 %v337, %v33
    %v446 = vadd.f32 %v341, %v32
    %v447 = vadd.f32 %v341, %v33
    %v448 = vadd.f32 %v345, %v32
    %v449 = vadd.f32 %v345, %v33
    %v450 = vadd.f32 %v349, %v32
    %v451 = vadd.f32 %v349, %v33
    %v452 = vadd.f32 %v353, %v32
    %v453 = vadd.f32 %v353, %v33
    %v454 = vadd.f32 %v357, %v32
    %v455 = vadd.f32 %v357, %v33
    %v456 = vadd.f32 %v361, %v32
    %v457 = vadd.f32 %v361, %v33
    %v458 = vld [vmem:[%s1] sm:$0xff]
    %v459 = vld [vmem:[%s1 + $0x8] sm:$0xff]
    %v460 = vld [vmem:[%s1 + $0x10] sm:$0xff]
    %v461 = vld [vmem:[%s1 + $0x18] sm:$0xff]
    %v462 = vld [vmem:[%s1 + $0x20] sm:$0xff]
    %v463 = vld [vmem:[%s1 + $0x28] sm:$0xff]
    %v464 = vld [vmem:[%s1 + $0x30] sm:$0xff]
    %v465 = vld [vmem:[%s1 + $0x38] sm:$0xff]
    %v466 = vld [vmem:[%s1 + $0x40] sm:$0xff]
    %v467 = vld [vmem:[%s1 + $0x48] sm:$0xff]
    %v468 = vld [vmem:[%s1 + $0x50] sm:$0xff]
    %v469 = vld [vmem:[%s1 + $0x58] sm:$0xff]
    %v470 = vld [vmem:[%s1 + $0x60] sm:$0xff]
    %v471 = vld [vmem:[%s1 + $0x68] sm:$0xff]
    %v472 = vld [vmem:[%s1 + $0x70] sm:$0xff]
    %v473 = vld [vmem:[%s1 + $0x78] sm:$0xff]
    %v474 = vld [vmem:[%s1 + $0x80] sm:$0xff]
    %v475 = vld [vmem:[%s1 + $0x88] sm:$0xff]
    %v476 = vld [vmem:[%s1 + $0x90] sm:$0xff]
    %v477 = vld [vmem:[%s1 + $0x98] sm:$0xff]
    %v478 = vld [vmem:[%s1 + $0xa0] sm:$0xff]
    %v479 = vld [vmem:[%s1 + $0xa8] sm:$0xff]
    %v480 = vld [vmem:[%s1 + $0xb0] sm:$0xff]
    %v481 = vld [vmem:[%s1 + $0xb8] sm:$0xff]
    %v482 = vld [vmem:[%s1 + $0xc0] sm:$0xff]
    %v483 = vld [vmem:[%s1 + $0xc8] sm:$0xff]
    %v484 = vld [vmem:[%s1 + $0xd0] sm:$0xff]
    %v485 = vld [vmem:[%s1 + $0xd8] sm:$0xff]
    %v486 = vld [vmem:[%s1 + $0xe0] sm:$0xff]
    %v487 = vld [vmem:[%s1 + $0xe8] sm:$0xff]
    %v488 = vld [vmem:[%s1 + $0xf0] sm:$0xff]
    %v489 = vld [vmem:[%s1 + $0xf8] sm:$0xff]
    %v490 = vadd.f32 %v394, %v458
    %v491 = vadd.f32 %v395, %v459
    %v492 = vadd.f32 %v396, %v460
    %v493 = vadd.f32 %v397, %v461
    %v494 = vadd.f32 %v398, %v462
    %v495 = vadd.f32 %v399, %v463
    %v496 = vadd.f32 %v400, %v464
    %v497 = vadd.f32 %v401, %v465
    %v498 = vadd.f32 %v402, %v466
    %v499 = vadd.f32 %v403, %v467
    %v500 = vadd.f32 %v404, %v468
    %v501 = vadd.f32 %v405, %v469
    %v502 = vadd.f32 %v406, %v470
    %v503 = vadd.f32 %v407, %v471
    %v504 = vadd.f32 %v408, %v472
    %v505 = vadd.f32 %v409, %v473
    %v506 = vadd.f32 %v410, %v474
    %v507 = vadd.f32 %v411, %v475
    %v508 = vadd.f32 %v412, %v476
    %v509 = vadd.f32 %v413, %v477
    %v510 = vadd.f32 %v414, %v478
    %v511 = vadd.f32 %v415, %v479
    %v512 = vadd.f32 %v416, %v480
    %v513 = vadd.f32 %v417, %v481
    %v514 = vadd.f32 %v418, %v482
    %v515 = vadd.f32 %v419, %v483
    %v516 = vadd.f32 %v420, %v484
    %v517 = vadd.f32 %v421, %v485
    %v518 = vadd.f32 %v422, %v486
    %v519 = vadd.f32 %v423, %v487
    %v520 = vadd.f32 %v424, %v488
    %v521 = vadd.f32 %v425, %v489
    %v522 = vadd.f32 %v426, %v458
    %v523 = vadd.f32 %v427, %v459
    %v524 = vadd.f32 %v428, %v460
    %v525 = vadd.f32 %v429, %v461
    %v526 = vadd.f32 %v430, %v462
    %v527 = vadd.f32 %v431, %v463
    %v528 = vadd.f32 %v432, %v464
    %v529 = vadd.f32 %v433, %v465
    %v530 = vadd.f32 %v434, %v466
    %v531 = vadd.f32 %v435, %v467
    %v532 = vadd.f32 %v436, %v468
    %v533 = vadd.f32 %v437, %v469
    %v534 = vadd.f32 %v438, %v470
    %v535 = vadd.f32 %v439, %v471
    %v536 = vadd.f32 %v440, %v472
    %v537 = vadd.f32 %v441, %v473
    %v538 = vadd.f32 %v442, %v474
    %v539 = vadd.f32 %v443, %v475
    %v540 = vadd.f32 %v444, %v476
    %v541 = vadd.f32 %v445, %v477
    %v542 = vadd.f32 %v446, %v478
    %v543 = vadd.f32 %v447, %v479
    %v544 = vadd.f32 %v448, %v480
    %v545 = vadd.f32 %v449, %v481
    %v546 = vadd.f32 %v450, %v482
    %v547 = vadd.f32 %v451, %v483
    %v548 = vadd.f32 %v452, %v484
    %v549 = vadd.f32 %v453, %v485
    %v550 = vadd.f32 %v454, %v486
    %v551 = vadd.f32 %v455, %v487
    %v552 = vadd.f32 %v456, %v488
    %v553 = vadd.f32 %v457, %v489
    %v554 = vld [vmem:[%s5 + $0x4] sm:$0x1]
    %v555 = vld [vmem:[%s5 + $0x5] sm:$0x1]
    %v556 = vld [vmem:[%s2] sm:$0xff]
    %v557 = vld [vmem:[%s2 + $0x8] sm:$0xff]
    %v558 = vld [vmem:[%s2 + $0x10] sm:$0xff]
    %v559 = vld [vmem:[%s2 + $0x18] sm:$0xff]
    %v560 = vld [vmem:[%s2 + $0x20] sm:$0xff]
    %v561 = vld [vmem:[%s2 + $0x28] sm:$0xff]
    %v562 = vld [vmem:[%s2 + $0x30] sm:$0xff]
    %v563 = vld [vmem:[%s2 + $0x38] sm:$0xff]
    %v564 = vld [vmem:[%s2 + $0x40] sm:$0xff]
    %v565 = vld [vmem:[%s2 + $0x48] sm:$0xff]
    %v566 = vld [vmem:[%s2 + $0x50] sm:$0xff]
    %v567 = vld [vmem:[%s2 + $0x58] sm:$0xff]
    %v568 = vld [vmem:[%s2 + $0x60] sm:$0xff]
    %v569 = vld [vmem:[%s2 + $0x68] sm:$0xff]
    %v570 = vld [vmem:[%s2 + $0x70] sm:$0xff]
    %v571 = vld [vmem:[%s2 + $0x78] sm:$0xff]
    %v572 = vld [vmem:[%s2 + $0x80] sm:$0xff]
    %v573 = vld [vmem:[%s2 + $0x88] sm:$0xff]
    %v574 = vld [vmem:[%s2 + $0x90] sm:$0xff]
    %v575 = vld [vmem:[%s2 + $0x98] sm:$0xff]
    %v576 = vld [vmem:[%s2 + $0xa0] sm:$0xff]
    %v577 = vld [vmem:[%s2 + $0xa8] sm:$0xff]
    %v578 = vld [vmem:[%s2 + $0xb0] sm:$0xff]
    %v579 = vld [vmem:[%s2 + $0xb8] sm:$0xff]
    %v580 = vld [vmem:[%s2 + $0xc0] sm:$0xff]
    %v581 = vld [vmem:[%s2 + $0xc8] sm:$0xff]
    %v582 = vld [vmem:[%s2 + $0xd0] sm:$0xff]
    %v583 = vld [vmem:[%s2 + $0xd8] sm:$0xff]
    %v584 = vld [vmem:[%s2 + $0xe0] sm:$0xff]
    %v585 = vld [vmem:[%s2 + $0xe8] sm:$0xff]
    %v586 = vld [vmem:[%s2 + $0xf0] sm:$0xff]
    %v587 = vld [vmem:[%s2 + $0xf8] sm:$0xff]
    %v588 = vld [vmem:[%s2 + $0x100] sm:$0xff]
    %v589 = vld [vmem:[%s2 + $0x108] sm:$0xff]
    %v590 = vld [vmem:[%s2 + $0x110] sm:$0xff]
    %v591 = vld [vmem:[%s2 + $0x118] sm:$0xff]
    %v592 = vld [vmem:[%s2 + $0x120] sm:$0xff]
    %v593 = vld [vmem:[%s2 + $0x128] sm:$0xff]
    %v594 = vld [vmem:[%s2 + $0x130] sm:$0xff]
    %v595 = vld [vmem:[%s2 + $0x138] sm:$0xff]
    %v596 = vld [vmem:[%s2 + $0x140] sm:$0xff]
    %v597 = vld [vmem:[%s2 + $0x148] sm:$0xff]
    %v598 = vld [vmem:[%s2 + $0x150] sm:$0xff]
    %v599 = vld [vmem:[%s2 + $0x158] sm:$0xff]
    %v600 = vld [vmem:[%s2 + $0x160] sm:$0xff]
    %v601 = vld [vmem:[%s2 + $0x168] sm:$0xff]
    %v602 = vld [vmem:[%s2 + $0x170] sm:$0xff]
    %v603 = vld [vmem:[%s2 + $0x178] sm:$0xff]
    %v604 = vld [vmem:[%s2 + $0x180] sm:$0xff]
    %v605 = vld [vmem:[%s2 + $0x188] sm:$0xff]
    %v606 = vld [vmem:[%s2 + $0x190] sm:$0xff]
    %v607 = vld [vmem:[%s2 + $0x198] sm:$0xff]
    %v608 = vld [vmem:[%s2 + $0x1a0] sm:$0xff]
    %v609 = vld [vmem:[%s2 + $0x1a8] sm:$0xff]
    %v610 = vld [vmem:[%s2 + $0x1b0] sm:$0xff]
    %v611 = vld [vmem:[%s2 + $0x1b8] sm:$0xff]
    %v612 = vld [vmem:[%s2 + $0x1c0] sm:$0xff]
    %v613 = vld [vmem:[%s2 + $0x1c8] sm:$0xff]
    %v614 = vld [vmem:[%s2 + $0x1d0] sm:$0xff]
    %v615 = vld [vmem:[%s2 + $0x1d8] sm:$0xff]
    %v616 = vld [vmem:[%s2 + $0x1e0] sm:$0xff]
    %v617 = vld [vmem:[%s2 + $0x1e8] sm:$0xff]
    %v618 = vld [vmem:[%s2 + $0x1f0] sm:$0xff]
    %v619 = vld [vmem:[%s2 + $0x1f8] sm:$0xff]
    %v620 = vlaneseq
    %v621 = vshrl.u32 %v620, 7
    %v622 = vsub.s32 0, %v621
    %v623 = vrot.slane %v554, %v622
    %vm624 = vcmp.gt.f32.partialorder %v556, %v623
    %vm625 = vcmp.gt.f32.partialorder %v557, %v623
    %vm626 = vcmp.gt.f32.partialorder %v558, %v623
    %vm627 = vcmp.gt.f32.partialorder %v559, %v623
    %vm628 = vcmp.gt.f32.partialorder %v560, %v623
    %vm629 = vcmp.gt.f32.partialorder %v561, %v623
    %vm630 = vcmp.gt.f32.partialorder %v562, %v623
    %vm631 = vcmp.gt.f32.partialorder %v563, %v623
    %vm632 = vcmp.gt.f32.partialorder %v564, %v623
    %vm633 = vcmp.gt.f32.partialorder %v565, %v623
    %vm634 = vcmp.gt.f32.partialorder %v566, %v623
    %vm635 = vcmp.gt.f32.partialorder %v567, %v623
    %vm636 = vcmp.gt.f32.partialorder %v568, %v623
    %vm637 = vcmp.gt.f32.partialorder %v569, %v623
    %vm638 = vcmp.gt.f32.partialorder %v570, %v623
    %vm639 = vcmp.gt.f32.partialorder %v571, %v623
    %vm640 = vcmp.gt.f32.partialorder %v572, %v623
    %vm641 = vcmp.gt.f32.partialorder %v573, %v623
    %vm642 = vcmp.gt.f32.partialorder %v574, %v623
    %vm643 = vcmp.gt.f32.partialorder %v575, %v623
    %vm644 = vcmp.gt.f32.partialorder %v576, %v623
    %vm645 = vcmp.gt.f32.partialorder %v577, %v623
    %vm646 = vcmp.gt.f32.partialorder %v578, %v623
    %vm647 = vcmp.gt.f32.partialorder %v579, %v623
    %vm648 = vcmp.gt.f32.partialorder %v580, %v623
    %vm649 = vcmp.gt.f32.partialorder %v581, %v623
    %vm650 = vcmp.gt.f32.partialorder %v582, %v623
    %vm651 = vcmp.gt.f32.partialorder %v583, %v623
    %vm652 = vcmp.gt.f32.partialorder %v584, %v623
    %vm653 = vcmp.gt.f32.partialorder %v585, %v623
    %vm654 = vcmp.gt.f32.partialorder %v586, %v623
    %vm655 = vcmp.gt.f32.partialorder %v587, %v623
    %vm656 = vcmp.gt.f32.partialorder %v588, %v623
    %vm657 = vcmp.gt.f32.partialorder %v589, %v623
    %vm658 = vcmp.gt.f32.partialorder %v590, %v623
    %vm659 = vcmp.gt.f32.partialorder %v591, %v623
    %vm660 = vcmp.gt.f32.partialorder %v592, %v623
    %vm661 = vcmp.gt.f32.partialorder %v593, %v623
    %vm662 = vcmp.gt.f32.partialorder %v594, %v623
    %vm663 = vcmp.gt.f32.partialorder %v595, %v623
    %vm664 = vcmp.gt.f32.partialorder %v596, %v623
    %vm665 = vcmp.gt.f32.partialorder %v597, %v623
    %vm666 = vcmp.gt.f32.partialorder %v598, %v623
    %vm667 = vcmp.gt.f32.partialorder %v599, %v623
    %vm668 = vcmp.gt.f32.partialorder %v600, %v623
    %vm669 = vcmp.gt.f32.partialorder %v601, %v623
    %vm670 = vcmp.gt.f32.partialorder %v602, %v623
    %vm671 = vcmp.gt.f32.partialorder %v603, %v623
    %vm672 = vcmp.gt.f32.partialorder %v604, %v623
    %vm673 = vcmp.gt.f32.partialorder %v605, %v623
    %vm674 = vcmp.gt.f32.partialorder %v606, %v623
    %vm675 = vcmp.gt.f32.partialorder %v607, %v623
    %vm676 = vcmp.gt.f32.partialorder %v608, %v623
    %vm677 = vcmp.gt.f32.partialorder %v609, %v623
    %vm678 = vcmp.gt.f32.partialorder %v610, %v623
    %vm679 = vcmp.gt.f32.partialorder %v611, %v623
    %vm680 = vcmp.gt.f32.partialorder %v612, %v623
    %vm681 = vcmp.gt.f32.partialorder %v613, %v623
    %vm682 = vcmp.gt.f32.partialorder %v614, %v623
    %vm683 = vcmp.gt.f32.partialorder %v615, %v623
    %vm684 = vcmp.gt.f32.partialorder %v616, %v623
    %vm685 = vcmp.gt.f32.partialorder %v617, %v623
    %vm686 = vcmp.gt.f32.partialorder %v618, %v623
    %vm687 = vcmp.gt.f32.partialorder %v619, %v623
    %v688 = vlaneseq
    %v689 = vshrl.u32 %v688, 7
    %v690 = vsub.s32 0, %v689
    %v691 = vrot.slane %v555, %v690
    %vm692 = vcmp.lt.f32.partialorder %v556, %v691
    %vm693 = vcmp.lt.f32.partialorder %v557, %v691
    %vm694 = vcmp.lt.f32.partialorder %v558, %v691
    %vm695 = vcmp.lt.f32.partialorder %v559, %v691
    %vm696 = vcmp.lt.f32.partialorder %v560, %v691
    %vm697 = vcmp.lt.f32.partialorder %v561, %v691
    %vm698 = vcmp.lt.f32.partialorder %v562, %v691
    %vm699 = vcmp.lt.f32.partialorder %v563, %v691
    %vm700 = vcmp.lt.f32.partialorder %v564, %v691
    %vm701 = vcmp.lt.f32.partialorder %v565, %v691
    %vm702 = vcmp.lt.f32.partialorder %v566, %v691
    %vm703 = vcmp.lt.f32.partialorder %v567, %v691
    %vm704 = vcmp.lt.f32.partialorder %v568, %v691
    %vm705 = vcmp.lt.f32.partialorder %v569, %v691
    %vm706 = vcmp.lt.f32.partialorder %v570, %v691
    %vm707 = vcmp.lt.f32.partialorder %v571, %v691
    %vm708 = vcmp.lt.f32.partialorder %v572, %v691
    %vm709 = vcmp.lt.f32.partialorder %v573, %v691
    %vm710 = vcmp.lt.f32.partialorder %v574, %v691
    %vm711 = vcmp.lt.f32.partialorder %v575, %v691
    %vm712 = vcmp.lt.f32.partialorder %v576, %v691
    %vm713 = vcmp.lt.f32.partialorder %v577, %v691
    %vm714 = vcmp.lt.f32.partialorder %v578, %v691
    %vm715 = vcmp.lt.f32.partialorder %v579, %v691
    %vm716 = vcmp.lt.f32.partialorder %v580, %v691
    %vm717 = vcmp.lt.f32.partialorder %v581, %v691
    %vm718 = vcmp.lt.f32.partialorder %v582, %v691
    %vm719 = vcmp.lt.f32.partialorder %v583, %v691
    %vm720 = vcmp.lt.f32.partialorder %v584, %v691
    %vm721 = vcmp.lt.f32.partialorder %v585, %v691
    %vm722 = vcmp.lt.f32.partialorder %v586, %v691
    %vm723 = vcmp.lt.f32.partialorder %v587, %v691
    %vm724 = vcmp.lt.f32.partialorder %v588, %v691
    %vm725 = vcmp.lt.f32.partialorder %v589, %v691
    %vm726 = vcmp.lt.f32.partialorder %v590, %v691
    %vm727 = vcmp.lt.f32.partialorder %v591, %v691
    %vm728 = vcmp.lt.f32.partialorder %v592, %v691
    %vm729 = vcmp.lt.f32.partialorder %v593, %v691
    %vm730 = vcmp.lt.f32.partialorder %v594, %v691
    %vm731 = vcmp.lt.f32.partialorder %v595, %v691
    %vm732 = vcmp.lt.f32.partialorder %v596, %v691
    %vm733 = vcmp.lt.f32.partialorder %v597, %v691
    %vm734 = vcmp.lt.f32.partialorder %v598, %v691
    %vm735 = vcmp.lt.f32.partialorder %v599, %v691
    %vm736 = vcmp.lt.f32.partialorder %v600, %v691
    %vm737 = vcmp.lt.f32.partialorder %v601, %v691
    %vm738 = vcmp.lt.f32.partialorder %v602, %v691
    %vm739 = vcmp.lt.f32.partialorder %v603, %v691
    %vm740 = vcmp.lt.f32.partialorder %v604, %v691
    %vm741 = vcmp.lt.f32.partialorder %v605, %v691
    %vm742 = vcmp.lt.f32.partialorder %v606, %v691
    %vm743 = vcmp.lt.f32.partialorder %v607, %v691
    %vm744 = vcmp.lt.f32.partialorder %v608, %v691
    %vm745 = vcmp.lt.f32.partialorder %v609, %v691
    %vm746 = vcmp.lt.f32.partialorder %v610, %v691
    %vm747 = vcmp.lt.f32.partialorder %v611, %v691
    %vm748 = vcmp.lt.f32.partialorder %v612, %v691
    %vm749 = vcmp.lt.f32.partialorder %v613, %v691
    %vm750 = vcmp.lt.f32.partialorder %v614, %v691
    %vm751 = vcmp.lt.f32.partialorder %v615, %v691
    %vm752 = vcmp.lt.f32.partialorder %v616, %v691
    %vm753 = vcmp.lt.f32.partialorder %v617, %v691
    %vm754 = vcmp.lt.f32.partialorder %v618, %v691
    %vm755 = vcmp.lt.f32.partialorder %v619, %v691
    %vm756 = vmand %vm624, %vm692
    %vm757 = vmand %vm625, %vm693
    %vm758 = vmand %vm626, %vm694
    %vm759 = vmand %vm627, %vm695
    %vm760 = vmand %vm628, %vm696
    %vm761 = vmand %vm629, %vm697
    %vm762 = vmand %vm630, %vm698
    %vm763 = vmand %vm631, %vm699
    %vm764 = vmand %vm632, %vm700
    %vm765 = vmand %vm633, %vm701
    %vm766 = vmand %vm634, %vm702
    %vm767 = vmand %vm635, %vm703
    %vm768 = vmand %vm636, %vm704
    %vm769 = vmand %vm637, %vm705
    %vm770 = vmand %vm638, %vm706
    %vm771 = vmand %vm639, %vm707
    %vm772 = vmand %vm640, %vm708
    %vm773 = vmand %vm641, %vm709
    %vm774 = vmand %vm642, %vm710
    %vm775 = vmand %vm643, %vm711
    %vm776 = vmand %vm644, %vm712
    %vm777 = vmand %vm645, %vm713
    %vm778 = vmand %vm646, %vm714
    %vm779 = vmand %vm647, %vm715
    %vm780 = vmand %vm648, %vm716
    %vm781 = vmand %vm649, %vm717
    %vm782 = vmand %vm650, %vm718
    %vm783 = vmand %vm651, %vm719
    %vm784 = vmand %vm652, %vm720
    %vm785 = vmand %vm653, %vm721
    %vm786 = vmand %vm654, %vm722
    %vm787 = vmand %vm655, %vm723
    %vm788 = vmand %vm656, %vm724
    %vm789 = vmand %vm657, %vm725
    %vm790 = vmand %vm658, %vm726
    %vm791 = vmand %vm659, %vm727
    %vm792 = vmand %vm660, %vm728
    %vm793 = vmand %vm661, %vm729
    %vm794 = vmand %vm662, %vm730
    %vm795 = vmand %vm663, %vm731
    %vm796 = vmand %vm664, %vm732
    %vm797 = vmand %vm665, %vm733
    %vm798 = vmand %vm666, %vm734
    %vm799 = vmand %vm667, %vm735
    %vm800 = vmand %vm668, %vm736
    %vm801 = vmand %vm669, %vm737
    %vm802 = vmand %vm670, %vm738
    %vm803 = vmand %vm671, %vm739
    %vm804 = vmand %vm672, %vm740
    %vm805 = vmand %vm673, %vm741
    %vm806 = vmand %vm674, %vm742
    %vm807 = vmand %vm675, %vm743
    %vm808 = vmand %vm676, %vm744
    %vm809 = vmand %vm677, %vm745
    %vm810 = vmand %vm678, %vm746
    %vm811 = vmand %vm679, %vm747
    %vm812 = vmand %vm680, %vm748
    %vm813 = vmand %vm681, %vm749
    %vm814 = vmand %vm682, %vm750
    %vm815 = vmand %vm683, %vm751
    %vm816 = vmand %vm684, %vm752
    %vm817 = vmand %vm685, %vm753
    %vm818 = vmand %vm686, %vm754
    %vm819 = vmand %vm687, %vm755
    %v820 = vsel %vm756, 1, 0
    %v821 = vsel %vm757, 1, 0
    %v822 = vsel %vm758, 1, 0
    %v823 = vsel %vm759, 1, 0
    %v824 = vsel %vm760, 1, 0
    %v825 = vsel %vm761, 1, 0
    %v826 = vsel %vm762, 1, 0
    %v827 = vsel %vm763, 1, 0
    %v828 = vsel %vm764, 1, 0
    %v829 = vsel %vm765, 1, 0
    %v830 = vsel %vm766, 1, 0
    %v831 = vsel %vm767, 1, 0
    %v832 = vsel %vm768, 1, 0
    %v833 = vsel %vm769, 1, 0
    %v834 = vsel %vm770, 1, 0
    %v835 = vsel %vm771, 1, 0
    %v836 = vsel %vm772, 1, 0
    %v837 = vsel %vm773, 1, 0
    %v838 = vsel %vm774, 1, 0
    %v839 = vsel %vm775, 1, 0
    %v840 = vsel %vm776, 1, 0
    %v841 = vsel %vm777, 1, 0
    %v842 = vsel %vm778, 1, 0
    %v843 = vsel %vm779, 1, 0
    %v844 = vsel %vm780, 1, 0
    %v845 = vsel %vm781, 1, 0
    %v846 = vsel %vm782, 1, 0
    %v847 = vsel %vm783, 1, 0
    %v848 = vsel %vm784, 1, 0
    %v849 = vsel %vm785, 1, 0
    %v850 = vsel %vm786, 1, 0
    %v851 = vsel %vm787, 1, 0
    %v852 = vsel %vm788, 1, 0
    %v853 = vsel %vm789, 1, 0
    %v854 = vsel %vm790, 1, 0
    %v855 = vsel %vm791, 1, 0
    %v856 = vsel %vm792, 1, 0
    %v857 = vsel %vm793, 1, 0
    %v858 = vsel %vm794, 1, 0
    %v859 = vsel %vm795, 1, 0
    %v860 = vsel %vm796, 1, 0
    %v861 = vsel %vm797, 1, 0
    %v862 = vsel %vm798, 1, 0
    %v863 = vsel %vm799, 1, 0
    %v864 = vsel %vm800, 1, 0
    %v865 = vsel %vm801, 1, 0
    %v866 = vsel %vm802, 1, 0
    %v867 = vsel %vm803, 1, 0
    %v868 = vsel %vm804, 1, 0
    %v869 = vsel %vm805, 1, 0
    %v870 = vsel %vm806, 1, 0
    %v871 = vsel %vm807, 1, 0
    %v872 = vsel %vm808, 1, 0
    %v873 = vsel %vm809, 1, 0
    %v874 = vsel %vm810, 1, 0
    %v875 = vsel %vm811, 1, 0
    %v876 = vsel %vm812, 1, 0
    %v877 = vsel %vm813, 1, 0
    %v878 = vsel %vm814, 1, 0
    %v879 = vsel %vm815, 1, 0
    %v880 = vsel %vm816, 1, 0
    %v881 = vsel %vm817, 1, 0
    %v882 = vsel %vm818, 1, 0
    %v883 = vsel %vm819, 1, 0
    %v884 = vcvt.s32.f32 %v820
    %v885 = vcvt.s32.f32 %v821
    %v886 = vcvt.s32.f32 %v822
    %v887 = vcvt.s32.f32 %v823
    %v888 = vcvt.s32.f32 %v824
    %v889 = vcvt.s32.f32 %v825
    %v890 = vcvt.s32.f32 %v826
    %v891 = vcvt.s32.f32 %v827
    %v892 = vcvt.s32.f32 %v828
    %v893 = vcvt.s32.f32 %v829
    %v894 = vcvt.s32.f32 %v830
    %v895 = vcvt.s32.f32 %v831
    %v896 = vcvt.s32.f32 %v832
    %v897 = vcvt.s32.f32 %v833
    %v898 = vcvt.s32.f32 %v834
    %v899 = vcvt.s32.f32 %v835
    %v900 = vcvt.s32.f32 %v836
    %v901 = vcvt.s32.f32 %v837
    %v902 = vcvt.s32.f32 %v838
    %v903 = vcvt.s32.f32 %v839
    %v904 = vcvt.s32.f32 %v840
    %v905 = vcvt.s32.f32 %v841
    %v906 = vcvt.s32.f32 %v842
    %v907 = vcvt.s32.f32 %v843
    %v908 = vcvt.s32.f32 %v844
    %v909 = vcvt.s32.f32 %v845
    %v910 = vcvt.s32.f32 %v846
    %v911 = vcvt.s32.f32 %v847
    %v912 = vcvt.s32.f32 %v848
    %v913 = vcvt.s32.f32 %v849
    %v914 = vcvt.s32.f32 %v850
    %v915 = vcvt.s32.f32 %v851
    %v916 = vcvt.s32.f32 %v852
    %v917 = vcvt.s32.f32 %v853
    %v918 = vcvt.s32.f32 %v854
    %v919 = vcvt.s32.f32 %v855
    %v920 = vcvt.s32.f32 %v856
    %v921 = vcvt.s32.f32 %v857
    %v922 = vcvt.s32.f32 %v858
    %v923 = vcvt.s32.f32 %v859
    %v924 = vcvt.s32.f32 %v860
    %v925 = vcvt.s32.f32 %v861
    %v926 = vcvt.s32.f32 %v862
    %v927 = vcvt.s32.f32 %v863
    %v928 = vcvt.s32.f32 %v864
    %v929 = vcvt.s32.f32 %v865
    %v930 = vcvt.s32.f32 %v866
    %v931 = vcvt.s32.f32 %v867
    %v932 = vcvt.s32.f32 %v868
    %v933 = vcvt.s32.f32 %v869
    %v934 = vcvt.s32.f32 %v870
    %v935 = vcvt.s32.f32 %v871
    %v936 = vcvt.s32.f32 %v872
    %v937 = vcvt.s32.f32 %v873
    %v938 = vcvt.s32.f32 %v874
    %v939 = vcvt.s32.f32 %v875
    %v940 = vcvt.s32.f32 %v876
    %v941 = vcvt.s32.f32 %v877
    %v942 = vcvt.s32.f32 %v878
    %v943 = vcvt.s32.f32 %v879
    %v944 = vcvt.s32.f32 %v880
    %v945 = vcvt.s32.f32 %v881
    %v946 = vcvt.s32.f32 %v882
    %v947 = vcvt.s32.f32 %v883
    %v948 = vpack.c.bf16 %v885, %v884
    %v949 = vpack.c.bf16 %v887, %v886
    %v950 = vpack.c.bf16 %v889, %v888
    %v951 = vpack.c.bf16 %v891, %v890
    %v952 = vpack.c.bf16 %v893, %v892
    %v953 = vpack.c.bf16 %v895, %v894
    %v954 = vpack.c.bf16 %v897, %v896
    %v955 = vpack.c.bf16 %v899, %v898
    %v956 = vpack.c.bf16 %v901, %v900
    %v957 = vpack.c.bf16 %v903, %v902
    %v958 = vpack.c.bf16 %v905, %v904
    %v959 = vpack.c.bf16 %v907, %v906
    %v960 = vpack.c.bf16 %v909, %v908
    %v961 = vpack.c.bf16 %v911, %v910
    %v962 = vpack.c.bf16 %v913, %v912
    %v963 = vpack.c.bf16 %v915, %v914
    %v964 = vpack.c.bf16 %v917, %v916
    %v965 = vpack.c.bf16 %v919, %v918
    %v966 = vpack.c.bf16 %v921, %v920
    %v967 = vpack.c.bf16 %v923, %v922
    %v968 = vpack.c.bf16 %v925, %v924
    %v969 = vpack.c.bf16 %v927, %v926
    %v970 = vpack.c.bf16 %v929, %v928
    %v971 = vpack.c.bf16 %v931, %v930
    %v972 = vpack.c.bf16 %v933, %v932
    %v973 = vpack.c.bf16 %v935, %v934
    %v974 = vpack.c.bf16 %v937, %v936
    %v975 = vpack.c.bf16 %v939, %v938
    %v976 = vpack.c.bf16 %v941, %v940
    %v977 = vpack.c.bf16 %v943, %v942
    %v978 = vpack.c.bf16 %v945, %v944
    %v979 = vpack.c.bf16 %v947, %v946
    %v980 = vld [vmem:[%s4] sm:$0xf]
    %v981 = vld [vmem:[%s4 + $0x4] sm:$0xf]
    %v982 = vld [vmem:[%s4 + $0x8] sm:$0xf]
    %v983 = vld [vmem:[%s4 + $0xc] sm:$0xf]
    %v984 = vld [vmem:[%s4 + $0x10] sm:$0xf]
    %v985 = vld [vmem:[%s4 + $0x14] sm:$0xf]
    %v986 = vld [vmem:[%s4 + $0x18] sm:$0xf]
    %v987 = vld [vmem:[%s4 + $0x1c] sm:$0xf]
    %v988 = vld [vmem:[%s4 + $0x20] sm:$0xf]
    %v989 = vld [vmem:[%s4 + $0x24] sm:$0xf]
    %v990 = vld [vmem:[%s4 + $0x28] sm:$0xf]
    %v991 = vld [vmem:[%s4 + $0x2c] sm:$0xf]
    %v992 = vld [vmem:[%s4 + $0x30] sm:$0xf]
    %v993 = vld [vmem:[%s4 + $0x34] sm:$0xf]
    %v994 = vld [vmem:[%s4 + $0x38] sm:$0xf]
    %v995 = vld [vmem:[%s4 + $0x3c] sm:$0xf]
    %v996 = vld [vmem:[%s4 + $0x40] sm:$0xf]
    %v997 = vld [vmem:[%s4 + $0x44] sm:$0xf]
    %v998 = vld [vmem:[%s4 + $0x48] sm:$0xf]
    %v999 = vld [vmem:[%s4 + $0x4c] sm:$0xf]
    %v1000 = vld [vmem:[%s5] sm:$0x1]
    %v1001 = vld [vmem:[%s5 + $0x1] sm:$0x1]
    %v1002 = vld [vmem:[%s5 + $0x2] sm:$0x1]
    %v1003 = vld [vmem:[%s5 + $0x3] sm:$0x1]
    %v1008 = vunpack.c.l.b16 %v980
    %v1009 = vunpack.c.l.b16 %v981
    %v1010 = vunpack.c.l.b16 %v982
    %v1011 = vunpack.c.l.b16 %v983
    %v1012 = vpack.c.b16 %v1009, %v1008
    %v1013 = vpack.c.b16 %v1011, %v1010
    %vm1016 = vcmask 261120
    %v1018 = vsel %vm1016, %v948, 0
    %v1021 = vsel %vm1016, %v949, 0
    %v1024 = vsel %vm1016, %v950, 0
    %v1027 = vsel %vm1016, %v951, 0
    %v1030 = vsel %vm1016, %v952, 0
    %v1033 = vsel %vm1016, %v953, 0
    %v1036 = vsel %vm1016, %v954, 0
    %v1039 = vsel %vm1016, %v955, 0
    %v1042 = vsel %vm1016, %v956, 0
    %v1045 = vsel %vm1016, %v957, 0
    %v1048 = vsel %vm1016, %v958, 0
    %v1051 = vsel %vm1016, %v959, 0
    %v1054 = vsel %vm1016, %v960, 0
    %v1057 = vsel %vm1016, %v961, 0
    %v1060 = vsel %vm1016, %v962, 0
    %v1063 = vsel %vm1016, %v963, 0
    %v1066 = vsel %vm1016, %v964, 0
    %v1069 = vsel %vm1016, %v965, 0
    %v1072 = vsel %vm1016, %v966, 0
    %v1075 = vsel %vm1016, %v967, 0
    %v1078 = vsel %vm1016, %v968, 0
    %v1081 = vsel %vm1016, %v969, 0
    %v1084 = vsel %vm1016, %v970, 0
    %v1087 = vsel %vm1016, %v971, 0
    %v1090 = vsel %vm1016, %v972, 0
    %v1093 = vsel %vm1016, %v973, 0
    %v1096 = vsel %vm1016, %v974, 0
    %v1099 = vsel %vm1016, %v975, 0
    %v1102 = vsel %vm1016, %v976, 0
    %v1105 = vsel %vm1016, %v977, 0
    %v1108 = vsel %vm1016, %v978, 0
    %v1111 = vsel %vm1016, %v979, 0
    %1113 = vmatprep.subr.bf16.mxu0 0
    %1114 = vmatpush1.bf16.msra.mxu0 %v1012
    %1115 = vmatprep.subr.bf16.mxu0 0
    %1116 = vmatpush1.bf16.msra.mxu0 %v1013
    %1117 = vmatprep.subr.bf16.mxu0 0
    %1118 = vmatpush1.bf16.msra.mxu0 0
    %1119 = vmatprep.subr.bf16.mxu0 0
    %1120 = vmatpush1.bf16.msra.mxu0 0
    %1121 = vmatprep.subr.bf16.mxu0 0
    %1122 = vmatpush1.bf16.msra.mxu0 0
    %1123 = vmatprep.subr.bf16.mxu0 0
    %1124 = vmatpush1.bf16.msra.mxu0 0
    %1125 = vmatprep.subr.bf16.mxu0 0
    %1126 = vmatpush1.bf16.msra.mxu0 0
    %1127 = vmatprep.subr.bf16.mxu0 0
    %1128 = vmatpush1.bf16.msra.mxu0 0
    %1129 = vmatprep.subr.bf16.mxu0 0
    %1130 = vmatpush1.bf16.msra.mxu0 0
    %1131 = vmatprep.subr.bf16.mxu0 0
    %1132 = vmatpush1.bf16.msra.mxu0 0
    %1133 = vmatprep.subr.bf16.mxu0 0
    %1134 = vmatpush1.bf16.msra.mxu0 0
    %1135 = vmatprep.subr.bf16.mxu0 0
    %1136 = vmatpush1.bf16.msra.mxu0 0
    %1137 = vmatprep.subr.bf16.mxu0 0
    %1138 = vmatpush1.bf16.msra.mxu0 0
    %1139 = vmatprep.subr.bf16.mxu0 0
    %1140 = vmatpush1.bf16.msra.mxu0 0
    %1141 = vmatprep.subr.bf16.mxu0 0
    %1142 = vmatpush1.bf16.msra.mxu0 0
    %1143 = vmatprep.subr.bf16.mxu0 0
    %1144 = vmatpush1.bf16.msra.mxu0 0
    %1145 = vmatprep.mubr.bf16.mxu0 0
    %1146 = vmatmul.mubr.bf16.gmra.mrb[0].mxu0 %v1018
    %v1147 = vpop.f32.mrb[0].mxu0
    %v1148 = vadd.f32 %v490, %v1147
    %v1149 = vpop.f32.mrb[0].mxu0
    %v1150 = vpop.f32.mrb[0].mxu0
    %v1151 = vadd.f32 %v491, %v1150
    %v1152 = vpop.f32.mrb[0].mxu0
    %1153 = vmatprep.mubr.bf16.mxu0 0
    %1154 = vmatmul.mubr.bf16.gmra.mrb[0].mxu0 %v1021
    %v1155 = vpop.f32.mrb[0].mxu0
    %v1156 = vadd.f32 %v492, %v1155
    %v1157 = vpop.f32.mrb[0].mxu0
    %v1158 = vpop.f32.mrb[0].mxu0
    %v1159 = vadd.f32 %v493, %v1158
    %v1160 = vpop.f32.mrb[0].mxu0
    %1161 = vmatprep.mubr.bf16.mxu0 0
    %1162 = vmatmul.mubr.bf16.gmra.mrb[0].mxu0 %v1024
    %v1163 = vpop.f32.mrb[0].mxu0
    %v1164 = vadd.f32 %v494, %v1163
    %v1165 = vpop.f32.mrb[0].mxu0
    %v1166 = vpop.f32.mrb[0].mxu0
    %v1167 = vadd.f32 %v495, %v1166
    %v1168 = vpop.f32.mrb[0].mxu0
    %1169 = vmatprep.mubr.bf16.mxu0 0
    %1170 = vmatmul.mubr.bf16.gmra.mrb[0].mxu0 %v1027
    %v1171 = vpop.f32.mrb[0].mxu0
    %v1172 = vadd.f32 %v496, %v1171
    %v1173 = vpop.f32.mrb[0].mxu0
    %v1174 = vpop.f32.mrb[0].mxu0
    %v1175 = vadd.f32 %v497, %v1174
    %v1176 = vpop.f32.mrb[0].mxu0
    %1177 = vmatprep.mubr.bf16.mxu0 0
    %1178 = vmatmul.mubr.bf16.gmra.mrb[0].mxu0 %v1030
    %v1179 = vpop.f32.mrb[0].mxu0
    %v1180 = vadd.f32 %v498, %v1179
    %v1181 = vpop.f32.mrb[0].mxu0
    %v1182 = vpop.f32.mrb[0].mxu0
    %v1183 = vadd.f32 %v499, %v1182
    %v1184 = vpop.f32.mrb[0].mxu0
    %1185 = vmatprep.mubr.bf16.mxu0 0
    %1186 = vmatmul.mubr.bf16.gmra.mrb[0].mxu0 %v1033
    %v1187 = vpop.f32.mrb[0].mxu0
    %v1188 = vadd.f32 %v500, %v1187
    %v1189 = vpop.f32.mrb[0].mxu0
    %v1190 = vpop.f32.mrb[0].mxu0
    %v1191 = vadd.f32 %v501, %v1190
    %v1192 = vpop.f32.mrb[0].mxu0
    %1193 = vmatprep.mubr.bf16.mxu0 0
    %1194 = vmatmul.mubr.bf16.gmra.mrb[0].mxu0 %v1036
    %v1195 = vpop.f32.mrb[0].mxu0
    %v1196 = vadd.f32 %v502, %v1195
    %v1197 = vpop.f32.mrb[0].mxu0
    %v1198 = vpop.f32.mrb[0].mxu0
    %v1199 = vadd.f32 %v503, %v1198
    %v1200 = vpop.f32.mrb[0].mxu0
    %1201 = vmatprep.mubr.bf16.mxu0 0
    %1202 = vmatmul.mubr.bf16.gmra.mrb[0].mxu0 %v1039
    %v1203 = vpop.f32.mrb[0].mxu0
    %v1204 = vadd.f32 %v504, %v1203
    %v1205 = vpop.f32.mrb[0].mxu0
    %v1206 = vpop.f32.mrb[0].mxu0
    %v1207 = vadd.f32 %v505, %v1206
    %v1208 = vpop.f32.mrb[0].mxu0
    %1209 = vmatprep.mubr.bf16.mxu0 0
    %1210 = vmatmul.mubr.bf16.gmra.mrb[0].mxu0 %v1042
    %v1211 = vpop.f32.mrb[0].mxu0
    %v1212 = vadd.f32 %v506, %v1211
    %v1213 = vpop.f32.mrb[0].mxu0
    %v1214 = vpop.f32.mrb[0].mxu0
    %v1215 = vadd.f32 %v507, %v1214
    %v1216 = vpop.f32.mrb[0].mxu0
    %1217 = vmatprep.mubr.bf16.mxu0 0
    %1218 = vmatmul.mubr.bf16.gmra.mrb[0].mxu0 %v1045
    %v1219 = vpop.f32.mrb[0].mxu0
    %v1220 = vadd.f32 %v508, %v1219
    %v1221 = vpop.f32.mrb[0].mxu0
    %v1222 = vpop.f32.mrb[0].mxu0
    %v1223 = vadd.f32 %v509, %v1222
    %v1224 = vpop.f32.mrb[0].mxu0
    %1225 = vmatprep.mubr.bf16.mxu0 0
    %1226 = vmatmul.mubr.bf16.gmra.mrb[0].mxu0 %v1048
    %v1227 = vpop.f32.mrb[0].mxu0
    %v1228 = vadd.f32 %v510, %v1227
    %v1229 = vpop.f32.mrb[0].mxu0
    %v1230 = vpop.f32.mrb[0].mxu0
    %v1231 = vadd.f32 %v511, %v1230
    %v1232 = vpop.f32.mrb[0].mxu0
    %1233 = vmatprep.mubr.bf16.mxu0 0
    %1234 = vmatmul.mubr.bf16.gmra.mrb[0].mxu0 %v1051
    %v1235 = vpop.f32.mrb[0].mxu0
    %v1236 = vadd.f32 %v512, %v1235
    %v1237 = vpop.f32.mrb[0].mxu0
    %v1238 = vpop.f32.mrb[0].mxu0
    %v1239 = vadd.f32 %v513, %v1238
    %v1240 = vpop.f32.mrb[0].mxu0
    %1241 = vmatprep.mubr.bf16.mxu0 0
    %1242 = vmatmul.mubr.bf16.gmra.mrb[0].mxu0 %v1054
    %v1243 = vpop.f32.mrb[0].mxu0
    %v1244 = vadd.f32 %v514, %v1243
    %v1245 = vpop.f32.mrb[0].mxu0
    %v1246 = vpop.f32.mrb[0].mxu0
    %v1247 = vadd.f32 %v515, %v1246
    %v1248 = vpop.f32.mrb[0].mxu0
    %1249 = vmatprep.mubr.bf16.mxu0 0
    %1250 = vmatmul.mubr.bf16.gmra.mrb[0].mxu0 %v1057
    %v1251 = vpop.f32.mrb[0].mxu0
    %v1252 = vadd.f32 %v516, %v1251
    %v1253 = vpop.f32.mrb[0].mxu0
    %v1254 = vpop.f32.mrb[0].mxu0
    %v1255 = vadd.f32 %v517, %v1254
    %v1256 = vpop.f32.mrb[0].mxu0
    %1257 = vmatprep.mubr.bf16.mxu0 0
    %1258 = vmatmul.mubr.bf16.gmra.mrb[0].mxu0 %v1060
    %v1259 = vpop.f32.mrb[0].mxu0
    %v1260 = vadd.f32 %v518, %v1259
    %v1261 = vpop.f32.mrb[0].mxu0
    %v1262 = vpop.f32.mrb[0].mxu0
    %v1263 = vadd.f32 %v519, %v1262
    %v1264 = vpop.f32.mrb[0].mxu0
    %1265 = vmatprep.mubr.bf16.mxu0 0
    %1266 = vmatmul.mubr.bf16.gmra.mrb[0].mxu0 %v1063
    %v1267 = vpop.f32.mrb[0].mxu0
    %v1268 = vadd.f32 %v520, %v1267
    %v1269 = vpop.f32.mrb[0].mxu0
    %v1270 = vpop.f32.mrb[0].mxu0
    %v1271 = vadd.f32 %v521, %v1270
    %v1272 = vpop.f32.mrb[0].mxu0
    %1273 = vmatprep.mubr.bf16.mxu0 0
    %1274 = vmatmul.mubr.bf16.gmra.mrb[0].mxu0 %v1066
    %v1275 = vpop.f32.mrb[0].mxu0
    %v1276 = vadd.f32 %v522, %v1275
    %v1277 = vpop.f32.mrb[0].mxu0
    %v1278 = vpop.f32.mrb[0].mxu0
    %v1279 = vadd.f32 %v523, %v1278
    %v1280 = vpop.f32.mrb[0].mxu0
    %1281 = vmatprep.mubr.bf16.mxu0 0
    %1282 = vmatmul.mubr.bf16.gmra.mrb[0].mxu0 %v1069
    %v1283 = vpop.f32.mrb[0].mxu0
    %v1284 = vadd.f32 %v524, %v1283
    %v1285 = vpop.f32.mrb[0].mxu0
    %v1286 = vpop.f32.mrb[0].mxu0
    %v1287 = vadd.f32 %v525, %v1286
    %v1288 = vpop.f32.mrb[0].mxu0
    %1289 = vmatprep.mubr.bf16.mxu0 0
    %1290 = vmatmul.mubr.bf16.gmra.mrb[0].mxu0 %v1072
    %v1291 = vpop.f32.mrb[0].mxu0
    %v1292 = vadd.f32 %v526, %v1291
    %v1293 = vpop.f32.mrb[0].mxu0
    %v1294 = vpop.f32.mrb[0].mxu0
    %v1295 = vadd.f32 %v527, %v1294
    %v1296 = vpop.f32.mrb[0].mxu0
    %1297 = vmatprep.mubr.bf16.mxu0 0
    %1298 = vmatmul.mubr.bf16.gmra.mrb[0].mxu0 %v1075
    %v1299 = vpop.f32.mrb[0].mxu0
    %v1300 = vadd.f32 %v528, %v1299
    %v1301 = vpop.f32.mrb[0].mxu0
    %v1302 = vpop.f32.mrb[0].mxu0
    %v1303 = vadd.f32 %v529, %v1302
    %v1304 = vpop.f32.mrb[0].mxu0
    %1305 = vmatprep.mubr.bf16.mxu0 0
    %1306 = vmatmul.mubr.bf16.gmra.mrb[0].mxu0 %v1078
    %v1307 = vpop.f32.mrb[0].mxu0
    %v1308 = vadd.f32 %v530, %v1307
    %v1309 = vpop.f32.mrb[0].mxu0
    %v1310 = vpop.f32.mrb[0].mxu0
    %v1311 = vadd.f32 %v531, %v1310
    %v1312 = vpop.f32.mrb[0].mxu0
    %1313 = vmatprep.mubr.bf16.mxu0 0
    %1314 = vmatmul.mubr.bf16.gmra.mrb[0].mxu0 %v1081
    %v1315 = vpop.f32.mrb[0].mxu0
    %v1316 = vadd.f32 %v532, %v1315
    %v1317 = vpop.f32.mrb[0].mxu0
    %v1318 = vpop.f32.mrb[0].mxu0
    %v1319 = vadd.f32 %v533, %v1318
    %v1320 = vpop.f32.mrb[0].mxu0
    %1321 = vmatprep.mubr.bf16.mxu0 0
    %1322 = vmatmul.mubr.bf16.gmra.mrb[0].mxu0 %v1084
    %v1323 = vpop.f32.mrb[0].mxu0
    %v1324 = vadd.f32 %v534, %v1323
    %v1325 = vpop.f32.mrb[0].mxu0
    %v1326 = vpop.f32.mrb[0].mxu0
    %v1327 = vadd.f32 %v535, %v1326
    %v1328 = vpop.f32.mrb[0].mxu0
    %1329 = vmatprep.mubr.bf16.mxu0 0
    %1330 = vmatmul.mubr.bf16.gmra.mrb[0].mxu0 %v1087
    %v1331 = vpop.f32.mrb[0].mxu0
    %v1332 = vadd.f32 %v536, %v1331
    %v1333 = vpop.f32.mrb[0].mxu0
    %v1334 = vpop.f32.mrb[0].mxu0
    %v1335 = vadd.f32 %v537, %v1334
    %v1336 = vpop.f32.mrb[0].mxu0
    %1337 = vmatprep.mubr.bf16.mxu0 0
    %1338 = vmatmul.mubr.bf16.gmra.mrb[0].mxu0 %v1090
    %v1339 = vpop.f32.mrb[0].mxu0
    %v1340 = vadd.f32 %v538, %v1339
    %v1341 = vpop.f32.mrb[0].mxu0
    %v1342 = vpop.f32.mrb[0].mxu0
    %v1343 = vadd.f32 %v539, %v1342
    %v1344 = vpop.f32.mrb[0].mxu0
    %1345 = vmatprep.mubr.bf16.mxu0 0
    %1346 = vmatmul.mubr.bf16.gmra.mrb[0].mxu0 %v1093
    %v1347 = vpop.f32.mrb[0].mxu0
    %v1348 = vadd.f32 %v540, %v1347
    %v1349 = vpop.f32.mrb[0].mxu0
    %v1350 = vpop.f32.mrb[0].mxu0
    %v1351 = vadd.f32 %v541, %v1350
    %v1352 = vpop.f32.mrb[0].mxu0
    %1353 = vmatprep.mubr.bf16.mxu0 0
    %1354 = vmatmul.mubr.bf16.gmra.mrb[0].mxu0 %v1096
    %v1355 = vpop.f32.mrb[0].mxu0
    %v1356 = vadd.f32 %v542, %v1355
    %v1357 = vpop.f32.mrb[0].mxu0
    %v1358 = vpop.f32.mrb[0].mxu0
    %v1359 = vadd.f32 %v543, %v1358
    %v1360 = vpop.f32.mrb[0].mxu0
    %1361 = vmatprep.mubr.bf16.mxu0 0
    %1362 = vmatmul.mubr.bf16.gmra.mrb[0].mxu0 %v1099
    %v1363 = vpop.f32.mrb[0].mxu0
    %v1364 = vadd.f32 %v544, %v1363
    %v1365 = vpop.f32.mrb[0].mxu0
    %v1366 = vpop.f32.mrb[0].mxu0
    %v1367 = vadd.f32 %v545, %v1366
    %v1368 = vpop.f32.mrb[0].mxu0
    %1369 = vmatprep.mubr.bf16.mxu0 0
    %1370 = vmatmul.mubr.bf16.gmra.mrb[0].mxu0 %v1102
    %v1371 = vpop.f32.mrb[0].mxu0
    %v1372 = vadd.f32 %v546, %v1371
    %v1373 = vpop.f32.mrb[0].mxu0
    %v1374 = vpop.f32.mrb[0].mxu0
    %v1375 = vadd.f32 %v547, %v1374
    %v1376 = vpop.f32.mrb[0].mxu0
    %1377 = vmatprep.mubr.bf16.mxu0 0
    %1378 = vmatmul.mubr.bf16.gmra.mrb[0].mxu0 %v1105
    %v1379 = vpop.f32.mrb[0].mxu0
    %v1380 = vadd.f32 %v548, %v1379
    %v1381 = vpop.f32.mrb[0].mxu0
    %v1382 = vpop.f32.mrb[0].mxu0
    %v1383 = vadd.f32 %v549, %v1382
    %v1384 = vpop.f32.mrb[0].mxu0
    %1385 = vmatprep.mubr.bf16.mxu0 0
    %1386 = vmatmul.mubr.bf16.gmra.mrb[0].mxu0 %v1108
    %v1387 = vpop.f32.mrb[0].mxu0
    %v1388 = vadd.f32 %v550, %v1387
    %v1389 = vpop.f32.mrb[0].mxu0
    %v1390 = vpop.f32.mrb[0].mxu0
    %v1391 = vadd.f32 %v551, %v1390
    %v1392 = vpop.f32.mrb[0].mxu0
    %1393 = vmatprep.mubr.bf16.mxu0 0
    %1394 = vmatmul.mubr.bf16.gmra.mrb[0].mxu0 %v1111
    %v1395 = vpop.f32.mrb[0].mxu0
    %v1396 = vadd.f32 %v552, %v1395
    %v1397 = vpop.f32.mrb[0].mxu0
    %v1398 = vpop.f32.mrb[0].mxu0
    %v1399 = vadd.f32 %v553, %v1398
    %v1400 = vpop.f32.mrb[0].mxu0
    %1401 = vdwg.mxu0
    %v1402 = vmax.f32 %v1148, 0.0
    %v1403 = vmax.f32 %v1151, 0.0
    %v1404 = vmax.f32 %v1156, 0.0
    %v1405 = vmax.f32 %v1159, 0.0
    %v1406 = vmax.f32 %v1164, 0.0
    %v1407 = vmax.f32 %v1167, 0.0
    %v1408 = vmax.f32 %v1172, 0.0
    %v1409 = vmax.f32 %v1175, 0.0
    %v1410 = vmax.f32 %v1180, 0.0
    %v1411 = vmax.f32 %v1183, 0.0
    %v1412 = vmax.f32 %v1188, 0.0
    %v1413 = vmax.f32 %v1191, 0.0
    %v1414 = vmax.f32 %v1196, 0.0
    %v1415 = vmax.f32 %v1199, 0.0
    %v1416 = vmax.f32 %v1204, 0.0
    %v1417 = vmax.f32 %v1207, 0.0
    %v1418 = vmax.f32 %v1212, 0.0
    %v1419 = vmax.f32 %v1215, 0.0
    %v1420 = vmax.f32 %v1220, 0.0
    %v1421 = vmax.f32 %v1223, 0.0
    %v1422 = vmax.f32 %v1228, 0.0
    %v1423 = vmax.f32 %v1231, 0.0
    %v1424 = vmax.f32 %v1236, 0.0
    %v1425 = vmax.f32 %v1239, 0.0
    %v1426 = vmax.f32 %v1244, 0.0
    %v1427 = vmax.f32 %v1247, 0.0
    %v1428 = vmax.f32 %v1252, 0.0
    %v1429 = vmax.f32 %v1255, 0.0
    %v1430 = vmax.f32 %v1260, 0.0
    %v1431 = vmax.f32 %v1263, 0.0
    %v1432 = vmax.f32 %v1268, 0.0
    %v1433 = vmax.f32 %v1271, 0.0
    %v1434 = vmax.f32 %v1276, 0.0
    %v1435 = vmax.f32 %v1279, 0.0
    %v1436 = vmax.f32 %v1284, 0.0
    %v1437 = vmax.f32 %v1287, 0.0
    %v1438 = vmax.f32 %v1292, 0.0
    %v1439 = vmax.f32 %v1295, 0.0
    %v1440 = vmax.f32 %v1300, 0.0
    %v1441 = vmax.f32 %v1303, 0.0
    %v1442 = vmax.f32 %v1308, 0.0
    %v1443 = vmax.f32 %v1311, 0.0
    %v1444 = vmax.f32 %v1316, 0.0
    %v1445 = vmax.f32 %v1319, 0.0
    %v1446 = vmax.f32 %v1324, 0.0
    %v1447 = vmax.f32 %v1327, 0.0
    %v1448 = vmax.f32 %v1332, 0.0
    %v1449 = vmax.f32 %v1335, 0.0
    %v1450 = vmax.f32 %v1340, 0.0
    %v1451 = vmax.f32 %v1343, 0.0
    %v1452 = vmax.f32 %v1348, 0.0
    %v1453 = vmax.f32 %v1351, 0.0
    %v1454 = vmax.f32 %v1356, 0.0
    %v1455 = vmax.f32 %v1359, 0.0
    %v1456 = vmax.f32 %v1364, 0.0
    %v1457 = vmax.f32 %v1367, 0.0
    %v1458 = vmax.f32 %v1372, 0.0
    %v1459 = vmax.f32 %v1375, 0.0
    %v1460 = vmax.f32 %v1380, 0.0
    %v1461 = vmax.f32 %v1383, 0.0
    %v1462 = vmax.f32 %v1388, 0.0
    %v1463 = vmax.f32 %v1391, 0.0
    %v1464 = vmax.f32 %v1396, 0.0
    %v1465 = vmax.f32 %v1399, 0.0
    %v1466 = vpack.c.bf16 %v1403, %v1402
    %v1467 = vpack.c.bf16 %v1405, %v1404
    %v1468 = vpack.c.bf16 %v1407, %v1406
    %v1469 = vpack.c.bf16 %v1409, %v1408
    %v1470 = vpack.c.bf16 %v1411, %v1410
    %v1471 = vpack.c.bf16 %v1413, %v1412
    %v1472 = vpack.c.bf16 %v1415, %v1414
    %v1473 = vpack.c.bf16 %v1417, %v1416
    %v1474 = vpack.c.bf16 %v1419, %v1418
    %v1475 = vpack.c.bf16 %v1421, %v1420
    %v1476 = vpack.c.bf16 %v1423, %v1422
    %v1477 = vpack.c.bf16 %v1425, %v1424
    %v1478 = vpack.c.bf16 %v1427, %v1426
    %v1479 = vpack.c.bf16 %v1429, %v1428
    %v1480 = vpack.c.bf16 %v1431, %v1430
    %v1481 = vpack.c.bf16 %v1433, %v1432
    %v1482 = vpack.c.bf16 %v1435, %v1434
    %v1483 = vpack.c.bf16 %v1437, %v1436
    %v1484 = vpack.c.bf16 %v1439, %v1438
    %v1485 = vpack.c.bf16 %v1441, %v1440
    %v1486 = vpack.c.bf16 %v1443, %v1442
    %v1487 = vpack.c.bf16 %v1445, %v1444
    %v1488 = vpack.c.bf16 %v1447, %v1446
    %v1489 = vpack.c.bf16 %v1449, %v1448
    %v1490 = vpack.c.bf16 %v1451, %v1450
    %v1491 = vpack.c.bf16 %v1453, %v1452
    %v1492 = vpack.c.bf16 %v1455, %v1454
    %v1493 = vpack.c.bf16 %v1457, %v1456
    %v1494 = vpack.c.bf16 %v1459, %v1458
    %v1495 = vpack.c.bf16 %v1461, %v1460
    %v1496 = vpack.c.bf16 %v1463, %v1462
    %v1497 = vpack.c.bf16 %v1465, %v1464
    %v1498 = vlaneseq
    %v1499 = vshrl.u32 %v1498, 7
    %v1500 = vsub.s32 0, %v1499
    %v1501 = vrot.slane %v1000, %v1500
    %v1510 = vunpack.c.l.b16 %v984
    %v1511 = vunpack.c.l.b16 %v985
    %v1512 = vunpack.c.l.b16 %v986
    %v1513 = vunpack.c.l.b16 %v987
    %v1514 = vunpack.c.l.b16 %v988
    %v1515 = vunpack.c.l.b16 %v989
    %v1516 = vunpack.c.l.b16 %v990
    %v1517 = vunpack.c.l.b16 %v991
    %v1518 = vpack.c.b16 %v1511, %v1510
    %v1519 = vpack.c.b16 %v1513, %v1512
    %v1520 = vpack.c.b16 %v1515, %v1514
    %v1521 = vpack.c.b16 %v1517, %v1516
    %vm1526 = vcmask 523264
    %v1528 = vsel %vm1526, %v1466, 0
    %v1531 = vsel %vm1526, %v1467, 0
    %v1534 = vsel %vm1526, %v1468, 0
    %v1537 = vsel %vm1526, %v1469, 0
    %v1540 = vsel %vm1526, %v1470, 0
    %v1543 = vsel %vm1526, %v1471, 0
    %v1546 = vsel %vm1526, %v1472, 0
    %v1549 = vsel %vm1526, %v1473, 0
    %v1552 = vsel %vm1526, %v1474, 0
    %v1555 = vsel %vm1526, %v1475, 0
    %v1558 = vsel %vm1526, %v1476, 0
    %v1561 = vsel %vm1526, %v1477, 0
    %v1564 = vsel %vm1526, %v1478, 0
    %v1567 = vsel %vm1526, %v1479, 0
    %v1570 = vsel %vm1526, %v1480, 0
    %v1573 = vsel %vm1526, %v1481, 0
    %v1576 = vsel %vm1526, %v1482, 0
    %v1579 = vsel %vm1526, %v1483, 0
    %v1582 = vsel %vm1526, %v1484, 0
    %v1585 = vsel %vm1526, %v1485, 0
    %v1588 = vsel %vm1526, %v1486, 0
    %v1591 = vsel %vm1526, %v1487, 0
    %v1594 = vsel %vm1526, %v1488, 0
    %v1597 = vsel %vm1526, %v1489, 0
    %v1600 = vsel %vm1526, %v1490, 0
    %v1603 = vsel %vm1526, %v1491, 0
    %v1606 = vsel %vm1526, %v1492, 0
    %v1609 = vsel %vm1526, %v1493, 0
    %v1612 = vsel %vm1526, %v1494, 0
    %v1615 = vsel %vm1526, %v1495, 0
    %v1618 = vsel %vm1526, %v1496, 0
    %v1621 = vsel %vm1526, %v1497, 0
    %1623 = vmatprep.subr.bf16.mxu0 0
    %1624 = vmatpush1.bf16.msra.mxu0 %v1518
    %1625 = vmatprep.subr.bf16.mxu0 0
    %1626 = vmatpush1.bf16.msra.mxu0 %v1519
    %1627 = vmatprep.subr.bf16.mxu0 0
    %1628 = vmatpush1.bf16.msra.mxu0 %v1520
    %1629 = vmatprep.subr.bf16.mxu0 0
    %1630 = vmatpush1.bf16.msra.mxu0 %v1521
    %1631 = vmatprep.subr.bf16.mxu0 0
    %1632 = vmatpush1.bf16.msra.mxu0 0
    %1633 = vmatprep.subr.bf16.mxu0 0
    %1634 = vmatpush1.bf16.msra.mxu0 0
    %1635 = vmatprep.subr.bf16.mxu0 0
    %1636 = vmatpush1.bf16.msra.mxu0 0
    %1637 = vmatprep.subr.bf16.mxu0 0
    %1638 = vmatpush1.bf16.msra.mxu0 0
    %1639 = vmatprep.subr.bf16.mxu0 0
    %1640 = vmatpush1.bf16.msra.mxu0 0
    %1641 = vmatprep.subr.bf16.mxu0 0
    %1642 = vmatpush1.bf16.msra.mxu0 0
    %1643 = vmatprep.subr.bf16.mxu0 0
    %1644 = vmatpush1.bf16.msra.mxu0 0
    %1645 = vmatprep.subr.bf16.mxu0 0
    %1646 = vmatpush1.bf16.msra.mxu0 0
    %1647 = vmatprep.subr.bf16.mxu0 0
    %1648 = vmatpush1.bf16.msra.mxu0 0
    %1649 = vmatprep.subr.bf16.mxu0 0
    %1650 = vmatpush1.bf16.msra.mxu0 0
    %1651 = vmatprep.subr.bf16.mxu0 0
    %1652 = vmatpush1.bf16.msra.mxu0 0
    %1653 = vmatprep.subr.bf16.mxu0 0
    %1654 = vmatpush1.bf16.msra.mxu0 0
    %1655 = vmatprep.mubr.bf16.mxu0 0
    %1656 = vmatmul.mubr.bf16.gmra.mrb[0].mxu0 %v1528
    %v1657 = vpop.f32.mrb[0].mxu0
    %v1658 = vadd.f32 %v1501, %v1657
    %v1659 = vpop.f32.mrb[0].mxu0
    %v1660 = vpop.f32.mrb[0].mxu0
    %v1661 = vadd.f32 %v1501, %v1660
    %v1662 = vpop.f32.mrb[0].mxu0
    %1663 = vmatprep.mubr.bf16.mxu0 0
    %1664 = vmatmul.mubr.bf16.gmra.mrb[0].mxu0 %v1531
    %v1665 = vpop.f32.mrb[0].mxu0
    %v1666 = vadd.f32 %v1501, %v1665
    %v1667 = vpop.f32.mrb[0].mxu0
    %v1668 = vpop.f32.mrb[0].mxu0
    %v1669 = vadd.f32 %v1501, %v1668
    %v1670 = vpop.f32.mrb[0].mxu0
    %1671 = vmatprep.mubr.bf16.mxu0 0
    %1672 = vmatmul.mubr.bf16.gmra.mrb[0].mxu0 %v1534
    %v1673 = vpop.f32.mrb[0].mxu0
    %v1674 = vadd.f32 %v1501, %v1673
    %v1675 = vpop.f32.mrb[0].mxu0
    %v1676 = vpop.f32.mrb[0].mxu0
    %v1677 = vadd.f32 %v1501, %v1676
    %v1678 = vpop.f32.mrb[0].mxu0
    %1679 = vmatprep.mubr.bf16.mxu0 0
    %1680 = vmatmul.mubr.bf16.gmra.mrb[0].mxu0 %v1537
    %v1681 = vpop.f32.mrb[0].mxu0
    %v1682 = vadd.f32 %v1501, %v1681
    %v1683 = vpop.f32.mrb[0].mxu0
    %v1684 = vpop.f32.mrb[0].mxu0
    %v1685 = vadd.f32 %v1501, %v1684
    %v1686 = vpop.f32.mrb[0].mxu0
    %1687 = vmatprep.mubr.bf16.mxu0 0
    %1688 = vmatmul.mubr.bf16.gmra.mrb[0].mxu0 %v1540
    %v1689 = vpop.f32.mrb[0].mxu0
    %v1690 = vadd.f32 %v1501, %v1689
    %v1691 = vpop.f32.mrb[0].mxu0
    %v1692 = vpop.f32.mrb[0].mxu0
    %v1693 = vadd.f32 %v1501, %v1692
    %v1694 = vpop.f32.mrb[0].mxu0
    %1695 = vmatprep.mubr.bf16.mxu0 0
    %1696 = vmatmul.mubr.bf16.gmra.mrb[0].mxu0 %v1543
    %v1697 = vpop.f32.mrb[0].mxu0
    %v1698 = vadd.f32 %v1501, %v1697
    %v1699 = vpop.f32.mrb[0].mxu0
    %v1700 = vpop.f32.mrb[0].mxu0
    %v1701 = vadd.f32 %v1501, %v1700
    %v1702 = vpop.f32.mrb[0].mxu0
    %1703 = vmatprep.mubr.bf16.mxu0 0
    %1704 = vmatmul.mubr.bf16.gmra.mrb[0].mxu0 %v1546
    %v1705 = vpop.f32.mrb[0].mxu0
    %v1706 = vadd.f32 %v1501, %v1705
    %v1707 = vpop.f32.mrb[0].mxu0
    %v1708 = vpop.f32.mrb[0].mxu0
    %v1709 = vadd.f32 %v1501, %v1708
    %v1710 = vpop.f32.mrb[0].mxu0
    %1711 = vmatprep.mubr.bf16.mxu0 0
    %1712 = vmatmul.mubr.bf16.gmra.mrb[0].mxu0 %v1549
    %v1713 = vpop.f32.mrb[0].mxu0
    %v1714 = vadd.f32 %v1501, %v1713
    %v1715 = vpop.f32.mrb[0].mxu0
    %v1716 = vpop.f32.mrb[0].mxu0
    %v1717 = vadd.f32 %v1501, %v1716
    %v1718 = vpop.f32.mrb[0].mxu0
    %1719 = vmatprep.mubr.bf16.mxu0 0
    %1720 = vmatmul.mubr.bf16.gmra.mrb[0].mxu0 %v1552
    %v1721 = vpop.f32.mrb[0].mxu0
    %v1722 = vadd.f32 %v1501, %v1721
    %v1723 = vpop.f32.mrb[0].mxu0
    %v1724 = vpop.f32.mrb[0].mxu0
    %v1725 = vadd.f32 %v1501, %v1724
    %v1726 = vpop.f32.mrb[0].mxu0
    %1727 = vmatprep.mubr.bf16.mxu0 0
    %1728 = vmatmul.mubr.bf16.gmra.mrb[0].mxu0 %v1555
    %v1729 = vpop.f32.mrb[0].mxu0
    %v1730 = vadd.f32 %v1501, %v1729
    %v1731 = vpop.f32.mrb[0].mxu0
    %v1732 = vpop.f32.mrb[0].mxu0
    %v1733 = vadd.f32 %v1501, %v1732
    %v1734 = vpop.f32.mrb[0].mxu0
    %1735 = vmatprep.mubr.bf16.mxu0 0
    %1736 = vmatmul.mubr.bf16.gmra.mrb[0].mxu0 %v1558
    %v1737 = vpop.f32.mrb[0].mxu0
    %v1738 = vadd.f32 %v1501, %v1737
    %v1739 = vpop.f32.mrb[0].mxu0
    %v1740 = vpop.f32.mrb[0].mxu0
    %v1741 = vadd.f32 %v1501, %v1740
    %v1742 = vpop.f32.mrb[0].mxu0
    %1743 = vmatprep.mubr.bf16.mxu0 0
    %1744 = vmatmul.mubr.bf16.gmra.mrb[0].mxu0 %v1561
    %v1745 = vpop.f32.mrb[0].mxu0
    %v1746 = vadd.f32 %v1501, %v1745
    %v1747 = vpop.f32.mrb[0].mxu0
    %v1748 = vpop.f32.mrb[0].mxu0
    %v1749 = vadd.f32 %v1501, %v1748
    %v1750 = vpop.f32.mrb[0].mxu0
    %1751 = vmatprep.mubr.bf16.mxu0 0
    %1752 = vmatmul.mubr.bf16.gmra.mrb[0].mxu0 %v1564
    %v1753 = vpop.f32.mrb[0].mxu0
    %v1754 = vadd.f32 %v1501, %v1753
    %v1755 = vpop.f32.mrb[0].mxu0
    %v1756 = vpop.f32.mrb[0].mxu0
    %v1757 = vadd.f32 %v1501, %v1756
    %v1758 = vpop.f32.mrb[0].mxu0
    %1759 = vmatprep.mubr.bf16.mxu0 0
    %1760 = vmatmul.mubr.bf16.gmra.mrb[0].mxu0 %v1567
    %v1761 = vpop.f32.mrb[0].mxu0
    %v1762 = vadd.f32 %v1501, %v1761
    %v1763 = vpop.f32.mrb[0].mxu0
    %v1764 = vpop.f32.mrb[0].mxu0
    %v1765 = vadd.f32 %v1501, %v1764
    %v1766 = vpop.f32.mrb[0].mxu0
    %1767 = vmatprep.mubr.bf16.mxu0 0
    %1768 = vmatmul.mubr.bf16.gmra.mrb[0].mxu0 %v1570
    %v1769 = vpop.f32.mrb[0].mxu0
    %v1770 = vadd.f32 %v1501, %v1769
    %v1771 = vpop.f32.mrb[0].mxu0
    %v1772 = vpop.f32.mrb[0].mxu0
    %v1773 = vadd.f32 %v1501, %v1772
    %v1774 = vpop.f32.mrb[0].mxu0
    %1775 = vmatprep.mubr.bf16.mxu0 0
    %1776 = vmatmul.mubr.bf16.gmra.mrb[0].mxu0 %v1573
    %v1777 = vpop.f32.mrb[0].mxu0
    %v1778 = vadd.f32 %v1501, %v1777
    %v1779 = vpop.f32.mrb[0].mxu0
    %v1780 = vpop.f32.mrb[0].mxu0
    %v1781 = vadd.f32 %v1501, %v1780
    %v1782 = vpop.f32.mrb[0].mxu0
    %1783 = vmatprep.mubr.bf16.mxu0 0
    %1784 = vmatmul.mubr.bf16.gmra.mrb[0].mxu0 %v1576
    %v1785 = vpop.f32.mrb[0].mxu0
    %v1786 = vadd.f32 %v1501, %v1785
    %v1787 = vpop.f32.mrb[0].mxu0
    %v1788 = vpop.f32.mrb[0].mxu0
    %v1789 = vadd.f32 %v1501, %v1788
    %v1790 = vpop.f32.mrb[0].mxu0
    %1791 = vmatprep.mubr.bf16.mxu0 0
    %1792 = vmatmul.mubr.bf16.gmra.mrb[0].mxu0 %v1579
    %v1793 = vpop.f32.mrb[0].mxu0
    %v1794 = vadd.f32 %v1501, %v1793
    %v1795 = vpop.f32.mrb[0].mxu0
    %v1796 = vpop.f32.mrb[0].mxu0
    %v1797 = vadd.f32 %v1501, %v1796
    %v1798 = vpop.f32.mrb[0].mxu0
    %1799 = vmatprep.mubr.bf16.mxu0 0
    %1800 = vmatmul.mubr.bf16.gmra.mrb[0].mxu0 %v1582
    %v1801 = vpop.f32.mrb[0].mxu0
    %v1802 = vadd.f32 %v1501, %v1801
    %v1803 = vpop.f32.mrb[0].mxu0
    %v1804 = vpop.f32.mrb[0].mxu0
    %v1805 = vadd.f32 %v1501, %v1804
    %v1806 = vpop.f32.mrb[0].mxu0
    %1807 = vmatprep.mubr.bf16.mxu0 0
    %1808 = vmatmul.mubr.bf16.gmra.mrb[0].mxu0 %v1585
    %v1809 = vpop.f32.mrb[0].mxu0
    %v1810 = vadd.f32 %v1501, %v1809
    %v1811 = vpop.f32.mrb[0].mxu0
    %v1812 = vpop.f32.mrb[0].mxu0
    %v1813 = vadd.f32 %v1501, %v1812
    %v1814 = vpop.f32.mrb[0].mxu0
    %1815 = vmatprep.mubr.bf16.mxu0 0
    %1816 = vmatmul.mubr.bf16.gmra.mrb[0].mxu0 %v1588
    %v1817 = vpop.f32.mrb[0].mxu0
    %v1818 = vadd.f32 %v1501, %v1817
    %v1819 = vpop.f32.mrb[0].mxu0
    %v1820 = vpop.f32.mrb[0].mxu0
    %v1821 = vadd.f32 %v1501, %v1820
    %v1822 = vpop.f32.mrb[0].mxu0
    %1823 = vmatprep.mubr.bf16.mxu0 0
    %1824 = vmatmul.mubr.bf16.gmra.mrb[0].mxu0 %v1591
    %v1825 = vpop.f32.mrb[0].mxu0
    %v1826 = vadd.f32 %v1501, %v1825
    %v1827 = vpop.f32.mrb[0].mxu0
    %v1828 = vpop.f32.mrb[0].mxu0
    %v1829 = vadd.f32 %v1501, %v1828
    %v1830 = vpop.f32.mrb[0].mxu0
    %1831 = vmatprep.mubr.bf16.mxu0 0
    %1832 = vmatmul.mubr.bf16.gmra.mrb[0].mxu0 %v1594
    %v1833 = vpop.f32.mrb[0].mxu0
    %v1834 = vadd.f32 %v1501, %v1833
    %v1835 = vpop.f32.mrb[0].mxu0
    %v1836 = vpop.f32.mrb[0].mxu0
    %v1837 = vadd.f32 %v1501, %v1836
    %v1838 = vpop.f32.mrb[0].mxu0
    %1839 = vmatprep.mubr.bf16.mxu0 0
    %1840 = vmatmul.mubr.bf16.gmra.mrb[0].mxu0 %v1597
    %v1841 = vpop.f32.mrb[0].mxu0
    %v1842 = vadd.f32 %v1501, %v1841
    %v1843 = vpop.f32.mrb[0].mxu0
    %v1844 = vpop.f32.mrb[0].mxu0
    %v1845 = vadd.f32 %v1501, %v1844
    %v1846 = vpop.f32.mrb[0].mxu0
    %1847 = vmatprep.mubr.bf16.mxu0 0
    %1848 = vmatmul.mubr.bf16.gmra.mrb[0].mxu0 %v1600
    %v1849 = vpop.f32.mrb[0].mxu0
    %v1850 = vadd.f32 %v1501, %v1849
    %v1851 = vpop.f32.mrb[0].mxu0
    %v1852 = vpop.f32.mrb[0].mxu0
    %v1853 = vadd.f32 %v1501, %v1852
    %v1854 = vpop.f32.mrb[0].mxu0
    %1855 = vmatprep.mubr.bf16.mxu0 0
    %1856 = vmatmul.mubr.bf16.gmra.mrb[0].mxu0 %v1603
    %v1857 = vpop.f32.mrb[0].mxu0
    %v1858 = vadd.f32 %v1501, %v1857
    %v1859 = vpop.f32.mrb[0].mxu0
    %v1860 = vpop.f32.mrb[0].mxu0
    %v1861 = vadd.f32 %v1501, %v1860
    %v1862 = vpop.f32.mrb[0].mxu0
    %1863 = vmatprep.mubr.bf16.mxu0 0
    %1864 = vmatmul.mubr.bf16.gmra.mrb[0].mxu0 %v1606
    %v1865 = vpop.f32.mrb[0].mxu0
    %v1866 = vadd.f32 %v1501, %v1865
    %v1867 = vpop.f32.mrb[0].mxu0
    %v1868 = vpop.f32.mrb[0].mxu0
    %v1869 = vadd.f32 %v1501, %v1868
    %v1870 = vpop.f32.mrb[0].mxu0
    %1871 = vmatprep.mubr.bf16.mxu0 0
    %1872 = vmatmul.mubr.bf16.gmra.mrb[0].mxu0 %v1609
    %v1873 = vpop.f32.mrb[0].mxu0
    %v1874 = vadd.f32 %v1501, %v1873
    %v1875 = vpop.f32.mrb[0].mxu0
    %v1876 = vpop.f32.mrb[0].mxu0
    %v1877 = vadd.f32 %v1501, %v1876
    %v1878 = vpop.f32.mrb[0].mxu0
    %1879 = vmatprep.mubr.bf16.mxu0 0
    %1880 = vmatmul.mubr.bf16.gmra.mrb[0].mxu0 %v1612
    %v1881 = vpop.f32.mrb[0].mxu0
    %v1882 = vadd.f32 %v1501, %v1881
    %v1883 = vpop.f32.mrb[0].mxu0
    %v1884 = vpop.f32.mrb[0].mxu0
    %v1885 = vadd.f32 %v1501, %v1884
    %v1886 = vpop.f32.mrb[0].mxu0
    %1887 = vmatprep.mubr.bf16.mxu0 0
    %1888 = vmatmul.mubr.bf16.gmra.mrb[0].mxu0 %v1615
    %v1889 = vpop.f32.mrb[0].mxu0
    %v1890 = vadd.f32 %v1501, %v1889
    %v1891 = vpop.f32.mrb[0].mxu0
    %v1892 = vpop.f32.mrb[0].mxu0
    %v1893 = vadd.f32 %v1501, %v1892
    %v1894 = vpop.f32.mrb[0].mxu0
    %1895 = vmatprep.mubr.bf16.mxu0 0
    %1896 = vmatmul.mubr.bf16.gmra.mrb[0].mxu0 %v1618
    %v1897 = vpop.f32.mrb[0].mxu0
    %v1898 = vadd.f32 %v1501, %v1897
    %v1899 = vpop.f32.mrb[0].mxu0
    %v1900 = vpop.f32.mrb[0].mxu0
    %v1901 = vadd.f32 %v1501, %v1900
    %v1902 = vpop.f32.mrb[0].mxu0
    %1903 = vmatprep.mubr.bf16.mxu0 0
    %1904 = vmatmul.mubr.bf16.gmra.mrb[0].mxu0 %v1621
    %v1905 = vpop.f32.mrb[0].mxu0
    %v1906 = vadd.f32 %v1501, %v1905
    %v1907 = vpop.f32.mrb[0].mxu0
    %v1908 = vpop.f32.mrb[0].mxu0
    %v1909 = vadd.f32 %v1501, %v1908
    %v1910 = vpop.f32.mrb[0].mxu0
    %1911 = vdwg.mxu0
    %v1912 = vmax.f32 %v1658, 0.0
    %v1913 = vmax.f32 %v1661, 0.0
    %v1914 = vmax.f32 %v1666, 0.0
    %v1915 = vmax.f32 %v1669, 0.0
    %v1916 = vmax.f32 %v1674, 0.0
    %v1917 = vmax.f32 %v1677, 0.0
    %v1918 = vmax.f32 %v1682, 0.0
    %v1919 = vmax.f32 %v1685, 0.0
    %v1920 = vmax.f32 %v1690, 0.0
    %v1921 = vmax.f32 %v1693, 0.0
    %v1922 = vmax.f32 %v1698, 0.0
    %v1923 = vmax.f32 %v1701, 0.0
    %v1924 = vmax.f32 %v1706, 0.0
    %v1925 = vmax.f32 %v1709, 0.0
    %v1926 = vmax.f32 %v1714, 0.0
    %v1927 = vmax.f32 %v1717, 0.0
    %v1928 = vmax.f32 %v1722, 0.0
    %v1929 = vmax.f32 %v1725, 0.0
    %v1930 = vmax.f32 %v1730, 0.0
    %v1931 = vmax.f32 %v1733, 0.0
    %v1932 = vmax.f32 %v1738, 0.0
    %v1933 = vmax.f32 %v1741, 0.0
    %v1934 = vmax.f32 %v1746, 0.0
    %v1935 = vmax.f32 %v1749, 0.0
    %v1936 = vmax.f32 %v1754, 0.0
    %v1937 = vmax.f32 %v1757, 0.0
    %v1938 = vmax.f32 %v1762, 0.0
    %v1939 = vmax.f32 %v1765, 0.0
    %v1940 = vmax.f32 %v1770, 0.0
    %v1941 = vmax.f32 %v1773, 0.0
    %v1942 = vmax.f32 %v1778, 0.0
    %v1943 = vmax.f32 %v1781, 0.0
    %v1944 = vmax.f32 %v1786, 0.0
    %v1945 = vmax.f32 %v1789, 0.0
    %v1946 = vmax.f32 %v1794, 0.0
    %v1947 = vmax.f32 %v1797, 0.0
    %v1948 = vmax.f32 %v1802, 0.0
    %v1949 = vmax.f32 %v1805, 0.0
    %v1950 = vmax.f32 %v1810, 0.0
    %v1951 = vmax.f32 %v1813, 0.0
    %v1952 = vmax.f32 %v1818, 0.0
    %v1953 = vmax.f32 %v1821, 0.0
    %v1954 = vmax.f32 %v1826, 0.0
    %v1955 = vmax.f32 %v1829, 0.0
    %v1956 = vmax.f32 %v1834, 0.0
    %v1957 = vmax.f32 %v1837, 0.0
    %v1958 = vmax.f32 %v1842, 0.0
    %v1959 = vmax.f32 %v1845, 0.0
    %v1960 = vmax.f32 %v1850, 0.0
    %v1961 = vmax.f32 %v1853, 0.0
    %v1962 = vmax.f32 %v1858, 0.0
    %v1963 = vmax.f32 %v1861, 0.0
    %v1964 = vmax.f32 %v1866, 0.0
    %v1965 = vmax.f32 %v1869, 0.0
    %v1966 = vmax.f32 %v1874, 0.0
    %v1967 = vmax.f32 %v1877, 0.0
    %v1968 = vmax.f32 %v1882, 0.0
    %v1969 = vmax.f32 %v1885, 0.0
    %v1970 = vmax.f32 %v1890, 0.0
    %v1971 = vmax.f32 %v1893, 0.0
    %v1972 = vmax.f32 %v1898, 0.0
    %v1973 = vmax.f32 %v1901, 0.0
    %v1974 = vmax.f32 %v1906, 0.0
    %v1975 = vmax.f32 %v1909, 0.0
    %v1976 = vpack.c.bf16 %v1913, %v1912
    %v1977 = vpack.c.bf16 %v1915, %v1914
    %v1978 = vpack.c.bf16 %v1917, %v1916
    %v1979 = vpack.c.bf16 %v1919, %v1918
    %v1980 = vpack.c.bf16 %v1921, %v1920
    %v1981 = vpack.c.bf16 %v1923, %v1922
    %v1982 = vpack.c.bf16 %v1925, %v1924
    %v1983 = vpack.c.bf16 %v1927, %v1926
    %v1984 = vpack.c.bf16 %v1929, %v1928
    %v1985 = vpack.c.bf16 %v1931, %v1930
    %v1986 = vpack.c.bf16 %v1933, %v1932
    %v1987 = vpack.c.bf16 %v1935, %v1934
    %v1988 = vpack.c.bf16 %v1937, %v1936
    %v1989 = vpack.c.bf16 %v1939, %v1938
    %v1990 = vpack.c.bf16 %v1941, %v1940
    %v1991 = vpack.c.bf16 %v1943, %v1942
    %v1992 = vpack.c.bf16 %v1945, %v1944
    %v1993 = vpack.c.bf16 %v1947, %v1946
    %v1994 = vpack.c.bf16 %v1949, %v1948
    %v1995 = vpack.c.bf16 %v1951, %v1950
    %v1996 = vpack.c.bf16 %v1953, %v1952
    %v1997 = vpack.c.bf16 %v1955, %v1954
    %v1998 = vpack.c.bf16 %v1957, %v1956
    %v1999 = vpack.c.bf16 %v1959, %v1958
    %v2000 = vpack.c.bf16 %v1961, %v1960
    %v2001 = vpack.c.bf16 %v1963, %v1962
    %v2002 = vpack.c.bf16 %v1965, %v1964
    %v2003 = vpack.c.bf16 %v1967, %v1966
    %v2004 = vpack.c.bf16 %v1969, %v1968
    %v2005 = vpack.c.bf16 %v1971, %v1970
    %v2006 = vpack.c.bf16 %v1973, %v1972
    %v2007 = vpack.c.bf16 %v1975, %v1974
    %v2008 = vlaneseq
    %v2009 = vshrl.u32 %v2008, 7
    %v2010 = vsub.s32 0, %v2009
    %v2011 = vrot.slane %v1001, %v2010
    %v2020 = vunpack.c.l.b16 %v992
    %v2021 = vunpack.c.l.b16 %v993
    %v2022 = vunpack.c.l.b16 %v994
    %v2023 = vunpack.c.l.b16 %v995
    %v2024 = vunpack.c.l.b16 %v996
    %v2025 = vunpack.c.l.b16 %v997
    %v2026 = vunpack.c.l.b16 %v998
    %v2027 = vunpack.c.l.b16 %v999
    %v2028 = vpack.c.b16 %v2021, %v2020
    %v2029 = vpack.c.b16 %v2023, %v2022
    %v2030 = vpack.c.b16 %v2025, %v2024
    %v2031 = vpack.c.b16 %v2027, %v2026
    %v2037 = vsel %vm1526, %v1976, 0
    %v2040 = vsel %vm1526, %v1977, 0
    %v2043 = vsel %vm1526, %v1978, 0
    %v2046 = vsel %vm1526, %v1979, 0
    %v2049 = vsel %vm1526, %v1980, 0
    %v2052 = vsel %vm1526, %v1981, 0
    %v2055 = vsel %vm1526, %v1982, 0
    %v2058 = vsel %vm1526, %v1983, 0
    %v2061 = vsel %vm1526, %v1984, 0
    %v2064 = vsel %vm1526, %v1985, 0
    %v2067 = vsel %vm1526, %v1986, 0
    %v2070 = vsel %vm1526, %v1987, 0
    %v2073 = vsel %vm1526, %v1988, 0
    %v2076 = vsel %vm1526, %v1989, 0
    %v2079 = vsel %vm1526, %v1990, 0
    %v2082 = vsel %vm1526, %v1991, 0
    %v2085 = vsel %vm1526, %v1992, 0
    %v2088 = vsel %vm1526, %v1993, 0
    %v2091 = vsel %vm1526, %v1994, 0
    %v2094 = vsel %vm1526, %v1995, 0
    %v2097 = vsel %vm1526, %v1996, 0
    %v2100 = vsel %vm1526, %v1997, 0
    %v2103 = vsel %vm1526, %v1998, 0
    %v2106 = vsel %vm1526, %v1999, 0
    %v2109 = vsel %vm1526, %v2000, 0
    %v2112 = vsel %vm1526, %v2001, 0
    %v2115 = vsel %vm1526, %v2002, 0
    %v2118 = vsel %vm1526, %v2003, 0
    %v2121 = vsel %vm1526, %v2004, 0
    %v2124 = vsel %vm1526, %v2005, 0
    %v2127 = vsel %vm1526, %v2006, 0
    %v2130 = vsel %vm1526, %v2007, 0
    %2132 = vmatprep.subr.bf16.mxu0 0
    %2133 = vmatpush1.bf16.msra.mxu0 %v2028
    %2134 = vmatprep.subr.bf16.mxu0 0
    %2135 = vmatpush1.bf16.msra.mxu0 %v2029
    %2136 = vmatprep.subr.bf16.mxu0 0
    %2137 = vmatpush1.bf16.msra.mxu0 %v2030
    %2138 = vmatprep.subr.bf16.mxu0 0
    %2139 = vmatpush1.bf16.msra.mxu0 %v2031
    %2140 = vmatprep.subr.bf16.mxu0 0
    %2141 = vmatpush1.bf16.msra.mxu0 0
    %2142 = vmatprep.subr.bf16.mxu0 0
    %2143 = vmatpush1.bf16.msra.mxu0 0
    %2144 = vmatprep.subr.bf16.mxu0 0
    %2145 = vmatpush1.bf16.msra.mxu0 0
    %2146 = vmatprep.subr.bf16.mxu0 0
    %2147 = vmatpush1.bf16.msra.mxu0 0
    %2148 = vmatprep.subr.bf16.mxu0 0
    %2149 = vmatpush1.bf16.msra.mxu0 0
    %2150 = vmatprep.subr.bf16.mxu0 0
    %2151 = vmatpush1.bf16.msra.mxu0 0
    %2152 = vmatprep.subr.bf16.mxu0 0
    %2153 = vmatpush1.bf16.msra.mxu0 0
    %2154 = vmatprep.subr.bf16.mxu0 0
    %2155 = vmatpush1.bf16.msra.mxu0 0
    %2156 = vmatprep.subr.bf16.mxu0 0
    %2157 = vmatpush1.bf16.msra.mxu0 0
    %2158 = vmatprep.subr.bf16.mxu0 0
    %2159 = vmatpush1.bf16.msra.mxu0 0
    %2160 = vmatprep.subr.bf16.mxu0 0
    %2161 = vmatpush1.bf16.msra.mxu0 0
    %2162 = vmatprep.subr.bf16.mxu0 0
    %2163 = vmatpush1.bf16.msra.mxu0 0
    %2164 = vmatprep.mubr.bf16.mxu0 0
    %2165 = vmatmul.mubr.bf16.gmra.mrb[0].mxu0 %v2037
    %v2166 = vpop.f32.mrb[0].mxu0
    %v2167 = vadd.f32 %v2011, %v2166
    %v2168 = vpop.f32.mrb[0].mxu0
    %v2169 = vpop.f32.mrb[0].mxu0
    %v2170 = vadd.f32 %v2011, %v2169
    %v2171 = vpop.f32.mrb[0].mxu0
    %2172 = vmatprep.mubr.bf16.mxu0 0
    %2173 = vmatmul.mubr.bf16.gmra.mrb[0].mxu0 %v2040
    %v2174 = vpop.f32.mrb[0].mxu0
    %v2175 = vadd.f32 %v2011, %v2174
    %v2176 = vpop.f32.mrb[0].mxu0
    %v2177 = vpop.f32.mrb[0].mxu0
    %v2178 = vadd.f32 %v2011, %v2177
    %v2179 = vpop.f32.mrb[0].mxu0
    %2180 = vmatprep.mubr.bf16.mxu0 0
    %2181 = vmatmul.mubr.bf16.gmra.mrb[0].mxu0 %v2043
    %v2182 = vpop.f32.mrb[0].mxu0
    %v2183 = vadd.f32 %v2011, %v2182
    %v2184 = vpop.f32.mrb[0].mxu0
    %v2185 = vpop.f32.mrb[0].mxu0
    %v2186 = vadd.f32 %v2011, %v2185
    %v2187 = vpop.f32.mrb[0].mxu0
    %2188 = vmatprep.mubr.bf16.mxu0 0
    %2189 = vmatmul.mubr.bf16.gmra.mrb[0].mxu0 %v2046
    %v2190 = vpop.f32.mrb[0].mxu0
    %v2191 = vadd.f32 %v2011, %v2190
    %v2192 = vpop.f32.mrb[0].mxu0
    %v2193 = vpop.f32.mrb[0].mxu0
    %v2194 = vadd.f32 %v2011, %v2193
    %v2195 = vpop.f32.mrb[0].mxu0
    %2196 = vmatprep.mubr.bf16.mxu0 0
    %2197 = vmatmul.mubr.bf16.gmra.mrb[0].mxu0 %v2049
    %v2198 = vpop.f32.mrb[0].mxu0
    %v2199 = vadd.f32 %v2011, %v2198
    %v2200 = vpop.f32.mrb[0].mxu0
    %v2201 = vpop.f32.mrb[0].mxu0
    %v2202 = vadd.f32 %v2011, %v2201
    %v2203 = vpop.f32.mrb[0].mxu0
    %2204 = vmatprep.mubr.bf16.mxu0 0
    %2205 = vmatmul.mubr.bf16.gmra.mrb[0].mxu0 %v2052
    %v2206 = vpop.f32.mrb[0].mxu0
    %v2207 = vadd.f32 %v2011, %v2206
    %v2208 = vpop.f32.mrb[0].mxu0
    %v2209 = vpop.f32.mrb[0].mxu0
    %v2210 = vadd.f32 %v2011, %v2209
    %v2211 = vpop.f32.mrb[0].mxu0
    %2212 = vmatprep.mubr.bf16.mxu0 0
    %2213 = vmatmul.mubr.bf16.gmra.mrb[0].mxu0 %v2055
    %v2214 = vpop.f32.mrb[0].mxu0
    %v2215 = vadd.f32 %v2011, %v2214
    %v2216 = vpop.f32.mrb[0].mxu0
    %v2217 = vpop.f32.mrb[0].mxu0
    %v2218 = vadd.f32 %v2011, %v2217
    %v2219 = vpop.f32.mrb[0].mxu0
    %2220 = vmatprep.mubr.bf16.mxu0 0
    %2221 = vmatmul.mubr.bf16.gmra.mrb[0].mxu0 %v2058
    %v2222 = vpop.f32.mrb[0].mxu0
    %v2223 = vadd.f32 %v2011, %v2222
    %v2224 = vpop.f32.mrb[0].mxu0
    %v2225 = vpop.f32.mrb[0].mxu0
    %v2226 = vadd.f32 %v2011, %v2225
    %v2227 = vpop.f32.mrb[0].mxu0
    %2228 = vmatprep.mubr.bf16.mxu0 0
    %2229 = vmatmul.mubr.bf16.gmra.mrb[0].mxu0 %v2061
    %v2230 = vpop.f32.mrb[0].mxu0
    %v2231 = vadd.f32 %v2011, %v2230
    %v2232 = vpop.f32.mrb[0].mxu0
    %v2233 = vpop.f32.mrb[0].mxu0
    %v2234 = vadd.f32 %v2011, %v2233
    %v2235 = vpop.f32.mrb[0].mxu0
    %2236 = vmatprep.mubr.bf16.mxu0 0
    %2237 = vmatmul.mubr.bf16.gmra.mrb[0].mxu0 %v2064
    %v2238 = vpop.f32.mrb[0].mxu0
    %v2239 = vadd.f32 %v2011, %v2238
    %v2240 = vpop.f32.mrb[0].mxu0
    %v2241 = vpop.f32.mrb[0].mxu0
    %v2242 = vadd.f32 %v2011, %v2241
    %v2243 = vpop.f32.mrb[0].mxu0
    %2244 = vmatprep.mubr.bf16.mxu0 0
    %2245 = vmatmul.mubr.bf16.gmra.mrb[0].mxu0 %v2067
    %v2246 = vpop.f32.mrb[0].mxu0
    %v2247 = vadd.f32 %v2011, %v2246
    %v2248 = vpop.f32.mrb[0].mxu0
    %v2249 = vpop.f32.mrb[0].mxu0
    %v2250 = vadd.f32 %v2011, %v2249
    %v2251 = vpop.f32.mrb[0].mxu0
    %2252 = vmatprep.mubr.bf16.mxu0 0
    %2253 = vmatmul.mubr.bf16.gmra.mrb[0].mxu0 %v2070
    %v2254 = vpop.f32.mrb[0].mxu0
    %v2255 = vadd.f32 %v2011, %v2254
    %v2256 = vpop.f32.mrb[0].mxu0
    %v2257 = vpop.f32.mrb[0].mxu0
    %v2258 = vadd.f32 %v2011, %v2257
    %v2259 = vpop.f32.mrb[0].mxu0
    %2260 = vmatprep.mubr.bf16.mxu0 0
    %2261 = vmatmul.mubr.bf16.gmra.mrb[0].mxu0 %v2073
    %v2262 = vpop.f32.mrb[0].mxu0
    %v2263 = vadd.f32 %v2011, %v2262
    %v2264 = vpop.f32.mrb[0].mxu0
    %v2265 = vpop.f32.mrb[0].mxu0
    %v2266 = vadd.f32 %v2011, %v2265
    %v2267 = vpop.f32.mrb[0].mxu0
    %2268 = vmatprep.mubr.bf16.mxu0 0
    %2269 = vmatmul.mubr.bf16.gmra.mrb[0].mxu0 %v2076
    %v2270 = vpop.f32.mrb[0].mxu0
    %v2271 = vadd.f32 %v2011, %v2270
    %v2272 = vpop.f32.mrb[0].mxu0
    %v2273 = vpop.f32.mrb[0].mxu0
    %v2274 = vadd.f32 %v2011, %v2273
    %v2275 = vpop.f32.mrb[0].mxu0
    %2276 = vmatprep.mubr.bf16.mxu0 0
    %2277 = vmatmul.mubr.bf16.gmra.mrb[0].mxu0 %v2079
    %v2278 = vpop.f32.mrb[0].mxu0
    %v2279 = vadd.f32 %v2011, %v2278
    %v2280 = vpop.f32.mrb[0].mxu0
    %v2281 = vpop.f32.mrb[0].mxu0
    %v2282 = vadd.f32 %v2011, %v2281
    %v2283 = vpop.f32.mrb[0].mxu0
    %2284 = vmatprep.mubr.bf16.mxu0 0
    %2285 = vmatmul.mubr.bf16.gmra.mrb[0].mxu0 %v2082
    %v2286 = vpop.f32.mrb[0].mxu0
    %v2287 = vadd.f32 %v2011, %v2286
    %v2288 = vpop.f32.mrb[0].mxu0
    %v2289 = vpop.f32.mrb[0].mxu0
    %v2290 = vadd.f32 %v2011, %v2289
    %v2291 = vpop.f32.mrb[0].mxu0
    %2292 = vmatprep.mubr.bf16.mxu0 0
    %2293 = vmatmul.mubr.bf16.gmra.mrb[0].mxu0 %v2085
    %v2294 = vpop.f32.mrb[0].mxu0
    %v2295 = vadd.f32 %v2011, %v2294
    %v2296 = vpop.f32.mrb[0].mxu0
    %v2297 = vpop.f32.mrb[0].mxu0
    %v2298 = vadd.f32 %v2011, %v2297
    %v2299 = vpop.f32.mrb[0].mxu0
    %2300 = vmatprep.mubr.bf16.mxu0 0
    %2301 = vmatmul.mubr.bf16.gmra.mrb[0].mxu0 %v2088
    %v2302 = vpop.f32.mrb[0].mxu0
    %v2303 = vadd.f32 %v2011, %v2302
    %v2304 = vpop.f32.mrb[0].mxu0
    %v2305 = vpop.f32.mrb[0].mxu0
    %v2306 = vadd.f32 %v2011, %v2305
    %v2307 = vpop.f32.mrb[0].mxu0
    %2308 = vmatprep.mubr.bf16.mxu0 0
    %2309 = vmatmul.mubr.bf16.gmra.mrb[0].mxu0 %v2091
    %v2310 = vpop.f32.mrb[0].mxu0
    %v2311 = vadd.f32 %v2011, %v2310
    %v2312 = vpop.f32.mrb[0].mxu0
    %v2313 = vpop.f32.mrb[0].mxu0
    %v2314 = vadd.f32 %v2011, %v2313
    %v2315 = vpop.f32.mrb[0].mxu0
    %2316 = vmatprep.mubr.bf16.mxu0 0
    %2317 = vmatmul.mubr.bf16.gmra.mrb[0].mxu0 %v2094
    %v2318 = vpop.f32.mrb[0].mxu0
    %v2319 = vadd.f32 %v2011, %v2318
    %v2320 = vpop.f32.mrb[0].mxu0
    %v2321 = vpop.f32.mrb[0].mxu0
    %v2322 = vadd.f32 %v2011, %v2321
    %v2323 = vpop.f32.mrb[0].mxu0
    %2324 = vmatprep.mubr.bf16.mxu0 0
    %2325 = vmatmul.mubr.bf16.gmra.mrb[0].mxu0 %v2097
    %v2326 = vpop.f32.mrb[0].mxu0
    %v2327 = vadd.f32 %v2011, %v2326
    %v2328 = vpop.f32.mrb[0].mxu0
    %v2329 = vpop.f32.mrb[0].mxu0
    %v2330 = vadd.f32 %v2011, %v2329
    %v2331 = vpop.f32.mrb[0].mxu0
    %2332 = vmatprep.mubr.bf16.mxu0 0
    %2333 = vmatmul.mubr.bf16.gmra.mrb[0].mxu0 %v2100
    %v2334 = vpop.f32.mrb[0].mxu0
    %v2335 = vadd.f32 %v2011, %v2334
    %v2336 = vpop.f32.mrb[0].mxu0
    %v2337 = vpop.f32.mrb[0].mxu0
    %v2338 = vadd.f32 %v2011, %v2337
    %v2339 = vpop.f32.mrb[0].mxu0
    %2340 = vmatprep.mubr.bf16.mxu0 0
    %2341 = vmatmul.mubr.bf16.gmra.mrb[0].mxu0 %v2103
    %v2342 = vpop.f32.mrb[0].mxu0
    %v2343 = vadd.f32 %v2011, %v2342
    %v2344 = vpop.f32.mrb[0].mxu0
    %v2345 = vpop.f32.mrb[0].mxu0
    %v2346 = vadd.f32 %v2011, %v2345
    %v2347 = vpop.f32.mrb[0].mxu0
    %2348 = vmatprep.mubr.bf16.mxu0 0
    %2349 = vmatmul.mubr.bf16.gmra.mrb[0].mxu0 %v2106
    %v2350 = vpop.f32.mrb[0].mxu0
    %v2351 = vadd.f32 %v2011, %v2350
    %v2352 = vpop.f32.mrb[0].mxu0
    %v2353 = vpop.f32.mrb[0].mxu0
    %v2354 = vadd.f32 %v2011, %v2353
    %v2355 = vpop.f32.mrb[0].mxu0
    %2356 = vmatprep.mubr.bf16.mxu0 0
    %2357 = vmatmul.mubr.bf16.gmra.mrb[0].mxu0 %v2109
    %v2358 = vpop.f32.mrb[0].mxu0
    %v2359 = vadd.f32 %v2011, %v2358
    %v2360 = vpop.f32.mrb[0].mxu0
    %v2361 = vpop.f32.mrb[0].mxu0
    %v2362 = vadd.f32 %v2011, %v2361
    %v2363 = vpop.f32.mrb[0].mxu0
    %2364 = vmatprep.mubr.bf16.mxu0 0
    %2365 = vmatmul.mubr.bf16.gmra.mrb[0].mxu0 %v2112
    %v2366 = vpop.f32.mrb[0].mxu0
    %v2367 = vadd.f32 %v2011, %v2366
    %v2368 = vpop.f32.mrb[0].mxu0
    %v2369 = vpop.f32.mrb[0].mxu0
    %v2370 = vadd.f32 %v2011, %v2369
    %v2371 = vpop.f32.mrb[0].mxu0
    %2372 = vmatprep.mubr.bf16.mxu0 0
    %2373 = vmatmul.mubr.bf16.gmra.mrb[0].mxu0 %v2115
    %v2374 = vpop.f32.mrb[0].mxu0
    %v2375 = vadd.f32 %v2011, %v2374
    %v2376 = vpop.f32.mrb[0].mxu0
    %v2377 = vpop.f32.mrb[0].mxu0
    %v2378 = vadd.f32 %v2011, %v2377
    %v2379 = vpop.f32.mrb[0].mxu0
    %2380 = vmatprep.mubr.bf16.mxu0 0
    %2381 = vmatmul.mubr.bf16.gmra.mrb[0].mxu0 %v2118
    %v2382 = vpop.f32.mrb[0].mxu0
    %v2383 = vadd.f32 %v2011, %v2382
    %v2384 = vpop.f32.mrb[0].mxu0
    %v2385 = vpop.f32.mrb[0].mxu0
    %v2386 = vadd.f32 %v2011, %v2385
    %v2387 = vpop.f32.mrb[0].mxu0
    %2388 = vmatprep.mubr.bf16.mxu0 0
    %2389 = vmatmul.mubr.bf16.gmra.mrb[0].mxu0 %v2121
    %v2390 = vpop.f32.mrb[0].mxu0
    %v2391 = vadd.f32 %v2011, %v2390
    %v2392 = vpop.f32.mrb[0].mxu0
    %v2393 = vpop.f32.mrb[0].mxu0
    %v2394 = vadd.f32 %v2011, %v2393
    %v2395 = vpop.f32.mrb[0].mxu0
    %2396 = vmatprep.mubr.bf16.mxu0 0
    %2397 = vmatmul.mubr.bf16.gmra.mrb[0].mxu0 %v2124
    %v2398 = vpop.f32.mrb[0].mxu0
    %v2399 = vadd.f32 %v2011, %v2398
    %v2400 = vpop.f32.mrb[0].mxu0
    %v2401 = vpop.f32.mrb[0].mxu0
    %v2402 = vadd.f32 %v2011, %v2401
    %v2403 = vpop.f32.mrb[0].mxu0
    %2404 = vmatprep.mubr.bf16.mxu0 0
    %2405 = vmatmul.mubr.bf16.gmra.mrb[0].mxu0 %v2127
    %v2406 = vpop.f32.mrb[0].mxu0
    %v2407 = vadd.f32 %v2011, %v2406
    %v2408 = vpop.f32.mrb[0].mxu0
    %v2409 = vpop.f32.mrb[0].mxu0
    %v2410 = vadd.f32 %v2011, %v2409
    %v2411 = vpop.f32.mrb[0].mxu0
    %2412 = vmatprep.mubr.bf16.mxu0 0
    %2413 = vmatmul.mubr.bf16.gmra.mrb[0].mxu0 %v2130
    %v2414 = vpop.f32.mrb[0].mxu0
    %v2415 = vadd.f32 %v2011, %v2414
    %v2416 = vpop.f32.mrb[0].mxu0
    %v2417 = vpop.f32.mrb[0].mxu0
    %v2418 = vadd.f32 %v2011, %v2417
    %v2419 = vpop.f32.mrb[0].mxu0
    %2420 = vdwg.mxu0
    %v2421 = vsel %vm1526, %v2167, 0.0
    %2422 = vadd.xlane.f32.xlu0 %v2421
    %v2423 = vpop.xlane.xlu0 %2422
    %v2424 = vsel %vm1526, %v2170, 0.0
    %2425 = vadd.xlane.f32.xlu0 %v2424
    %v2426 = vpop.xlane.xlu0 %2425
    %v2427 = vsel %vm1526, %v2175, 0.0
    %2428 = vadd.xlane.f32.xlu0 %v2427
    %v2429 = vpop.xlane.xlu0 %2428
    %v2430 = vsel %vm1526, %v2178, 0.0
    %2431 = vadd.xlane.f32.xlu0 %v2430
    %v2432 = vpop.xlane.xlu0 %2431
    %v2433 = vsel %vm1526, %v2183, 0.0
    %2434 = vadd.xlane.f32.xlu0 %v2433
    %v2435 = vpop.xlane.xlu0 %2434
    %v2436 = vsel %vm1526, %v2186, 0.0
    %2437 = vadd.xlane.f32.xlu0 %v2436
    %v2438 = vpop.xlane.xlu0 %2437
    %v2439 = vsel %vm1526, %v2191, 0.0
    %2440 = vadd.xlane.f32.xlu0 %v2439
    %v2441 = vpop.xlane.xlu0 %2440
    %v2442 = vsel %vm1526, %v2194, 0.0
    %2443 = vadd.xlane.f32.xlu0 %v2442
    %v2444 = vpop.xlane.xlu0 %2443
    %v2445 = vsel %vm1526, %v2199, 0.0
    %2446 = vadd.xlane.f32.xlu0 %v2445
    %v2447 = vpop.xlane.xlu0 %2446
    %v2448 = vsel %vm1526, %v2202, 0.0
    %2449 = vadd.xlane.f32.xlu0 %v2448
    %v2450 = vpop.xlane.xlu0 %2449
    %v2451 = vsel %vm1526, %v2207, 0.0
    %2452 = vadd.xlane.f32.xlu0 %v2451
    %v2453 = vpop.xlane.xlu0 %2452
    %v2454 = vsel %vm1526, %v2210, 0.0
    %2455 = vadd.xlane.f32.xlu0 %v2454
    %v2456 = vpop.xlane.xlu0 %2455
    %v2457 = vsel %vm1526, %v2215, 0.0
    %2458 = vadd.xlane.f32.xlu0 %v2457
    %v2459 = vpop.xlane.xlu0 %2458
    %v2460 = vsel %vm1526, %v2218, 0.0
    %2461 = vadd.xlane.f32.xlu0 %v2460
    %v2462 = vpop.xlane.xlu0 %2461
    %v2463 = vsel %vm1526, %v2223, 0.0
    %2464 = vadd.xlane.f32.xlu0 %v2463
    %v2465 = vpop.xlane.xlu0 %2464
    %v2466 = vsel %vm1526, %v2226, 0.0
    %2467 = vadd.xlane.f32.xlu0 %v2466
    %v2468 = vpop.xlane.xlu0 %2467
    %v2469 = vsel %vm1526, %v2231, 0.0
    %2470 = vadd.xlane.f32.xlu0 %v2469
    %v2471 = vpop.xlane.xlu0 %2470
    %v2472 = vsel %vm1526, %v2234, 0.0
    %2473 = vadd.xlane.f32.xlu0 %v2472
    %v2474 = vpop.xlane.xlu0 %2473
    %v2475 = vsel %vm1526, %v2239, 0.0
    %2476 = vadd.xlane.f32.xlu0 %v2475
    %v2477 = vpop.xlane.xlu0 %2476
    %v2478 = vsel %vm1526, %v2242, 0.0
    %2479 = vadd.xlane.f32.xlu0 %v2478
    %v2480 = vpop.xlane.xlu0 %2479
    %v2481 = vsel %vm1526, %v2247, 0.0
    %2482 = vadd.xlane.f32.xlu0 %v2481
    %v2483 = vpop.xlane.xlu0 %2482
    %v2484 = vsel %vm1526, %v2250, 0.0
    %2485 = vadd.xlane.f32.xlu0 %v2484
    %v2486 = vpop.xlane.xlu0 %2485
    %v2487 = vsel %vm1526, %v2255, 0.0
    %2488 = vadd.xlane.f32.xlu0 %v2487
    %v2489 = vpop.xlane.xlu0 %2488
    %v2490 = vsel %vm1526, %v2258, 0.0
    %2491 = vadd.xlane.f32.xlu0 %v2490
    %v2492 = vpop.xlane.xlu0 %2491
    %v2493 = vsel %vm1526, %v2263, 0.0
    %2494 = vadd.xlane.f32.xlu0 %v2493
    %v2495 = vpop.xlane.xlu0 %2494
    %v2496 = vsel %vm1526, %v2266, 0.0
    %2497 = vadd.xlane.f32.xlu0 %v2496
    %v2498 = vpop.xlane.xlu0 %2497
    %v2499 = vsel %vm1526, %v2271, 0.0
    %2500 = vadd.xlane.f32.xlu0 %v2499
    %v2501 = vpop.xlane.xlu0 %2500
    %v2502 = vsel %vm1526, %v2274, 0.0
    %2503 = vadd.xlane.f32.xlu0 %v2502
    %v2504 = vpop.xlane.xlu0 %2503
    %v2505 = vsel %vm1526, %v2279, 0.0
    %2506 = vadd.xlane.f32.xlu0 %v2505
    %v2507 = vpop.xlane.xlu0 %2506
    %v2508 = vsel %vm1526, %v2282, 0.0
    %2509 = vadd.xlane.f32.xlu0 %v2508
    %v2510 = vpop.xlane.xlu0 %2509
    %v2511 = vsel %vm1526, %v2287, 0.0
    %2512 = vadd.xlane.f32.xlu0 %v2511
    %v2513 = vpop.xlane.xlu0 %2512
    %v2514 = vsel %vm1526, %v2290, 0.0
    %2515 = vadd.xlane.f32.xlu0 %v2514
    %v2516 = vpop.xlane.xlu0 %2515
    %v2517 = vsel %vm1526, %v2295, 0.0
    %2518 = vadd.xlane.f32.xlu0 %v2517
    %v2519 = vpop.xlane.xlu0 %2518
    %v2520 = vsel %vm1526, %v2298, 0.0
    %2521 = vadd.xlane.f32.xlu0 %v2520
    %v2522 = vpop.xlane.xlu0 %2521
    %v2523 = vsel %vm1526, %v2303, 0.0
    %2524 = vadd.xlane.f32.xlu0 %v2523
    %v2525 = vpop.xlane.xlu0 %2524
    %v2526 = vsel %vm1526, %v2306, 0.0
    %2527 = vadd.xlane.f32.xlu0 %v2526
    %v2528 = vpop.xlane.xlu0 %2527
    %v2529 = vsel %vm1526, %v2311, 0.0
    %2530 = vadd.xlane.f32.xlu0 %v2529
    %v2531 = vpop.xlane.xlu0 %2530
    %v2532 = vsel %vm1526, %v2314, 0.0
    %2533 = vadd.xlane.f32.xlu0 %v2532
    %v2534 = vpop.xlane.xlu0 %2533
    %v2535 = vsel %vm1526, %v2319, 0.0
    %2536 = vadd.xlane.f32.xlu0 %v2535
    %v2537 = vpop.xlane.xlu0 %2536
    %v2538 = vsel %vm1526, %v2322, 0.0
    %2539 = vadd.xlane.f32.xlu0 %v2538
    %v2540 = vpop.xlane.xlu0 %2539
    %v2541 = vsel %vm1526, %v2327, 0.0
    %2542 = vadd.xlane.f32.xlu0 %v2541
    %v2543 = vpop.xlane.xlu0 %2542
    %v2544 = vsel %vm1526, %v2330, 0.0
    %2545 = vadd.xlane.f32.xlu0 %v2544
    %v2546 = vpop.xlane.xlu0 %2545
    %v2547 = vsel %vm1526, %v2335, 0.0
    %2548 = vadd.xlane.f32.xlu0 %v2547
    %v2549 = vpop.xlane.xlu0 %2548
    %v2550 = vsel %vm1526, %v2338, 0.0
    %2551 = vadd.xlane.f32.xlu0 %v2550
    %v2552 = vpop.xlane.xlu0 %2551
    %v2553 = vsel %vm1526, %v2343, 0.0
    %2554 = vadd.xlane.f32.xlu0 %v2553
    %v2555 = vpop.xlane.xlu0 %2554
    %v2556 = vsel %vm1526, %v2346, 0.0
    %2557 = vadd.xlane.f32.xlu0 %v2556
    %v2558 = vpop.xlane.xlu0 %2557
    %v2559 = vsel %vm1526, %v2351, 0.0
    %2560 = vadd.xlane.f32.xlu0 %v2559
    %v2561 = vpop.xlane.xlu0 %2560
    %v2562 = vsel %vm1526, %v2354, 0.0
    %2563 = vadd.xlane.f32.xlu0 %v2562
    %v2564 = vpop.xlane.xlu0 %2563
    %v2565 = vsel %vm1526, %v2359, 0.0
    %2566 = vadd.xlane.f32.xlu0 %v2565
    %v2567 = vpop.xlane.xlu0 %2566
    %v2568 = vsel %vm1526, %v2362, 0.0
    %2569 = vadd.xlane.f32.xlu0 %v2568
    %v2570 = vpop.xlane.xlu0 %2569
    %v2571 = vsel %vm1526, %v2367, 0.0
    %2572 = vadd.xlane.f32.xlu0 %v2571
    %v2573 = vpop.xlane.xlu0 %2572
    %v2574 = vsel %vm1526, %v2370, 0.0
    %2575 = vadd.xlane.f32.xlu0 %v2574
    %v2576 = vpop.xlane.xlu0 %2575
    %v2577 = vsel %vm1526, %v2375, 0.0
    %2578 = vadd.xlane.f32.xlu0 %v2577
    %v2579 = vpop.xlane.xlu0 %2578
    %v2580 = vsel %vm1526, %v2378, 0.0
    %2581 = vadd.xlane.f32.xlu0 %v2580
    %v2582 = vpop.xlane.xlu0 %2581
    %v2583 = vsel %vm1526, %v2383, 0.0
    %2584 = vadd.xlane.f32.xlu0 %v2583
    %v2585 = vpop.xlane.xlu0 %2584
    %v2586 = vsel %vm1526, %v2386, 0.0
    %2587 = vadd.xlane.f32.xlu0 %v2586
    %v2588 = vpop.xlane.xlu0 %2587
    %v2589 = vsel %vm1526, %v2391, 0.0
    %2590 = vadd.xlane.f32.xlu0 %v2589
    %v2591 = vpop.xlane.xlu0 %2590
    %v2592 = vsel %vm1526, %v2394, 0.0
    %2593 = vadd.xlane.f32.xlu0 %v2592
    %v2594 = vpop.xlane.xlu0 %2593
    %v2595 = vsel %vm1526, %v2399, 0.0
    %2596 = vadd.xlane.f32.xlu0 %v2595
    %v2597 = vpop.xlane.xlu0 %2596
    %v2598 = vsel %vm1526, %v2402, 0.0
    %2599 = vadd.xlane.f32.xlu0 %v2598
    %v2600 = vpop.xlane.xlu0 %2599
    %v2601 = vsel %vm1526, %v2407, 0.0
    %2602 = vadd.xlane.f32.xlu0 %v2601
    %v2603 = vpop.xlane.xlu0 %2602
    %v2604 = vsel %vm1526, %v2410, 0.0
    %2605 = vadd.xlane.f32.xlu0 %v2604
    %v2606 = vpop.xlane.xlu0 %2605
    %v2607 = vsel %vm1526, %v2415, 0.0
    %2608 = vadd.xlane.f32.xlu0 %v2607
    %v2609 = vpop.xlane.xlu0 %2608
    %v2610 = vsel %vm1526, %v2418, 0.0
    %2611 = vadd.xlane.f32.xlu0 %v2610
    %v2612 = vpop.xlane.xlu0 %2611
    %v2613 = vrcp.pop 64.0
    %v2614 = vmul.f32 %v2423, %v2613
    %v2615 = vmul.f32 %v2426, %v2613
    %v2616 = vmul.f32 %v2429, %v2613
    %v2617 = vmul.f32 %v2432, %v2613
    %v2618 = vmul.f32 %v2435, %v2613
    %v2619 = vmul.f32 %v2438, %v2613
    %v2620 = vmul.f32 %v2441, %v2613
    %v2621 = vmul.f32 %v2444, %v2613
    %v2622 = vmul.f32 %v2447, %v2613
    %v2623 = vmul.f32 %v2450, %v2613
    %v2624 = vmul.f32 %v2453, %v2613
    %v2625 = vmul.f32 %v2456, %v2613
    %v2626 = vmul.f32 %v2459, %v2613
    %v2627 = vmul.f32 %v2462, %v2613
    %v2628 = vmul.f32 %v2465, %v2613
    %v2629 = vmul.f32 %v2468, %v2613
    %v2630 = vmul.f32 %v2471, %v2613
    %v2631 = vmul.f32 %v2474, %v2613
    %v2632 = vmul.f32 %v2477, %v2613
    %v2633 = vmul.f32 %v2480, %v2613
    %v2634 = vmul.f32 %v2483, %v2613
    %v2635 = vmul.f32 %v2486, %v2613
    %v2636 = vmul.f32 %v2489, %v2613
    %v2637 = vmul.f32 %v2492, %v2613
    %v2638 = vmul.f32 %v2495, %v2613
    %v2639 = vmul.f32 %v2498, %v2613
    %v2640 = vmul.f32 %v2501, %v2613
    %v2641 = vmul.f32 %v2504, %v2613
    %v2642 = vmul.f32 %v2507, %v2613
    %v2643 = vmul.f32 %v2510, %v2613
    %v2644 = vmul.f32 %v2513, %v2613
    %v2645 = vmul.f32 %v2516, %v2613
    %v2646 = vmul.f32 %v2519, %v2613
    %v2647 = vmul.f32 %v2522, %v2613
    %v2648 = vmul.f32 %v2525, %v2613
    %v2649 = vmul.f32 %v2528, %v2613
    %v2650 = vmul.f32 %v2531, %v2613
    %v2651 = vmul.f32 %v2534, %v2613
    %v2652 = vmul.f32 %v2537, %v2613
    %v2653 = vmul.f32 %v2540, %v2613
    %v2654 = vmul.f32 %v2543, %v2613
    %v2655 = vmul.f32 %v2546, %v2613
    %v2656 = vmul.f32 %v2549, %v2613
    %v2657 = vmul.f32 %v2552, %v2613
    %v2658 = vmul.f32 %v2555, %v2613
    %v2659 = vmul.f32 %v2558, %v2613
    %v2660 = vmul.f32 %v2561, %v2613
    %v2661 = vmul.f32 %v2564, %v2613
    %v2662 = vmul.f32 %v2567, %v2613
    %v2663 = vmul.f32 %v2570, %v2613
    %v2664 = vmul.f32 %v2573, %v2613
    %v2665 = vmul.f32 %v2576, %v2613
    %v2666 = vmul.f32 %v2579, %v2613
    %v2667 = vmul.f32 %v2582, %v2613
    %v2668 = vmul.f32 %v2585, %v2613
    %v2669 = vmul.f32 %v2588, %v2613
    %v2670 = vmul.f32 %v2591, %v2613
    %v2671 = vmul.f32 %v2594, %v2613
    %v2672 = vmul.f32 %v2597, %v2613
    %v2673 = vmul.f32 %v2600, %v2613
    %v2674 = vmul.f32 %v2603, %v2613
    %v2675 = vmul.f32 %v2606, %v2613
    %v2676 = vmul.f32 %v2609, %v2613
    %v2677 = vmul.f32 %v2612, %v2613
    %v2678 = vmul.f32 %v2167, %v2167
    %v2679 = vmul.f32 %v2170, %v2170
    %v2680 = vmul.f32 %v2175, %v2175
    %v2681 = vmul.f32 %v2178, %v2178
    %v2682 = vmul.f32 %v2183, %v2183
    %v2683 = vmul.f32 %v2186, %v2186
    %v2684 = vmul.f32 %v2191, %v2191
    %v2685 = vmul.f32 %v2194, %v2194
    %v2686 = vmul.f32 %v2199, %v2199
    %v2687 = vmul.f32 %v2202, %v2202
    %v2688 = vmul.f32 %v2207, %v2207
    %v2689 = vmul.f32 %v2210, %v2210
    %v2690 = vmul.f32 %v2215, %v2215
    %v2691 = vmul.f32 %v2218, %v2218
    %v2692 = vmul.f32 %v2223, %v2223
    %v2693 = vmul.f32 %v2226, %v2226
    %v2694 = vmul.f32 %v2231, %v2231
    %v2695 = vmul.f32 %v2234, %v2234
    %v2696 = vmul.f32 %v2239, %v2239
    %v2697 = vmul.f32 %v2242, %v2242
    %v2698 = vmul.f32 %v2247, %v2247
    %v2699 = vmul.f32 %v2250, %v2250
    %v2700 = vmul.f32 %v2255, %v2255
    %v2701 = vmul.f32 %v2258, %v2258
    %v2702 = vmul.f32 %v2263, %v2263
    %v2703 = vmul.f32 %v2266, %v2266
    %v2704 = vmul.f32 %v2271, %v2271
    %v2705 = vmul.f32 %v2274, %v2274
    %v2706 = vmul.f32 %v2279, %v2279
    %v2707 = vmul.f32 %v2282, %v2282
    %v2708 = vmul.f32 %v2287, %v2287
    %v2709 = vmul.f32 %v2290, %v2290
    %v2710 = vmul.f32 %v2295, %v2295
    %v2711 = vmul.f32 %v2298, %v2298
    %v2712 = vmul.f32 %v2303, %v2303
    %v2713 = vmul.f32 %v2306, %v2306
    %v2714 = vmul.f32 %v2311, %v2311
    %v2715 = vmul.f32 %v2314, %v2314
    %v2716 = vmul.f32 %v2319, %v2319
    %v2717 = vmul.f32 %v2322, %v2322
    %v2718 = vmul.f32 %v2327, %v2327
    %v2719 = vmul.f32 %v2330, %v2330
    %v2720 = vmul.f32 %v2335, %v2335
    %v2721 = vmul.f32 %v2338, %v2338
    %v2722 = vmul.f32 %v2343, %v2343
    %v2723 = vmul.f32 %v2346, %v2346
    %v2724 = vmul.f32 %v2351, %v2351
    %v2725 = vmul.f32 %v2354, %v2354
    %v2726 = vmul.f32 %v2359, %v2359
    %v2727 = vmul.f32 %v2362, %v2362
    %v2728 = vmul.f32 %v2367, %v2367
    %v2729 = vmul.f32 %v2370, %v2370
    %v2730 = vmul.f32 %v2375, %v2375
    %v2731 = vmul.f32 %v2378, %v2378
    %v2732 = vmul.f32 %v2383, %v2383
    %v2733 = vmul.f32 %v2386, %v2386
    %v2734 = vmul.f32 %v2391, %v2391
    %v2735 = vmul.f32 %v2394, %v2394
    %v2736 = vmul.f32 %v2399, %v2399
    %v2737 = vmul.f32 %v2402, %v2402
    %v2738 = vmul.f32 %v2407, %v2407
    %v2739 = vmul.f32 %v2410, %v2410
    %v2740 = vmul.f32 %v2415, %v2415
    %v2741 = vmul.f32 %v2418, %v2418
    %v2742 = vsel %vm1526, %v2678, 0.0
    %2743 = vadd.xlane.f32.xlu0 %v2742
    %v2744 = vpop.xlane.xlu0 %2743
    %v2745 = vsel %vm1526, %v2679, 0.0
    %2746 = vadd.xlane.f32.xlu0 %v2745
    %v2747 = vpop.xlane.xlu0 %2746
    %v2748 = vsel %vm1526, %v2680, 0.0
    %2749 = vadd.xlane.f32.xlu0 %v2748
    %v2750 = vpop.xlane.xlu0 %2749
    %v2751 = vsel %vm1526, %v2681, 0.0
    %2752 = vadd.xlane.f32.xlu0 %v2751
    %v2753 = vpop.xlane.xlu0 %2752
    %v2754 = vsel %vm1526, %v2682, 0.0
    %2755 = vadd.xlane.f32.xlu0 %v2754
    %v2756 = vpop.xlane.xlu0 %2755
    %v2757 = vsel %vm1526, %v2683, 0.0
    %2758 = vadd.xlane.f32.xlu0 %v2757
    %v2759 = vpop.xlane.xlu0 %2758
    %v2760 = vsel %vm1526, %v2684, 0.0
    %2761 = vadd.xlane.f32.xlu0 %v2760
    %v2762 = vpop.xlane.xlu0 %2761
    %v2763 = vsel %vm1526, %v2685, 0.0
    %2764 = vadd.xlane.f32.xlu0 %v2763
    %v2765 = vpop.xlane.xlu0 %2764
    %v2766 = vsel %vm1526, %v2686, 0.0
    %2767 = vadd.xlane.f32.xlu0 %v2766
    %v2768 = vpop.xlane.xlu0 %2767
    %v2769 = vsel %vm1526, %v2687, 0.0
    %2770 = vadd.xlane.f32.xlu0 %v2769
    %v2771 = vpop.xlane.xlu0 %2770
    %v2772 = vsel %vm1526, %v2688, 0.0
    %2773 = vadd.xlane.f32.xlu0 %v2772
    %v2774 = vpop.xlane.xlu0 %2773
    %v2775 = vsel %vm1526, %v2689, 0.0
    %2776 = vadd.xlane.f32.xlu0 %v2775
    %v2777 = vpop.xlane.xlu0 %2776
    %v2778 = vsel %vm1526, %v2690, 0.0
    %2779 = vadd.xlane.f32.xlu0 %v2778
    %v2780 = vpop.xlane.xlu0 %2779
    %v2781 = vsel %vm1526, %v2691, 0.0
    %2782 = vadd.xlane.f32.xlu0 %v2781
    %v2783 = vpop.xlane.xlu0 %2782
    %v2784 = vsel %vm1526, %v2692, 0.0
    %2785 = vadd.xlane.f32.xlu0 %v2784
    %v2786 = vpop.xlane.xlu0 %2785
    %v2787 = vsel %vm1526, %v2693, 0.0
    %2788 = vadd.xlane.f32.xlu0 %v2787
    %v2789 = vpop.xlane.xlu0 %2788
    %v2790 = vsel %vm1526, %v2694, 0.0
    %2791 = vadd.xlane.f32.xlu0 %v2790
    %v2792 = vpop.xlane.xlu0 %2791
    %v2793 = vsel %vm1526, %v2695, 0.0
    %2794 = vadd.xlane.f32.xlu0 %v2793
    %v2795 = vpop.xlane.xlu0 %2794
    %v2796 = vsel %vm1526, %v2696, 0.0
    %2797 = vadd.xlane.f32.xlu0 %v2796
    %v2798 = vpop.xlane.xlu0 %2797
    %v2799 = vsel %vm1526, %v2697, 0.0
    %2800 = vadd.xlane.f32.xlu0 %v2799
    %v2801 = vpop.xlane.xlu0 %2800
    %v2802 = vsel %vm1526, %v2698, 0.0
    %2803 = vadd.xlane.f32.xlu0 %v2802
    %v2804 = vpop.xlane.xlu0 %2803
    %v2805 = vsel %vm1526, %v2699, 0.0
    %2806 = vadd.xlane.f32.xlu0 %v2805
    %v2807 = vpop.xlane.xlu0 %2806
    %v2808 = vsel %vm1526, %v2700, 0.0
    %2809 = vadd.xlane.f32.xlu0 %v2808
    %v2810 = vpop.xlane.xlu0 %2809
    %v2811 = vsel %vm1526, %v2701, 0.0
    %2812 = vadd.xlane.f32.xlu0 %v2811
    %v2813 = vpop.xlane.xlu0 %2812
    %v2814 = vsel %vm1526, %v2702, 0.0
    %2815 = vadd.xlane.f32.xlu0 %v2814
    %v2816 = vpop.xlane.xlu0 %2815
    %v2817 = vsel %vm1526, %v2703, 0.0
    %2818 = vadd.xlane.f32.xlu0 %v2817
    %v2819 = vpop.xlane.xlu0 %2818
    %v2820 = vsel %vm1526, %v2704, 0.0
    %2821 = vadd.xlane.f32.xlu0 %v2820
    %v2822 = vpop.xlane.xlu0 %2821
    %v2823 = vsel %vm1526, %v2705, 0.0
    %2824 = vadd.xlane.f32.xlu0 %v2823
    %v2825 = vpop.xlane.xlu0 %2824
    %v2826 = vsel %vm1526, %v2706, 0.0
    %2827 = vadd.xlane.f32.xlu0 %v2826
    %v2828 = vpop.xlane.xlu0 %2827
    %v2829 = vsel %vm1526, %v2707, 0.0
    %2830 = vadd.xlane.f32.xlu0 %v2829
    %v2831 = vpop.xlane.xlu0 %2830
    %v2832 = vsel %vm1526, %v2708, 0.0
    %2833 = vadd.xlane.f32.xlu0 %v2832
    %v2834 = vpop.xlane.xlu0 %2833
    %v2835 = vsel %vm1526, %v2709, 0.0
    %2836 = vadd.xlane.f32.xlu0 %v2835
    %v2837 = vpop.xlane.xlu0 %2836
    %v2838 = vsel %vm1526, %v2710, 0.0
    %2839 = vadd.xlane.f32.xlu0 %v2838
    %v2840 = vpop.xlane.xlu0 %2839
    %v2841 = vsel %vm1526, %v2711, 0.0
    %2842 = vadd.xlane.f32.xlu0 %v2841
    %v2843 = vpop.xlane.xlu0 %2842
    %v2844 = vsel %vm1526, %v2712, 0.0
    %2845 = vadd.xlane.f32.xlu0 %v2844
    %v2846 = vpop.xlane.xlu0 %2845
    %v2847 = vsel %vm1526, %v2713, 0.0
    %2848 = vadd.xlane.f32.xlu0 %v2847
    %v2849 = vpop.xlane.xlu0 %2848
    %v2850 = vsel %vm1526, %v2714, 0.0
    %2851 = vadd.xlane.f32.xlu0 %v2850
    %v2852 = vpop.xlane.xlu0 %2851
    %v2853 = vsel %vm1526, %v2715, 0.0
    %2854 = vadd.xlane.f32.xlu0 %v2853
    %v2855 = vpop.xlane.xlu0 %2854
    %v2856 = vsel %vm1526, %v2716, 0.0
    %2857 = vadd.xlane.f32.xlu0 %v2856
    %v2858 = vpop.xlane.xlu0 %2857
    %v2859 = vsel %vm1526, %v2717, 0.0
    %2860 = vadd.xlane.f32.xlu0 %v2859
    %v2861 = vpop.xlane.xlu0 %2860
    %v2862 = vsel %vm1526, %v2718, 0.0
    %2863 = vadd.xlane.f32.xlu0 %v2862
    %v2864 = vpop.xlane.xlu0 %2863
    %v2865 = vsel %vm1526, %v2719, 0.0
    %2866 = vadd.xlane.f32.xlu0 %v2865
    %v2867 = vpop.xlane.xlu0 %2866
    %v2868 = vsel %vm1526, %v2720, 0.0
    %2869 = vadd.xlane.f32.xlu0 %v2868
    %v2870 = vpop.xlane.xlu0 %2869
    %v2871 = vsel %vm1526, %v2721, 0.0
    %2872 = vadd.xlane.f32.xlu0 %v2871
    %v2873 = vpop.xlane.xlu0 %2872
    %v2874 = vsel %vm1526, %v2722, 0.0
    %2875 = vadd.xlane.f32.xlu0 %v2874
    %v2876 = vpop.xlane.xlu0 %2875
    %v2877 = vsel %vm1526, %v2723, 0.0
    %2878 = vadd.xlane.f32.xlu0 %v2877
    %v2879 = vpop.xlane.xlu0 %2878
    %v2880 = vsel %vm1526, %v2724, 0.0
    %2881 = vadd.xlane.f32.xlu0 %v2880
    %v2882 = vpop.xlane.xlu0 %2881
    %v2883 = vsel %vm1526, %v2725, 0.0
    %2884 = vadd.xlane.f32.xlu0 %v2883
    %v2885 = vpop.xlane.xlu0 %2884
    %v2886 = vsel %vm1526, %v2726, 0.0
    %2887 = vadd.xlane.f32.xlu0 %v2886
    %v2888 = vpop.xlane.xlu0 %2887
    %v2889 = vsel %vm1526, %v2727, 0.0
    %2890 = vadd.xlane.f32.xlu0 %v2889
    %v2891 = vpop.xlane.xlu0 %2890
    %v2892 = vsel %vm1526, %v2728, 0.0
    %2893 = vadd.xlane.f32.xlu0 %v2892
    %v2894 = vpop.xlane.xlu0 %2893
    %v2895 = vsel %vm1526, %v2729, 0.0
    %2896 = vadd.xlane.f32.xlu0 %v2895
    %v2897 = vpop.xlane.xlu0 %2896
    %v2898 = vsel %vm1526, %v2730, 0.0
    %2899 = vadd.xlane.f32.xlu0 %v2898
    %v2900 = vpop.xlane.xlu0 %2899
    %v2901 = vsel %vm1526, %v2731, 0.0
    %2902 = vadd.xlane.f32.xlu0 %v2901
    %v2903 = vpop.xlane.xlu0 %2902
    %v2904 = vsel %vm1526, %v2732, 0.0
    %2905 = vadd.xlane.f32.xlu0 %v2904
    %v2906 = vpop.xlane.xlu0 %2905
    %v2907 = vsel %vm1526, %v2733, 0.0
    %2908 = vadd.xlane.f32.xlu0 %v2907
    %v2909 = vpop.xlane.xlu0 %2908
    %v2910 = vsel %vm1526, %v2734, 0.0
    %2911 = vadd.xlane.f32.xlu0 %v2910
    %v2912 = vpop.xlane.xlu0 %2911
    %v2913 = vsel %vm1526, %v2735, 0.0
    %2914 = vadd.xlane.f32.xlu0 %v2913
    %v2915 = vpop.xlane.xlu0 %2914
    %v2916 = vsel %vm1526, %v2736, 0.0
    %2917 = vadd.xlane.f32.xlu0 %v2916
    %v2918 = vpop.xlane.xlu0 %2917
    %v2919 = vsel %vm1526, %v2737, 0.0
    %2920 = vadd.xlane.f32.xlu0 %v2919
    %v2921 = vpop.xlane.xlu0 %2920
    %v2922 = vsel %vm1526, %v2738, 0.0
    %2923 = vadd.xlane.f32.xlu0 %v2922
    %v2924 = vpop.xlane.xlu0 %2923
    %v2925 = vsel %vm1526, %v2739, 0.0
    %2926 = vadd.xlane.f32.xlu0 %v2925
    %v2927 = vpop.xlane.xlu0 %2926
    %v2928 = vsel %vm1526, %v2740, 0.0
    %2929 = vadd.xlane.f32.xlu0 %v2928
    %v2930 = vpop.xlane.xlu0 %2929
    %v2931 = vsel %vm1526, %v2741, 0.0
    %2932 = vadd.xlane.f32.xlu0 %v2931
    %v2933 = vpop.xlane.xlu0 %2932
    %v2934 = vmul.f32 %v2744, %v2613
    %v2935 = vmul.f32 %v2747, %v2613
    %v2936 = vmul.f32 %v2750, %v2613
    %v2937 = vmul.f32 %v2753, %v2613
    %v2938 = vmul.f32 %v2756, %v2613
    %v2939 = vmul.f32 %v2759, %v2613
    %v2940 = vmul.f32 %v2762, %v2613
    %v2941 = vmul.f32 %v2765, %v2613
    %v2942 = vmul.f32 %v2768, %v2613
    %v2943 = vmul.f32 %v2771, %v2613
    %v2944 = vmul.f32 %v2774, %v2613
    %v2945 = vmul.f32 %v2777, %v2613
    %v2946 = vmul.f32 %v2780, %v2613
    %v2947 = vmul.f32 %v2783, %v2613
    %v2948 = vmul.f32 %v2786, %v2613
    %v2949 = vmul.f32 %v2789, %v2613
    %v2950 = vmul.f32 %v2792, %v2613
    %v2951 = vmul.f32 %v2795, %v2613
    %v2952 = vmul.f32 %v2798, %v2613
    %v2953 = vmul.f32 %v2801, %v2613
    %v2954 = vmul.f32 %v2804, %v2613
    %v2955 = vmul.f32 %v2807, %v2613
    %v2956 = vmul.f32 %v2810, %v2613
    %v2957 = vmul.f32 %v2813, %v2613
    %v2958 = vmul.f32 %v2816, %v2613
    %v2959 = vmul.f32 %v2819, %v2613
    %v2960 = vmul.f32 %v2822, %v2613
    %v2961 = vmul.f32 %v2825, %v2613
    %v2962 = vmul.f32 %v2828, %v2613
    %v2963 = vmul.f32 %v2831, %v2613
    %v2964 = vmul.f32 %v2834, %v2613
    %v2965 = vmul.f32 %v2837, %v2613
    %v2966 = vmul.f32 %v2840, %v2613
    %v2967 = vmul.f32 %v2843, %v2613
    %v2968 = vmul.f32 %v2846, %v2613
    %v2969 = vmul.f32 %v2849, %v2613
    %v2970 = vmul.f32 %v2852, %v2613
    %v2971 = vmul.f32 %v2855, %v2613
    %v2972 = vmul.f32 %v2858, %v2613
    %v2973 = vmul.f32 %v2861, %v2613
    %v2974 = vmul.f32 %v2864, %v2613
    %v2975 = vmul.f32 %v2867, %v2613
    %v2976 = vmul.f32 %v2870, %v2613
    %v2977 = vmul.f32 %v2873, %v2613
    %v2978 = vmul.f32 %v2876, %v2613
    %v2979 = vmul.f32 %v2879, %v2613
    %v2980 = vmul.f32 %v2882, %v2613
    %v2981 = vmul.f32 %v2885, %v2613
    %v2982 = vmul.f32 %v2888, %v2613
    %v2983 = vmul.f32 %v2891, %v2613
    %v2984 = vmul.f32 %v2894, %v2613
    %v2985 = vmul.f32 %v2897, %v2613
    %v2986 = vmul.f32 %v2900, %v2613
    %v2987 = vmul.f32 %v2903, %v2613
    %v2988 = vmul.f32 %v2906, %v2613
    %v2989 = vmul.f32 %v2909, %v2613
    %v2990 = vmul.f32 %v2912, %v2613
    %v2991 = vmul.f32 %v2915, %v2613
    %v2992 = vmul.f32 %v2918, %v2613
    %v2993 = vmul.f32 %v2921, %v2613
    %v2994 = vmul.f32 %v2924, %v2613
    %v2995 = vmul.f32 %v2927, %v2613
    %v2996 = vmul.f32 %v2930, %v2613
    %v2997 = vmul.f32 %v2933, %v2613
    %v2998 = vsub.f32 %v2167, %v2614
    %v2999 = vsub.f32 %v2170, %v2615
    %v3000 = vsub.f32 %v2175, %v2616
    %v3001 = vsub.f32 %v2178, %v2617
    %v3002 = vsub.f32 %v2183, %v2618
    %v3003 = vsub.f32 %v2186, %v2619
    %v3004 = vsub.f32 %v2191, %v2620
    %v3005 = vsub.f32 %v2194, %v2621
    %v3006 = vsub.f32 %v2199, %v2622
    %v3007 = vsub.f32 %v2202, %v2623
    %v3008 = vsub.f32 %v2207, %v2624
    %v3009 = vsub.f32 %v2210, %v2625
    %v3010 = vsub.f32 %v2215, %v2626
    %v3011 = vsub.f32 %v2218, %v2627
    %v3012 = vsub.f32 %v2223, %v2628
    %v3013 = vsub.f32 %v2226, %v2629
    %v3014 = vsub.f32 %v2231, %v2630
    %v3015 = vsub.f32 %v2234, %v2631
    %v3016 = vsub.f32 %v2239, %v2632
    %v3017 = vsub.f32 %v2242, %v2633
    %v3018 = vsub.f32 %v2247, %v2634
    %v3019 = vsub.f32 %v2250, %v2635
    %v3020 = vsub.f32 %v2255, %v2636
    %v3021 = vsub.f32 %v2258, %v2637
    %v3022 = vsub.f32 %v2263, %v2638
    %v3023 = vsub.f32 %v2266, %v2639
    %v3024 = vsub.f32 %v2271, %v2640
    %v3025 = vsub.f32 %v2274, %v2641
    %v3026 = vsub.f32 %v2279, %v2642
    %v3027 = vsub.f32 %v2282, %v2643
    %v3028 = vsub.f32 %v2287, %v2644
    %v3029 = vsub.f32 %v2290, %v2645
    %v3030 = vsub.f32 %v2295, %v2646
    %v3031 = vsub.f32 %v2298, %v2647
    %v3032 = vsub.f32 %v2303, %v2648
    %v3033 = vsub.f32 %v2306, %v2649
    %v3034 = vsub.f32 %v2311, %v2650
    %v3035 = vsub.f32 %v2314, %v2651
    %v3036 = vsub.f32 %v2319, %v2652
    %v3037 = vsub.f32 %v2322, %v2653
    %v3038 = vsub.f32 %v2327, %v2654
    %v3039 = vsub.f32 %v2330, %v2655
    %v3040 = vsub.f32 %v2335, %v2656
    %v3041 = vsub.f32 %v2338, %v2657
    %v3042 = vsub.f32 %v2343, %v2658
    %v3043 = vsub.f32 %v2346, %v2659
    %v3044 = vsub.f32 %v2351, %v2660
    %v3045 = vsub.f32 %v2354, %v2661
    %v3046 = vsub.f32 %v2359, %v2662
    %v3047 = vsub.f32 %v2362, %v2663
    %v3048 = vsub.f32 %v2367, %v2664
    %v3049 = vsub.f32 %v2370, %v2665
    %v3050 = vsub.f32 %v2375, %v2666
    %v3051 = vsub.f32 %v2378, %v2667
    %v3052 = vsub.f32 %v2383, %v2668
    %v3053 = vsub.f32 %v2386, %v2669
    %v3054 = vsub.f32 %v2391, %v2670
    %v3055 = vsub.f32 %v2394, %v2671
    %v3056 = vsub.f32 %v2399, %v2672
    %v3057 = vsub.f32 %v2402, %v2673
    %v3058 = vsub.f32 %v2407, %v2674
    %v3059 = vsub.f32 %v2410, %v2675
    %v3060 = vsub.f32 %v2415, %v2676
    %v3061 = vsub.f32 %v2418, %v2677
    %v3062 = vmul.f32 %v2614, %v2614
    %v3063 = vmul.f32 %v2615, %v2615
    %v3064 = vmul.f32 %v2616, %v2616
    %v3065 = vmul.f32 %v2617, %v2617
    %v3066 = vmul.f32 %v2618, %v2618
    %v3067 = vmul.f32 %v2619, %v2619
    %v3068 = vmul.f32 %v2620, %v2620
    %v3069 = vmul.f32 %v2621, %v2621
    %v3070 = vmul.f32 %v2622, %v2622
    %v3071 = vmul.f32 %v2623, %v2623
    %v3072 = vmul.f32 %v2624, %v2624
    %v3073 = vmul.f32 %v2625, %v2625
    %v3074 = vmul.f32 %v2626, %v2626
    %v3075 = vmul.f32 %v2627, %v2627
    %v3076 = vmul.f32 %v2628, %v2628
    %v3077 = vmul.f32 %v2629, %v2629
    %v3078 = vmul.f32 %v2630, %v2630
    %v3079 = vmul.f32 %v2631, %v2631
    %v3080 = vmul.f32 %v2632, %v2632
    %v3081 = vmul.f32 %v2633, %v2633
    %v3082 = vmul.f32 %v2634, %v2634
    %v3083 = vmul.f32 %v2635, %v2635
    %v3084 = vmul.f32 %v2636, %v2636
    %v3085 = vmul.f32 %v2637, %v2637
    %v3086 = vmul.f32 %v2638, %v2638
    %v3087 = vmul.f32 %v2639, %v2639
    %v3088 = vmul.f32 %v2640, %v2640
    %v3089 = vmul.f32 %v2641, %v2641
    %v3090 = vmul.f32 %v2642, %v2642
    %v3091 = vmul.f32 %v2643, %v2643
    %v3092 = vmul.f32 %v2644, %v2644
    %v3093 = vmul.f32 %v2645, %v2645
    %v3094 = vmul.f32 %v2646, %v2646
    %v3095 = vmul.f32 %v2647, %v2647
    %v3096 = vmul.f32 %v2648, %v2648
    %v3097 = vmul.f32 %v2649, %v2649
    %v3098 = vmul.f32 %v2650, %v2650
    %v3099 = vmul.f32 %v2651, %v2651
    %v3100 = vmul.f32 %v2652, %v2652
    %v3101 = vmul.f32 %v2653, %v2653
    %v3102 = vmul.f32 %v2654, %v2654
    %v3103 = vmul.f32 %v2655, %v2655
    %v3104 = vmul.f32 %v2656, %v2656
    %v3105 = vmul.f32 %v2657, %v2657
    %v3106 = vmul.f32 %v2658, %v2658
    %v3107 = vmul.f32 %v2659, %v2659
    %v3108 = vmul.f32 %v2660, %v2660
    %v3109 = vmul.f32 %v2661, %v2661
    %v3110 = vmul.f32 %v2662, %v2662
    %v3111 = vmul.f32 %v2663, %v2663
    %v3112 = vmul.f32 %v2664, %v2664
    %v3113 = vmul.f32 %v2665, %v2665
    %v3114 = vmul.f32 %v2666, %v2666
    %v3115 = vmul.f32 %v2667, %v2667
    %v3116 = vmul.f32 %v2668, %v2668
    %v3117 = vmul.f32 %v2669, %v2669
    %v3118 = vmul.f32 %v2670, %v2670
    %v3119 = vmul.f32 %v2671, %v2671
    %v3120 = vmul.f32 %v2672, %v2672
    %v3121 = vmul.f32 %v2673, %v2673
    %v3122 = vmul.f32 %v2674, %v2674
    %v3123 = vmul.f32 %v2675, %v2675
    %v3124 = vmul.f32 %v2676, %v2676
    %v3125 = vmul.f32 %v2677, %v2677
    %v3126 = vsub.f32 %v2934, %v3062
    %v3127 = vsub.f32 %v2935, %v3063
    %v3128 = vsub.f32 %v2936, %v3064
    %v3129 = vsub.f32 %v2937, %v3065
    %v3130 = vsub.f32 %v2938, %v3066
    %v3131 = vsub.f32 %v2939, %v3067
    %v3132 = vsub.f32 %v2940, %v3068
    %v3133 = vsub.f32 %v2941, %v3069
    %v3134 = vsub.f32 %v2942, %v3070
    %v3135 = vsub.f32 %v2943, %v3071
    %v3136 = vsub.f32 %v2944, %v3072
    %v3137 = vsub.f32 %v2945, %v3073
    %v3138 = vsub.f32 %v2946, %v3074
    %v3139 = vsub.f32 %v2947, %v3075
    %v3140 = vsub.f32 %v2948, %v3076
    %v3141 = vsub.f32 %v2949, %v3077
    %v3142 = vsub.f32 %v2950, %v3078
    %v3143 = vsub.f32 %v2951, %v3079
    %v3144 = vsub.f32 %v2952, %v3080
    %v3145 = vsub.f32 %v2953, %v3081
    %v3146 = vsub.f32 %v2954, %v3082
    %v3147 = vsub.f32 %v2955, %v3083
    %v3148 = vsub.f32 %v2956, %v3084
    %v3149 = vsub.f32 %v2957, %v3085
    %v3150 = vsub.f32 %v2958, %v3086
    %v3151 = vsub.f32 %v2959, %v3087
    %v3152 = vsub.f32 %v2960, %v3088
    %v3153 = vsub.f32 %v2961, %v3089
    %v3154 = vsub.f32 %v2962, %v3090
    %v3155 = vsub.f32 %v2963, %v3091
    %v3156 = vsub.f32 %v2964, %v3092
    %v3157 = vsub.f32 %v2965, %v3093
    %v3158 = vsub.f32 %v2966, %v3094
    %v3159 = vsub.f32 %v2967, %v3095
    %v3160 = vsub.f32 %v2968, %v3096
    %v3161 = vsub.f32 %v2969, %v3097
    %v3162 = vsub.f32 %v2970, %v3098
    %v3163 = vsub.f32 %v2971, %v3099
    %v3164 = vsub.f32 %v2972, %v3100
    %v3165 = vsub.f32 %v2973, %v3101
    %v3166 = vsub.f32 %v2974, %v3102
    %v3167 = vsub.f32 %v2975, %v3103
    %v3168 = vsub.f32 %v2976, %v3104
    %v3169 = vsub.f32 %v2977, %v3105
    %v3170 = vsub.f32 %v2978, %v3106
    %v3171 = vsub.f32 %v2979, %v3107
    %v3172 = vsub.f32 %v2980, %v3108
    %v3173 = vsub.f32 %v2981, %v3109
    %v3174 = vsub.f32 %v2982, %v3110
    %v3175 = vsub.f32 %v2983, %v3111
    %v3176 = vsub.f32 %v2984, %v3112
    %v3177 = vsub.f32 %v2985, %v3113
    %v3178 = vsub.f32 %v2986, %v3114
    %v3179 = vsub.f32 %v2987, %v3115
    %v3180 = vsub.f32 %v2988, %v3116
    %v3181 = vsub.f32 %v2989, %v3117
    %v3182 = vsub.f32 %v2990, %v3118
    %v3183 = vsub.f32 %v2991, %v3119
    %v3184 = vsub.f32 %v2992, %v3120
    %v3185 = vsub.f32 %v2993, %v3121
    %v3186 = vsub.f32 %v2994, %v3122
    %v3187 = vsub.f32 %v2995, %v3123
    %v3188 = vsub.f32 %v2996, %v3124
    %v3189 = vsub.f32 %v2997, %v3125
    %v3190 = vadd.f32 %v3126, 1e-05
    %v3191 = vadd.f32 %v3127, 1e-05
    %v3192 = vadd.f32 %v3128, 1e-05
    %v3193 = vadd.f32 %v3129, 1e-05
    %v3194 = vadd.f32 %v3130, 1e-05
    %v3195 = vadd.f32 %v3131, 1e-05
    %v3196 = vadd.f32 %v3132, 1e-05
    %v3197 = vadd.f32 %v3133, 1e-05
    %v3198 = vadd.f32 %v3134, 1e-05
    %v3199 = vadd.f32 %v3135, 1e-05
    %v3200 = vadd.f32 %v3136, 1e-05
    %v3201 = vadd.f32 %v3137, 1e-05
    %v3202 = vadd.f32 %v3138, 1e-05
    %v3203 = vadd.f32 %v3139, 1e-05
    %v3204 = vadd.f32 %v3140, 1e-05
    %v3205 = vadd.f32 %v3141, 1e-05
    %v3206 = vadd.f32 %v3142, 1e-05
    %v3207 = vadd.f32 %v3143, 1e-05
    %v3208 = vadd.f32 %v3144, 1e-05
    %v3209 = vadd.f32 %v3145, 1e-05
    %v3210 = vadd.f32 %v3146, 1e-05
    %v3211 = vadd.f32 %v3147, 1e-05
    %v3212 = vadd.f32 %v3148, 1e-05
    %v3213 = vadd.f32 %v3149, 1e-05
    %v3214 = vadd.f32 %v3150, 1e-05
    %v3215 = vadd.f32 %v3151, 1e-05
    %v3216 = vadd.f32 %v3152, 1e-05
    %v3217 = vadd.f32 %v3153, 1e-05
    %v3218 = vadd.f32 %v3154, 1e-05
    %v3219 = vadd.f32 %v3155, 1e-05
    %v3220 = vadd.f32 %v3156, 1e-05
    %v3221 = vadd.f32 %v3157, 1e-05
    %v3222 = vadd.f32 %v3158, 1e-05
    %v3223 = vadd.f32 %v3159, 1e-05
    %v3224 = vadd.f32 %v3160, 1e-05
    %v3225 = vadd.f32 %v3161, 1e-05
    %v3226 = vadd.f32 %v3162, 1e-05
    %v3227 = vadd.f32 %v3163, 1e-05
    %v3228 = vadd.f32 %v3164, 1e-05
    %v3229 = vadd.f32 %v3165, 1e-05
    %v3230 = vadd.f32 %v3166, 1e-05
    %v3231 = vadd.f32 %v3167, 1e-05
    %v3232 = vadd.f32 %v3168, 1e-05
    %v3233 = vadd.f32 %v3169, 1e-05
    %v3234 = vadd.f32 %v3170, 1e-05
    %v3235 = vadd.f32 %v3171, 1e-05
    %v3236 = vadd.f32 %v3172, 1e-05
    %v3237 = vadd.f32 %v3173, 1e-05
    %v3238 = vadd.f32 %v3174, 1e-05
    %v3239 = vadd.f32 %v3175, 1e-05
    %v3240 = vadd.f32 %v3176, 1e-05
    %v3241 = vadd.f32 %v3177, 1e-05
    %v3242 = vadd.f32 %v3178, 1e-05
    %v3243 = vadd.f32 %v3179, 1e-05
    %v3244 = vadd.f32 %v3180, 1e-05
    %v3245 = vadd.f32 %v3181, 1e-05
    %v3246 = vadd.f32 %v3182, 1e-05
    %v3247 = vadd.f32 %v3183, 1e-05
    %v3248 = vadd.f32 %v3184, 1e-05
    %v3249 = vadd.f32 %v3185, 1e-05
    %v3250 = vadd.f32 %v3186, 1e-05
    %v3251 = vadd.f32 %v3187, 1e-05
    %v3252 = vadd.f32 %v3188, 1e-05
    %v3253 = vadd.f32 %v3189, 1e-05
    %v3254 = vrsqrt.pop %v3190
    %v3255 = vrsqrt.pop %v3191
    %v3256 = vrsqrt.pop %v3192
    %v3257 = vrsqrt.pop %v3193
    %v3258 = vrsqrt.pop %v3194
    %v3259 = vrsqrt.pop %v3195
    %v3260 = vrsqrt.pop %v3196
    %v3261 = vrsqrt.pop %v3197
    %v3262 = vrsqrt.pop %v3198
    %v3263 = vrsqrt.pop %v3199
    %v3264 = vrsqrt.pop %v3200
    %v3265 = vrsqrt.pop %v3201
    %v3266 = vrsqrt.pop %v3202
    %v3267 = vrsqrt.pop %v3203
    %v3268 = vrsqrt.pop %v3204
    %v3269 = vrsqrt.pop %v3205
    %v3270 = vrsqrt.pop %v3206
    %v3271 = vrsqrt.pop %v3207
    %v3272 = vrsqrt.pop %v3208
    %v3273 = vrsqrt.pop %v3209
    %v3274 = vrsqrt.pop %v3210
    %v3275 = vrsqrt.pop %v3211
    %v3276 = vrsqrt.pop %v3212
    %v3277 = vrsqrt.pop %v3213
    %v3278 = vrsqrt.pop %v3214
    %v3279 = vrsqrt.pop %v3215
    %v3280 = vrsqrt.pop %v3216
    %v3281 = vrsqrt.pop %v3217
    %v3282 = vrsqrt.pop %v3218
    %v3283 = vrsqrt.pop %v3219
    %v3284 = vrsqrt.pop %v3220
    %v3285 = vrsqrt.pop %v3221
    %v3286 = vrsqrt.pop %v3222
    %v3287 = vrsqrt.pop %v3223
    %v3288 = vrsqrt.pop %v3224
    %v3289 = vrsqrt.pop %v3225
    %v3290 = vrsqrt.pop %v3226
    %v3291 = vrsqrt.pop %v3227
    %v3292 = vrsqrt.pop %v3228
    %v3293 = vrsqrt.pop %v3229
    %v3294 = vrsqrt.pop %v3230
    %v3295 = vrsqrt.pop %v3231
    %v3296 = vrsqrt.pop %v3232
    %v3297 = vrsqrt.pop %v3233
    %v3298 = vrsqrt.pop %v3234
    %v3299 = vrsqrt.pop %v3235
    %v3300 = vrsqrt.pop %v3236
    %v3301 = vrsqrt.pop %v3237
    %v3302 = vrsqrt.pop %v3238
    %v3303 = vrsqrt.pop %v3239
    %v3304 = vrsqrt.pop %v3240
    %v3305 = vrsqrt.pop %v3241
    %v3306 = vrsqrt.pop %v3242
    %v3307 = vrsqrt.pop %v3243
    %v3308 = vrsqrt.pop %v3244
    %v3309 = vrsqrt.pop %v3245
    %v3310 = vrsqrt.pop %v3246
    %v3311 = vrsqrt.pop %v3247
    %v3312 = vrsqrt.pop %v3248
    %v3313 = vrsqrt.pop %v3249
    %v3314 = vrsqrt.pop %v3250
    %v3315 = vrsqrt.pop %v3251
    %v3316 = vrsqrt.pop %v3252
    %v3317 = vrsqrt.pop %v3253
    %v3318 = vmul.f32 %v2998, %v3254
    %v3319 = vmul.f32 %v2999, %v3255
    %v3320 = vmul.f32 %v3000, %v3256
    %v3321 = vmul.f32 %v3001, %v3257
    %v3322 = vmul.f32 %v3002, %v3258
    %v3323 = vmul.f32 %v3003, %v3259
    %v3324 = vmul.f32 %v3004, %v3260
    %v3325 = vmul.f32 %v3005, %v3261
    %v3326 = vmul.f32 %v3006, %v3262
    %v3327 = vmul.f32 %v3007, %v3263
    %v3328 = vmul.f32 %v3008, %v3264
    %v3329 = vmul.f32 %v3009, %v3265
    %v3330 = vmul.f32 %v3010, %v3266
    %v3331 = vmul.f32 %v3011, %v3267
    %v3332 = vmul.f32 %v3012, %v3268
    %v3333 = vmul.f32 %v3013, %v3269
    %v3334 = vmul.f32 %v3014, %v3270
    %v3335 = vmul.f32 %v3015, %v3271
    %v3336 = vmul.f32 %v3016, %v3272
    %v3337 = vmul.f32 %v3017, %v3273
    %v3338 = vmul.f32 %v3018, %v3274
    %v3339 = vmul.f32 %v3019, %v3275
    %v3340 = vmul.f32 %v3020, %v3276
    %v3341 = vmul.f32 %v3021, %v3277
    %v3342 = vmul.f32 %v3022, %v3278
    %v3343 = vmul.f32 %v3023, %v3279
    %v3344 = vmul.f32 %v3024, %v3280
    %v3345 = vmul.f32 %v3025, %v3281
    %v3346 = vmul.f32 %v3026, %v3282
    %v3347 = vmul.f32 %v3027, %v3283
    %v3348 = vmul.f32 %v3028, %v3284
    %v3349 = vmul.f32 %v3029, %v3285
    %v3350 = vmul.f32 %v3030, %v3286
    %v3351 = vmul.f32 %v3031, %v3287
    %v3352 = vmul.f32 %v3032, %v3288
    %v3353 = vmul.f32 %v3033, %v3289
    %v3354 = vmul.f32 %v3034, %v3290
    %v3355 = vmul.f32 %v3035, %v3291
    %v3356 = vmul.f32 %v3036, %v3292
    %v3357 = vmul.f32 %v3037, %v3293
    %v3358 = vmul.f32 %v3038, %v3294
    %v3359 = vmul.f32 %v3039, %v3295
    %v3360 = vmul.f32 %v3040, %v3296
    %v3361 = vmul.f32 %v3041, %v3297
    %v3362 = vmul.f32 %v3042, %v3298
    %v3363 = vmul.f32 %v3043, %v3299
    %v3364 = vmul.f32 %v3044, %v3300
    %v3365 = vmul.f32 %v3045, %v3301
    %v3366 = vmul.f32 %v3046, %v3302
    %v3367 = vmul.f32 %v3047, %v3303
    %v3368 = vmul.f32 %v3048, %v3304
    %v3369 = vmul.f32 %v3049, %v3305
    %v3370 = vmul.f32 %v3050, %v3306
    %v3371 = vmul.f32 %v3051, %v3307
    %v3372 = vmul.f32 %v3052, %v3308
    %v3373 = vmul.f32 %v3053, %v3309
    %v3374 = vmul.f32 %v3054, %v3310
    %v3375 = vmul.f32 %v3055, %v3311
    %v3376 = vmul.f32 %v3056, %v3312
    %v3377 = vmul.f32 %v3057, %v3313
    %v3378 = vmul.f32 %v3058, %v3314
    %v3379 = vmul.f32 %v3059, %v3315
    %v3380 = vmul.f32 %v3060, %v3316
    %v3381 = vmul.f32 %v3061, %v3317
    %v3382 = vlaneseq
    %v3383 = vshrl.u32 %v3382, 7
    %v3384 = vsub.s32 0, %v3383
    %v3385 = vrot.slane %v1002, %v3384
    %v3386 = vmul.f32 %v3318, %v3385
    %v3387 = vmul.f32 %v3319, %v3385
    %v3388 = vmul.f32 %v3320, %v3385
    %v3389 = vmul.f32 %v3321, %v3385
    %v3390 = vmul.f32 %v3322, %v3385
    %v3391 = vmul.f32 %v3323, %v3385
    %v3392 = vmul.f32 %v3324, %v3385
    %v3393 = vmul.f32 %v3325, %v3385
    %v3394 = vmul.f32 %v3326, %v3385
    %v3395 = vmul.f32 %v3327, %v3385
    %v3396 = vmul.f32 %v3328, %v3385
    %v3397 = vmul.f32 %v3329, %v3385
    %v3398 = vmul.f32 %v3330, %v3385
    %v3399 = vmul.f32 %v3331, %v3385
    %v3400 = vmul.f32 %v3332, %v3385
    %v3401 = vmul.f32 %v3333, %v3385
    %v3402 = vmul.f32 %v3334, %v3385
    %v3403 = vmul.f32 %v3335, %v3385
    %v3404 = vmul.f32 %v3336, %v3385
    %v3405 = vmul.f32 %v3337, %v3385
    %v3406 = vmul.f32 %v3338, %v3385
    %v3407 = vmul.f32 %v3339, %v3385
    %v3408 = vmul.f32 %v3340, %v3385
    %v3409 = vmul.f32 %v3341, %v3385
    %v3410 = vmul.f32 %v3342, %v3385
    %v3411 = vmul.f32 %v3343, %v3385
    %v3412 = vmul.f32 %v3344, %v3385
    %v3413 = vmul.f32 %v3345, %v3385
    %v3414 = vmul.f32 %v3346, %v3385
    %v3415 = vmul.f32 %v3347, %v3385
    %v3416 = vmul.f32 %v3348, %v3385
    %v3417 = vmul.f32 %v3349, %v3385
    %v3418 = vmul.f32 %v3350, %v3385
    %v3419 = vmul.f32 %v3351, %v3385
    %v3420 = vmul.f32 %v3352, %v3385
    %v3421 = vmul.f32 %v3353, %v3385
    %v3422 = vmul.f32 %v3354, %v3385
    %v3423 = vmul.f32 %v3355, %v3385
    %v3424 = vmul.f32 %v3356, %v3385
    %v3425 = vmul.f32 %v3357, %v3385
    %v3426 = vmul.f32 %v3358, %v3385
    %v3427 = vmul.f32 %v3359, %v3385
    %v3428 = vmul.f32 %v3360, %v3385
    %v3429 = vmul.f32 %v3361, %v3385
    %v3430 = vmul.f32 %v3362, %v3385
    %v3431 = vmul.f32 %v3363, %v3385
    %v3432 = vmul.f32 %v3364, %v3385
    %v3433 = vmul.f32 %v3365, %v3385
    %v3434 = vmul.f32 %v3366, %v3385
    %v3435 = vmul.f32 %v3367, %v3385
    %v3436 = vmul.f32 %v3368, %v3385
    %v3437 = vmul.f32 %v3369, %v3385
    %v3438 = vmul.f32 %v3370, %v3385
    %v3439 = vmul.f32 %v3371, %v3385
    %v3440 = vmul.f32 %v3372, %v3385
    %v3441 = vmul.f32 %v3373, %v3385
    %v3442 = vmul.f32 %v3374, %v3385
    %v3443 = vmul.f32 %v3375, %v3385
    %v3444 = vmul.f32 %v3376, %v3385
    %v3445 = vmul.f32 %v3377, %v3385
    %v3446 = vmul.f32 %v3378, %v3385
    %v3447 = vmul.f32 %v3379, %v3385
    %v3448 = vmul.f32 %v3380, %v3385
    %v3449 = vmul.f32 %v3381, %v3385
    %v3450 = vlaneseq
    %v3451 = vshrl.u32 %v3450, 7
    %v3452 = vsub.s32 0, %v3451
    %v3453 = vrot.slane %v1003, %v3452
    %v3454 = vadd.f32 %v3386, %v3453
    %v3455 = vadd.f32 %v3387, %v3453
    %v3456 = vadd.f32 %v3388, %v3453
    %v3457 = vadd.f32 %v3389, %v3453
    %v3458 = vadd.f32 %v3390, %v3453
    %v3459 = vadd.f32 %v3391, %v3453
    %v3460 = vadd.f32 %v3392, %v3453
    %v3461 = vadd.f32 %v3393, %v3453
    %v3462 = vadd.f32 %v3394, %v3453
    %v3463 = vadd.f32 %v3395, %v3453
    %v3464 = vadd.f32 %v3396, %v3453
    %v3465 = vadd.f32 %v3397, %v3453
    %v3466 = vadd.f32 %v3398, %v3453
    %v3467 = vadd.f32 %v3399, %v3453
    %v3468 = vadd.f32 %v3400, %v3453
    %v3469 = vadd.f32 %v3401, %v3453
    %v3470 = vadd.f32 %v3402, %v3453
    %v3471 = vadd.f32 %v3403, %v3453
    %v3472 = vadd.f32 %v3404, %v3453
    %v3473 = vadd.f32 %v3405, %v3453
    %v3474 = vadd.f32 %v3406, %v3453
    %v3475 = vadd.f32 %v3407, %v3453
    %v3476 = vadd.f32 %v3408, %v3453
    %v3477 = vadd.f32 %v3409, %v3453
    %v3478 = vadd.f32 %v3410, %v3453
    %v3479 = vadd.f32 %v3411, %v3453
    %v3480 = vadd.f32 %v3412, %v3453
    %v3481 = vadd.f32 %v3413, %v3453
    %v3482 = vadd.f32 %v3414, %v3453
    %v3483 = vadd.f32 %v3415, %v3453
    %v3484 = vadd.f32 %v3416, %v3453
    %v3485 = vadd.f32 %v3417, %v3453
    %v3486 = vadd.f32 %v3418, %v3453
    %v3487 = vadd.f32 %v3419, %v3453
    %v3488 = vadd.f32 %v3420, %v3453
    %v3489 = vadd.f32 %v3421, %v3453
    %v3490 = vadd.f32 %v3422, %v3453
    %v3491 = vadd.f32 %v3423, %v3453
    %v3492 = vadd.f32 %v3424, %v3453
    %v3493 = vadd.f32 %v3425, %v3453
    %v3494 = vadd.f32 %v3426, %v3453
    %v3495 = vadd.f32 %v3427, %v3453
    %v3496 = vadd.f32 %v3428, %v3453
    %v3497 = vadd.f32 %v3429, %v3453
    %v3498 = vadd.f32 %v3430, %v3453
    %v3499 = vadd.f32 %v3431, %v3453
    %v3500 = vadd.f32 %v3432, %v3453
    %v3501 = vadd.f32 %v3433, %v3453
    %v3502 = vadd.f32 %v3434, %v3453
    %v3503 = vadd.f32 %v3435, %v3453
    %v3504 = vadd.f32 %v3436, %v3453
    %v3505 = vadd.f32 %v3437, %v3453
    %v3506 = vadd.f32 %v3438, %v3453
    %v3507 = vadd.f32 %v3439, %v3453
    %v3508 = vadd.f32 %v3440, %v3453
    %v3509 = vadd.f32 %v3441, %v3453
    %v3510 = vadd.f32 %v3442, %v3453
    %v3511 = vadd.f32 %v3443, %v3453
    %v3512 = vadd.f32 %v3444, %v3453
    %v3513 = vadd.f32 %v3445, %v3453
    %v3514 = vadd.f32 %v3446, %v3453
    %v3515 = vadd.f32 %v3447, %v3453
    %v3516 = vadd.f32 %v3448, %v3453
    %v3517 = vadd.f32 %v3449, %v3453
    %v3518 = vld [vmem:[%s3] sm:$0xff]
    %v3519 = vld [vmem:[%s3 + $0x8] sm:$0xff]
    %v3520 = vld [vmem:[%s3 + $0x10] sm:$0xff]
    %v3521 = vld [vmem:[%s3 + $0x18] sm:$0xff]
    %v3526 = vcombine.high %v3518, %v3518
    %v3528 = vunpack.c.l.s4 1966171168
    %v3529 = vunpack.c.0.s8 %v3528
    %v3530 = vlaneseq
    %v3531 = vshrl.u32 %v3530, 7
    %v3532 = vsub.s32 %v3529, %v3531
    %v3533 = vrot.slane %v3518, %v3532
    %v3535 = vunpack.c.l.s4 1966171168
    %v3536 = vunpack.c.0.s8 %v3535
    %v3537 = vlaneseq
    %v3538 = vshrl.u32 %v3537, 7
    %v3539 = vsub.s32 %v3536, %v3538
    %v3540 = vrot.slane %v3526, %v3539
    %v3541 = vcombine.high %v3533, %v3533
    %v3542 = vcombine.high %v3540, %v3540
    %v3544 = vunpack.c.l.s4 1966171168
    %v3545 = vunpack.c.0.s8 %v3544
    %v3546 = vlaneseq
    %v3547 = vshrl.u32 %v3546, 7
    %v3548 = vsub.s32 %v3545, %v3547
    %v3549 = vrot.slane %v3533, %v3548
    %v3551 = vunpack.c.l.s4 1966171168
    %v3552 = vunpack.c.0.s8 %v3551
    %v3553 = vlaneseq
    %v3554 = vshrl.u32 %v3553, 7
    %v3555 = vsub.s32 %v3552, %v3554
    %v3556 = vrot.slane %v3540, %v3555
    %v3558 = vunpack.c.l.s4 1966171168
    %v3559 = vunpack.c.0.s8 %v3558
    %v3560 = vlaneseq
    %v3561 = vshrl.u32 %v3560, 7
    %v3562 = vsub.s32 %v3559, %v3561
    %v3563 = vrot.slane %v3541, %v3562
    %v3565 = vunpack.c.l.s4 1966171168
    %v3566 = vunpack.c.0.s8 %v3565
    %v3567 = vlaneseq
    %v3568 = vshrl.u32 %v3567, 7
    %v3569 = vsub.s32 %v3566, %v3568
    %v3570 = vrot.slane %v3542, %v3569
    %v3571 = vcombine.high %v3549, %v3549
    %v3572 = vcombine.high %v3556, %v3556
    %v3573 = vcombine.high %v3563, %v3563
    %v3574 = vcombine.high %v3570, %v3570
    %v3575 = vcombine.high %v3519, %v3519
    %v3577 = vunpack.c.l.s4 1966171168
    %v3578 = vunpack.c.0.s8 %v3577
    %v3579 = vlaneseq
    %v3580 = vshrl.u32 %v3579, 7
    %v3581 = vsub.s32 %v3578, %v3580
    %v3582 = vrot.slane %v3519, %v3581
    %v3584 = vunpack.c.l.s4 1966171168
    %v3585 = vunpack.c.0.s8 %v3584
    %v3586 = vlaneseq
    %v3587 = vshrl.u32 %v3586, 7
    %v3588 = vsub.s32 %v3585, %v3587
    %v3589 = vrot.slane %v3575, %v3588
    %v3590 = vcombine.high %v3582, %v3582
    %v3591 = vcombine.high %v3589, %v3589
    %v3593 = vunpack.c.l.s4 1966171168
    %v3594 = vunpack.c.0.s8 %v3593
    %v3595 = vlaneseq
    %v3596 = vshrl.u32 %v3595, 7
    %v3597 = vsub.s32 %v3594, %v3596
    %v3598 = vrot.slane %v3582, %v3597
    %v3600 = vunpack.c.l.s4 1966171168
    %v3601 = vunpack.c.0.s8 %v3600
    %v3602 = vlaneseq
    %v3603 = vshrl.u32 %v3602, 7
    %v3604 = vsub.s32 %v3601, %v3603
    %v3605 = vrot.slane %v3589, %v3604
    %v3607 = vunpack.c.l.s4 1966171168
    %v3608 = vunpack.c.0.s8 %v3607
    %v3609 = vlaneseq
    %v3610 = vshrl.u32 %v3609, 7
    %v3611 = vsub.s32 %v3608, %v3610
    %v3612 = vrot.slane %v3590, %v3611
    %v3614 = vunpack.c.l.s4 1966171168
    %v3615 = vunpack.c.0.s8 %v3614
    %v3616 = vlaneseq
    %v3617 = vshrl.u32 %v3616, 7
    %v3618 = vsub.s32 %v3615, %v3617
    %v3619 = vrot.slane %v3591, %v3618
    %v3620 = vcombine.high %v3598, %v3598
    %v3621 = vcombine.high %v3605, %v3605
    %v3622 = vcombine.high %v3612, %v3612
    %v3623 = vcombine.high %v3619, %v3619
    %v3624 = vcombine.high %v3520, %v3520
    %v3626 = vunpack.c.l.s4 1966171168
    %v3627 = vunpack.c.0.s8 %v3626
    %v3628 = vlaneseq
    %v3629 = vshrl.u32 %v3628, 7
    %v3630 = vsub.s32 %v3627, %v3629
    %v3631 = vrot.slane %v3520, %v3630
    %v3633 = vunpack.c.l.s4 1966171168
    %v3634 = vunpack.c.0.s8 %v3633
    %v3635 = vlaneseq
    %v3636 = vshrl.u32 %v3635, 7
    %v3637 = vsub.s32 %v3634, %v3636
    %v3638 = vrot.slane %v3624, %v3637
    %v3639 = vcombine.high %v3631, %v3631
    %v3640 = vcombine.high %v3638, %v3638
    %v3642 = vunpack.c.l.s4 1966171168
    %v3643 = vunpack.c.0.s8 %v3642
    %v3644 = vlaneseq
    %v3645 = vshrl.u32 %v3644, 7
    %v3646 = vsub.s32 %v3643, %v3645
    %v3647 = vrot.slane %v3631, %v3646
    %v3649 = vunpack.c.l.s4 1966171168
    %v3650 = vunpack.c.0.s8 %v3649
    %v3651 = vlaneseq
    %v3652 = vshrl.u32 %v3651, 7
    %v3653 = vsub.s32 %v3650, %v3652
    %v3654 = vrot.slane %v3638, %v3653
    %v3656 = vunpack.c.l.s4 1966171168
    %v3657 = vunpack.c.0.s8 %v3656
    %v3658 = vlaneseq
    %v3659 = vshrl.u32 %v3658, 7
    %v3660 = vsub.s32 %v3657, %v3659
    %v3661 = vrot.slane %v3639, %v3660
    %v3663 = vunpack.c.l.s4 1966171168
    %v3664 = vunpack.c.0.s8 %v3663
    %v3665 = vlaneseq
    %v3666 = vshrl.u32 %v3665, 7
    %v3667 = vsub.s32 %v3664, %v3666
    %v3668 = vrot.slane %v3640, %v3667
    %v3669 = vcombine.high %v3647, %v3647
    %v3670 = vcombine.high %v3654, %v3654
    %v3671 = vcombine.high %v3661, %v3661
    %v3672 = vcombine.high %v3668, %v3668
    %v3673 = vcombine.high %v3521, %v3521
    %v3675 = vunpack.c.l.s4 1966171168
    %v3676 = vunpack.c.0.s8 %v3675
    %v3677 = vlaneseq
    %v3678 = vshrl.u32 %v3677, 7
    %v3679 = vsub.s32 %v3676, %v3678
    %v3680 = vrot.slane %v3521, %v3679
    %v3682 = vunpack.c.l.s4 1966171168
    %v3683 = vunpack.c.0.s8 %v3682
    %v3684 = vlaneseq
    %v3685 = vshrl.u32 %v3684, 7
    %v3686 = vsub.s32 %v3683, %v3685
    %v3687 = vrot.slane %v3673, %v3686
    %v3688 = vcombine.high %v3680, %v3680
    %v3689 = vcombine.high %v3687, %v3687
    %v3691 = vunpack.c.l.s4 1966171168
    %v3692 = vunpack.c.0.s8 %v3691
    %v3693 = vlaneseq
    %v3694 = vshrl.u32 %v3693, 7
    %v3695 = vsub.s32 %v3692, %v3694
    %v3696 = vrot.slane %v3680, %v3695
    %v3698 = vunpack.c.l.s4 1966171168
    %v3699 = vunpack.c.0.s8 %v3698
    %v3700 = vlaneseq
    %v3701 = vshrl.u32 %v3700, 7
    %v3702 = vsub.s32 %v3699, %v3701
    %v3703 = vrot.slane %v3687, %v3702
    %v3705 = vunpack.c.l.s4 1966171168
    %v3706 = vunpack.c.0.s8 %v3705
    %v3707 = vlaneseq
    %v3708 = vshrl.u32 %v3707, 7
    %v3709 = vsub.s32 %v3706, %v3708
    %v3710 = vrot.slane %v3688, %v3709
    %v3712 = vunpack.c.l.s4 1966171168
    %v3713 = vunpack.c.0.s8 %v3712
    %v3714 = vlaneseq
    %v3715 = vshrl.u32 %v3714, 7
    %v3716 = vsub.s32 %v3713, %v3715
    %v3717 = vrot.slane %v3689, %v3716
    %v3718 = vcombine.high %v3696, %v3696
    %v3719 = vcombine.high %v3703, %v3703
    %v3720 = vcombine.high %v3710, %v3710
    %v3721 = vcombine.high %v3717, %v3717
    %v3722 = vlaneseq
    %v3723 = vshrl.u32 %v3722, 7
    %v3724 = vsub.s32 0, %v3723
    %v3725 = vrot.slane %v3549, %v3724
    %v3726 = vlaneseq
    %v3727 = vshrl.u32 %v3726, 7
    %v3728 = vsub.s32 0, %v3727
    %v3729 = vrot.slane %v3563, %v3728
    %v3730 = vlaneseq
    %v3731 = vshrl.u32 %v3730, 7
    %v3732 = vsub.s32 0, %v3731
    %v3733 = vrot.slane %v3571, %v3732
    %v3734 = vlaneseq
    %v3735 = vshrl.u32 %v3734, 7
    %v3736 = vsub.s32 0, %v3735
    %v3737 = vrot.slane %v3573, %v3736
    %v3738 = vlaneseq
    %v3739 = vshrl.u32 %v3738, 7
    %v3740 = vsub.s32 0, %v3739
    %v3741 = vrot.slane %v3556, %v3740
    %v3742 = vlaneseq
    %v3743 = vshrl.u32 %v3742, 7
    %v3744 = vsub.s32 0, %v3743
    %v3745 = vrot.slane %v3570, %v3744
    %v3746 = vlaneseq
    %v3747 = vshrl.u32 %v3746, 7
    %v3748 = vsub.s32 0, %v3747
    %v3749 = vrot.slane %v3572, %v3748
    %v3750 = vlaneseq
    %v3751 = vshrl.u32 %v3750, 7
    %v3752 = vsub.s32 0, %v3751
    %v3753 = vrot.slane %v3574, %v3752
    %v3754 = vlaneseq
    %v3755 = vshrl.u32 %v3754, 7
    %v3756 = vsub.s32 0, %v3755
    %v3757 = vrot.slane %v3598, %v3756
    %v3758 = vlaneseq
    %v3759 = vshrl.u32 %v3758, 7
    %v3760 = vsub.s32 0, %v3759
    %v3761 = vrot.slane %v3612, %v3760
    %v3762 = vlaneseq
    %v3763 = vshrl.u32 %v3762, 7
    %v3764 = vsub.s32 0, %v3763
    %v3765 = vrot.slane %v3620, %v3764
    %v3766 = vlaneseq
    %v3767 = vshrl.u32 %v3766, 7
    %v3768 = vsub.s32 0, %v3767
    %v3769 = vrot.slane %v3622, %v3768
    %v3770 = vlaneseq
    %v3771 = vshrl.u32 %v3770, 7
    %v3772 = vsub.s32 0, %v3771
    %v3773 = vrot.slane %v3605, %v3772
    %v3774 = vlaneseq
    %v3775 = vshrl.u32 %v3774, 7
    %v3776 = vsub.s32 0, %v3775
    %v3777 = vrot.slane %v3619, %v3776
    %v3778 = vlaneseq
    %v3779 = vshrl.u32 %v3778, 7
    %v3780 = vsub.s32 0, %v3779
    %v3781 = vrot.slane %v3621, %v3780
    %v3782 = vlaneseq
    %v3783 = vshrl.u32 %v3782, 7
    %v3784 = vsub.s32 0, %v3783
    %v3785 = vrot.slane %v3623, %v3784
    %v3786 = vlaneseq
    %v3787 = vshrl.u32 %v3786, 7
    %v3788 = vsub.s32 0, %v3787
    %v3789 = vrot.slane %v3647, %v3788
    %v3790 = vlaneseq
    %v3791 = vshrl.u32 %v3790, 7
    %v3792 = vsub.s32 0, %v3791
    %v3793 = vrot.slane %v3661, %v3792
    %v3794 = vlaneseq
    %v3795 = vshrl.u32 %v3794, 7
    %v3796 = vsub.s32 0, %v3795
    %v3797 = vrot.slane %v3669, %v3796
    %v3798 = vlaneseq
    %v3799 = vshrl.u32 %v3798, 7
    %v3800 = vsub.s32 0, %v3799
    %v3801 = vrot.slane %v3671, %v3800
    %v3802 = vlaneseq
    %v3803 = vshrl.u32 %v3802, 7
    %v3804 = vsub.s32 0, %v3803
    %v3805 = vrot.slane %v3654, %v3804
    %v3806 = vlaneseq
    %v3807 = vshrl.u32 %v3806, 7
    %v3808 = vsub.s32 0, %v3807
    %v3809 = vrot.slane %v3668, %v3808
    %v3810 = vlaneseq
    %v3811 = vshrl.u32 %v3810, 7
    %v3812 = vsub.s32 0, %v3811
    %v3813 = vrot.slane %v3670, %v3812
    %v3814 = vlaneseq
    %v3815 = vshrl.u32 %v3814, 7
    %v3816 = vsub.s32 0, %v3815
    %v3817 = vrot.slane %v3672, %v3816
    %v3818 = vlaneseq
    %v3819 = vshrl.u32 %v3818, 7
    %v3820 = vsub.s32 0, %v3819
    %v3821 = vrot.slane %v3696, %v3820
    %v3822 = vlaneseq
    %v3823 = vshrl.u32 %v3822, 7
    %v3824 = vsub.s32 0, %v3823
    %v3825 = vrot.slane %v3710, %v3824
    %v3826 = vlaneseq
    %v3827 = vshrl.u32 %v3826, 7
    %v3828 = vsub.s32 0, %v3827
    %v3829 = vrot.slane %v3718, %v3828
    %v3830 = vlaneseq
    %v3831 = vshrl.u32 %v3830, 7
    %v3832 = vsub.s32 0, %v3831
    %v3833 = vrot.slane %v3720, %v3832
    %v3834 = vlaneseq
    %v3835 = vshrl.u32 %v3834, 7
    %v3836 = vsub.s32 0, %v3835
    %v3837 = vrot.slane %v3703, %v3836
    %v3838 = vlaneseq
    %v3839 = vshrl.u32 %v3838, 7
    %v3840 = vsub.s32 0, %v3839
    %v3841 = vrot.slane %v3717, %v3840
    %v3842 = vlaneseq
    %v3843 = vshrl.u32 %v3842, 7
    %v3844 = vsub.s32 0, %v3843
    %v3845 = vrot.slane %v3719, %v3844
    %v3846 = vlaneseq
    %v3847 = vshrl.u32 %v3846, 7
    %v3848 = vsub.s32 0, %v3847
    %v3849 = vrot.slane %v3721, %v3848
    %v3882 = vmul.f32 %v3725, %v3518
    %v3883 = vmul.f32 %v3725, %v3519
    %v3884 = vmul.f32 %v3729, %v3518
    %v3885 = vmul.f32 %v3729, %v3519
    %v3886 = vmul.f32 %v3733, %v3518
    %v3887 = vmul.f32 %v3733, %v3519
    %v3888 = vmul.f32 %v3737, %v3518
    %v3889 = vmul.f32 %v3737, %v3519
    %v3890 = vmul.f32 %v3741, %v3518
    %v3891 = vmul.f32 %v3741, %v3519
    %v3892 = vmul.f32 %v3745, %v3518
    %v3893 = vmul.f32 %v3745, %v3519
    %v3894 = vmul.f32 %v3749, %v3518
    %v3895 = vmul.f32 %v3749, %v3519
    %v3896 = vmul.f32 %v3753, %v3518
    %v3897 = vmul.f32 %v3753, %v3519
    %v3898 = vmul.f32 %v3757, %v3518
    %v3899 = vmul.f32 %v3757, %v3519
    %v3900 = vmul.f32 %v3761, %v3518
    %v3901 = vmul.f32 %v3761, %v3519
    %v3902 = vmul.f32 %v3765, %v3518
    %v3903 = vmul.f32 %v3765, %v3519
    %v3904 = vmul.f32 %v3769, %v3518
    %v3905 = vmul.f32 %v3769, %v3519
    %v3906 = vmul.f32 %v3773, %v3518
    %v3907 = vmul.f32 %v3773, %v3519
    %v3908 = vmul.f32 %v3777, %v3518
    %v3909 = vmul.f32 %v3777, %v3519
    %v3910 = vmul.f32 %v3781, %v3518
    %v3911 = vmul.f32 %v3781, %v3519
    %v3912 = vmul.f32 %v3785, %v3518
    %v3913 = vmul.f32 %v3785, %v3519
    %v3914 = vmul.f32 %v3789, %v3520
    %v3915 = vmul.f32 %v3789, %v3521
    %v3916 = vmul.f32 %v3793, %v3520
    %v3917 = vmul.f32 %v3793, %v3521
    %v3918 = vmul.f32 %v3797, %v3520
    %v3919 = vmul.f32 %v3797, %v3521
    %v3920 = vmul.f32 %v3801, %v3520
    %v3921 = vmul.f32 %v3801, %v3521
    %v3922 = vmul.f32 %v3805, %v3520
    %v3923 = vmul.f32 %v3805, %v3521
    %v3924 = vmul.f32 %v3809, %v3520
    %v3925 = vmul.f32 %v3809, %v3521
    %v3926 = vmul.f32 %v3813, %v3520
    %v3927 = vmul.f32 %v3813, %v3521
    %v3928 = vmul.f32 %v3817, %v3520
    %v3929 = vmul.f32 %v3817, %v3521
    %v3930 = vmul.f32 %v3821, %v3520
    %v3931 = vmul.f32 %v3821, %v3521
    %v3932 = vmul.f32 %v3825, %v3520
    %v3933 = vmul.f32 %v3825, %v3521
    %v3934 = vmul.f32 %v3829, %v3520
    %v3935 = vmul.f32 %v3829, %v3521
    %v3936 = vmul.f32 %v3833, %v3520
    %v3937 = vmul.f32 %v3833, %v3521
    %v3938 = vmul.f32 %v3837, %v3520
    %v3939 = vmul.f32 %v3837, %v3521
    %v3940 = vmul.f32 %v3841, %v3520
    %v3941 = vmul.f32 %v3841, %v3521
    %v3942 = vmul.f32 %v3845, %v3520
    %v3943 = vmul.f32 %v3845, %v3521
    %v3944 = vmul.f32 %v3849, %v3520
    %v3945 = vmul.f32 %v3849, %v3521
    %v3946 = vmul.f32 %v3882, %v3882
    %v3947 = vmul.f32 %v3883, %v3883
    %v3948 = vmul.f32 %v3884, %v3884
    %v3949 = vmul.f32 %v3885, %v3885
    %v3950 = vmul.f32 %v3886, %v3886
    %v3951 = vmul.f32 %v3887, %v3887
    %v3952 = vmul.f32 %v3888, %v3888
    %v3953 = vmul.f32 %v3889, %v3889
    %v3954 = vmul.f32 %v3890, %v3890
    %v3955 = vmul.f32 %v3891, %v3891
    %v3956 = vmul.f32 %v3892, %v3892
    %v3957 = vmul.f32 %v3893, %v3893
    %v3958 = vmul.f32 %v3894, %v3894
    %v3959 = vmul.f32 %v3895, %v3895
    %v3960 = vmul.f32 %v3896, %v3896
    %v3961 = vmul.f32 %v3897, %v3897
    %v3962 = vmul.f32 %v3898, %v3898
    %v3963 = vmul.f32 %v3899, %v3899
    %v3964 = vmul.f32 %v3900, %v3900
    %v3965 = vmul.f32 %v3901, %v3901
    %v3966 = vmul.f32 %v3902, %v3902
    %v3967 = vmul.f32 %v3903, %v3903
    %v3968 = vmul.f32 %v3904, %v3904
    %v3969 = vmul.f32 %v3905, %v3905
    %v3970 = vmul.f32 %v3906, %v3906
    %v3971 = vmul.f32 %v3907, %v3907
    %v3972 = vmul.f32 %v3908, %v3908
    %v3973 = vmul.f32 %v3909, %v3909
    %v3974 = vmul.f32 %v3910, %v3910
    %v3975 = vmul.f32 %v3911, %v3911
    %v3976 = vmul.f32 %v3912, %v3912
    %v3977 = vmul.f32 %v3913, %v3913
    %v3978 = vmul.f32 %v3914, %v3914
    %v3979 = vmul.f32 %v3915, %v3915
    %v3980 = vmul.f32 %v3916, %v3916
    %v3981 = vmul.f32 %v3917, %v3917
    %v3982 = vmul.f32 %v3918, %v3918
    %v3983 = vmul.f32 %v3919, %v3919
    %v3984 = vmul.f32 %v3920, %v3920
    %v3985 = vmul.f32 %v3921, %v3921
    %v3986 = vmul.f32 %v3922, %v3922
    %v3987 = vmul.f32 %v3923, %v3923
    %v3988 = vmul.f32 %v3924, %v3924
    %v3989 = vmul.f32 %v3925, %v3925
    %v3990 = vmul.f32 %v3926, %v3926
    %v3991 = vmul.f32 %v3927, %v3927
    %v3992 = vmul.f32 %v3928, %v3928
    %v3993 = vmul.f32 %v3929, %v3929
    %v3994 = vmul.f32 %v3930, %v3930
    %v3995 = vmul.f32 %v3931, %v3931
    %v3996 = vmul.f32 %v3932, %v3932
    %v3997 = vmul.f32 %v3933, %v3933
    %v3998 = vmul.f32 %v3934, %v3934
    %v3999 = vmul.f32 %v3935, %v3935
    %v4000 = vmul.f32 %v3936, %v3936
    %v4001 = vmul.f32 %v3937, %v3937
    %v4002 = vmul.f32 %v3938, %v3938
    %v4003 = vmul.f32 %v3939, %v3939
    %v4004 = vmul.f32 %v3940, %v3940
    %v4005 = vmul.f32 %v3941, %v3941
    %v4006 = vmul.f32 %v3942, %v3942
    %v4007 = vmul.f32 %v3943, %v3943
    %v4008 = vmul.f32 %v3944, %v3944
    %v4009 = vmul.f32 %v3945, %v3945
    %4011 = vset.pattern.permute.xlu0 0
    %4012 = vperm.xlu0 %4011, %v3946
    %v4013 = vpop.permute.xlu0 %4012
    %4016 = vset.pattern.permute.xlu0 0
    %4017 = vperm.xlu0 %4016, %v3947
    %v4018 = vpop.permute.xlu0 %4017
    %4021 = vset.pattern.permute.xlu0 0
    %4022 = vperm.xlu0 %4021, %v3948
    %v4023 = vpop.permute.xlu0 %4022
    %4026 = vset.pattern.permute.xlu0 0
    %4027 = vperm.xlu0 %4026, %v3949
    %v4028 = vpop.permute.xlu0 %4027
    %4031 = vset.pattern.permute.xlu0 0
    %4032 = vperm.xlu0 %4031, %v3950
    %v4033 = vpop.permute.xlu0 %4032
    %4036 = vset.pattern.permute.xlu0 0
    %4037 = vperm.xlu0 %4036, %v3951
    %v4038 = vpop.permute.xlu0 %4037
    %4041 = vset.pattern.permute.xlu0 0
    %4042 = vperm.xlu0 %4041, %v3952
    %v4043 = vpop.permute.xlu0 %4042
    %4046 = vset.pattern.permute.xlu0 0
    %4047 = vperm.xlu0 %4046, %v3953
    %v4048 = vpop.permute.xlu0 %4047
    %4051 = vset.pattern.permute.xlu0 0
    %4052 = vperm.xlu0 %4051, %v3954
    %v4053 = vpop.permute.xlu0 %4052
    %4056 = vset.pattern.permute.xlu0 0
    %4057 = vperm.xlu0 %4056, %v3955
    %v4058 = vpop.permute.xlu0 %4057
    %4061 = vset.pattern.permute.xlu0 0
    %4062 = vperm.xlu0 %4061, %v3956
    %v4063 = vpop.permute.xlu0 %4062
    %4066 = vset.pattern.permute.xlu0 0
    %4067 = vperm.xlu0 %4066, %v3957
    %v4068 = vpop.permute.xlu0 %4067
    %4071 = vset.pattern.permute.xlu0 0
    %4072 = vperm.xlu0 %4071, %v3958
    %v4073 = vpop.permute.xlu0 %4072
    %4076 = vset.pattern.permute.xlu0 0
    %4077 = vperm.xlu0 %4076, %v3959
    %v4078 = vpop.permute.xlu0 %4077
    %4081 = vset.pattern.permute.xlu0 0
    %4082 = vperm.xlu0 %4081, %v3960
    %v4083 = vpop.permute.xlu0 %4082
    %4086 = vset.pattern.permute.xlu0 0
    %4087 = vperm.xlu0 %4086, %v3961
    %v4088 = vpop.permute.xlu0 %4087
    %4091 = vset.pattern.permute.xlu0 0
    %4092 = vperm.xlu0 %4091, %v3962
    %v4093 = vpop.permute.xlu0 %4092
    %4096 = vset.pattern.permute.xlu0 0
    %4097 = vperm.xlu0 %4096, %v3963
    %v4098 = vpop.permute.xlu0 %4097
    %4101 = vset.pattern.permute.xlu0 0
    %4102 = vperm.xlu0 %4101, %v3964
    %v4103 = vpop.permute.xlu0 %4102
    %4106 = vset.pattern.permute.xlu0 0
    %4107 = vperm.xlu0 %4106, %v3965
    %v4108 = vpop.permute.xlu0 %4107
    %4111 = vset.pattern.permute.xlu0 0
    %4112 = vperm.xlu0 %4111, %v3966
    %v4113 = vpop.permute.xlu0 %4112
    %4116 = vset.pattern.permute.xlu0 0
    %4117 = vperm.xlu0 %4116, %v3967
    %v4118 = vpop.permute.xlu0 %4117
    %4121 = vset.pattern.permute.xlu0 0
    %4122 = vperm.xlu0 %4121, %v3968
    %v4123 = vpop.permute.xlu0 %4122
    %4126 = vset.pattern.permute.xlu0 0
    %4127 = vperm.xlu0 %4126, %v3969
    %v4128 = vpop.permute.xlu0 %4127
    %4131 = vset.pattern.permute.xlu0 0
    %4132 = vperm.xlu0 %4131, %v3970
    %v4133 = vpop.permute.xlu0 %4132
    %4136 = vset.pattern.permute.xlu0 0
    %4137 = vperm.xlu0 %4136, %v3971
    %v4138 = vpop.permute.xlu0 %4137
    %4141 = vset.pattern.permute.xlu0 0
    %4142 = vperm.xlu0 %4141, %v3972
    %v4143 = vpop.permute.xlu0 %4142
    %4146 = vset.pattern.permute.xlu0 0
    %4147 = vperm.xlu0 %4146, %v3973
    %v4148 = vpop.permute.xlu0 %4147
    %4151 = vset.pattern.permute.xlu0 0
    %4152 = vperm.xlu0 %4151, %v3974
    %v4153 = vpop.permute.xlu0 %4152
    %4156 = vset.pattern.permute.xlu0 0
    %4157 = vperm.xlu0 %4156, %v3975
    %v4158 = vpop.permute.xlu0 %4157
    %4161 = vset.pattern.permute.xlu0 0
    %4162 = vperm.xlu0 %4161, %v3976
    %v4163 = vpop.permute.xlu0 %4162
    %4166 = vset.pattern.permute.xlu0 0
    %4167 = vperm.xlu0 %4166, %v3977
    %v4168 = vpop.permute.xlu0 %4167
    %4171 = vset.pattern.permute.xlu0 0
    %4172 = vperm.xlu0 %4171, %v3978
    %v4173 = vpop.permute.xlu0 %4172
    %4176 = vset.pattern.permute.xlu0 0
    %4177 = vperm.xlu0 %4176, %v3979
    %v4178 = vpop.permute.xlu0 %4177
    %4181 = vset.pattern.permute.xlu0 0
    %4182 = vperm.xlu0 %4181, %v3980
    %v4183 = vpop.permute.xlu0 %4182
    %4186 = vset.pattern.permute.xlu0 0
    %4187 = vperm.xlu0 %4186, %v3981
    %v4188 = vpop.permute.xlu0 %4187
    %4191 = vset.pattern.permute.xlu0 0
    %4192 = vperm.xlu0 %4191, %v3982
    %v4193 = vpop.permute.xlu0 %4192
    %4196 = vset.pattern.permute.xlu0 0
    %4197 = vperm.xlu0 %4196, %v3983
    %v4198 = vpop.permute.xlu0 %4197
    %4201 = vset.pattern.permute.xlu0 0
    %4202 = vperm.xlu0 %4201, %v3984
    %v4203 = vpop.permute.xlu0 %4202
    %4206 = vset.pattern.permute.xlu0 0
    %4207 = vperm.xlu0 %4206, %v3985
    %v4208 = vpop.permute.xlu0 %4207
    %4211 = vset.pattern.permute.xlu0 0
    %4212 = vperm.xlu0 %4211, %v3986
    %v4213 = vpop.permute.xlu0 %4212
    %4216 = vset.pattern.permute.xlu0 0
    %4217 = vperm.xlu0 %4216, %v3987
    %v4218 = vpop.permute.xlu0 %4217
    %4221 = vset.pattern.permute.xlu0 0
    %4222 = vperm.xlu0 %4221, %v3988
    %v4223 = vpop.permute.xlu0 %4222
    %4226 = vset.pattern.permute.xlu0 0
    %4227 = vperm.xlu0 %4226, %v3989
    %v4228 = vpop.permute.xlu0 %4227
    %4231 = vset.pattern.permute.xlu0 0
    %4232 = vperm.xlu0 %4231, %v3990
    %v4233 = vpop.permute.xlu0 %4232
    %4236 = vset.pattern.permute.xlu0 0
    %4237 = vperm.xlu0 %4236, %v3991
    %v4238 = vpop.permute.xlu0 %4237
    %4241 = vset.pattern.permute.xlu0 0
    %4242 = vperm.xlu0 %4241, %v3992
    %v4243 = vpop.permute.xlu0 %4242
    %4246 = vset.pattern.permute.xlu0 0
    %4247 = vperm.xlu0 %4246, %v3993
    %v4248 = vpop.permute.xlu0 %4247
    %4251 = vset.pattern.permute.xlu0 0
    %4252 = vperm.xlu0 %4251, %v3994
    %v4253 = vpop.permute.xlu0 %4252
    %4256 = vset.pattern.permute.xlu0 0
    %4257 = vperm.xlu0 %4256, %v3995
    %v4258 = vpop.permute.xlu0 %4257
    %4261 = vset.pattern.permute.xlu0 0
    %4262 = vperm.xlu0 %4261, %v3996
    %v4263 = vpop.permute.xlu0 %4262
    %4266 = vset.pattern.permute.xlu0 0
    %4267 = vperm.xlu0 %4266, %v3997
    %v4268 = vpop.permute.xlu0 %4267
    %4271 = vset.pattern.permute.xlu0 0
    %4272 = vperm.xlu0 %4271, %v3998
    %v4273 = vpop.permute.xlu0 %4272
    %4276 = vset.pattern.permute.xlu0 0
    %4277 = vperm.xlu0 %4276, %v3999
    %v4278 = vpop.permute.xlu0 %4277
    %4281 = vset.pattern.permute.xlu0 0
    %4282 = vperm.xlu0 %4281, %v4000
    %v4283 = vpop.permute.xlu0 %4282
    %4286 = vset.pattern.permute.xlu0 0
    %4287 = vperm.xlu0 %4286, %v4001
    %v4288 = vpop.permute.xlu0 %4287
    %4291 = vset.pattern.permute.xlu0 0
    %4292 = vperm.xlu0 %4291, %v4002
    %v4293 = vpop.permute.xlu0 %4292
    %4296 = vset.pattern.permute.xlu0 0
    %4297 = vperm.xlu0 %4296, %v4003
    %v4298 = vpop.permute.xlu0 %4297
    %4301 = vset.pattern.permute.xlu0 0
    %4302 = vperm.xlu0 %4301, %v4004
    %v4303 = vpop.permute.xlu0 %4302
    %4306 = vset.pattern.permute.xlu0 0
    %4307 = vperm.xlu0 %4306, %v4005
    %v4308 = vpop.permute.xlu0 %4307
    %4311 = vset.pattern.permute.xlu0 0
    %4312 = vperm.xlu0 %4311, %v4006
    %v4313 = vpop.permute.xlu0 %4312
    %4316 = vset.pattern.permute.xlu0 0
    %4317 = vperm.xlu0 %4316, %v4007
    %v4318 = vpop.permute.xlu0 %4317
    %4321 = vset.pattern.permute.xlu0 0
    %4322 = vperm.xlu0 %4321, %v4008
    %v4323 = vpop.permute.xlu0 %4322
    %4326 = vset.pattern.permute.xlu0 0
    %4327 = vperm.xlu0 %4326, %v4009
    %v4328 = vpop.permute.xlu0 %4327
    %v4330 = vmul.f32 %v3454, %v4013
    %v4331 = vmul.f32 %v3455, %v4018
    %v4332 = vmul.f32 %v3456, %v4023
    %v4333 = vmul.f32 %v3457, %v4028
    %v4334 = vmul.f32 %v3458, %v4033
    %v4335 = vmul.f32 %v3459, %v4038
    %v4336 = vmul.f32 %v3460, %v4043
    %v4337 = vmul.f32 %v3461, %v4048
    %v4338 = vmul.f32 %v3462, %v4053
    %v4339 = vmul.f32 %v3463, %v4058
    %v4340 = vmul.f32 %v3464, %v4063
    %v4341 = vmul.f32 %v3465, %v4068
    %v4342 = vmul.f32 %v3466, %v4073
    %v4343 = vmul.f32 %v3467, %v4078
    %v4344 = vmul.f32 %v3468, %v4083
    %v4345 = vmul.f32 %v3469, %v4088
    %v4346 = vmul.f32 %v3470, %v4093
    %v4347 = vmul.f32 %v3471, %v4098
    %v4348 = vmul.f32 %v3472, %v4103
    %v4349 = vmul.f32 %v3473, %v4108
    %v4350 = vmul.f32 %v3474, %v4113
    %v4351 = vmul.f32 %v3475, %v4118
    %v4352 = vmul.f32 %v3476, %v4123
    %v4353 = vmul.f32 %v3477, %v4128
    %v4354 = vmul.f32 %v3478, %v4133
    %v4355 = vmul.f32 %v3479, %v4138
    %v4356 = vmul.f32 %v3480, %v4143
    %v4357 = vmul.f32 %v3481, %v4148
    %v4358 = vmul.f32 %v3482, %v4153
    %v4359 = vmul.f32 %v3483, %v4158
    %v4360 = vmul.f32 %v3484, %v4163
    %v4361 = vmul.f32 %v3485, %v4168
    %v4362 = vmul.f32 %v3486, %v4173
    %v4363 = vmul.f32 %v3487, %v4178
    %v4364 = vmul.f32 %v3488, %v4183
    %v4365 = vmul.f32 %v3489, %v4188
    %v4366 = vmul.f32 %v3490, %v4193
    %v4367 = vmul.f32 %v3491, %v4198
    %v4368 = vmul.f32 %v3492, %v4203
    %v4369 = vmul.f32 %v3493, %v4208
    %v4370 = vmul.f32 %v3494, %v4213
    %v4371 = vmul.f32 %v3495, %v4218
    %v4372 = vmul.f32 %v3496, %v4223
    %v4373 = vmul.f32 %v3497, %v4228
    %v4374 = vmul.f32 %v3498, %v4233
    %v4375 = vmul.f32 %v3499, %v4238
    %v4376 = vmul.f32 %v3500, %v4243
    %v4377 = vmul.f32 %v3501, %v4248
    %v4378 = vmul.f32 %v3502, %v4253
    %v4379 = vmul.f32 %v3503, %v4258
    %v4380 = vmul.f32 %v3504, %v4263
    %v4381 = vmul.f32 %v3505, %v4268
    %v4382 = vmul.f32 %v3506, %v4273
    %v4383 = vmul.f32 %v3507, %v4278
    %v4384 = vmul.f32 %v3508, %v4283
    %v4385 = vmul.f32 %v3509, %v4288
    %v4386 = vmul.f32 %v3510, %v4293
    %v4387 = vmul.f32 %v3511, %v4298
    %v4388 = vmul.f32 %v3512, %v4303
    %v4389 = vmul.f32 %v3513, %v4308
    %v4390 = vmul.f32 %v3514, %v4313
    %v4391 = vmul.f32 %v3515, %v4318
    %v4392 = vmul.f32 %v3516, %v4323
    %v4393 = vmul.f32 %v3517, %v4328
    %4394 = vst.msk [vmem:[#allocation2] sm:$0xff] %vm1526, %v4330
    %4395 = vst.msk [vmem:[#allocation2 + $0x8] sm:$0xff] %vm1526, %v4331
    %4396 = vst.msk [vmem:[#allocation2 + $0x10] sm:$0xff] %vm1526, %v4332
    %4397 = vst.msk [vmem:[#allocation2 + $0x18] sm:$0xff] %vm1526, %v4333
    %4398 = vst.msk [vmem:[#allocation2 + $0x20] sm:$0xff] %vm1526, %v4334
    %4399 = vst.msk [vmem:[#allocation2 + $0x28] sm:$0xff] %vm1526, %v4335
    %4400 = vst.msk [vmem:[#allocation2 + $0x30] sm:$0xff] %vm1526, %v4336
    %4401 = vst.msk [vmem:[#allocation2 + $0x38] sm:$0xff] %vm1526, %v4337
    %4402 = vst.msk [vmem:[#allocation2 + $0x40] sm:$0xff] %vm1526, %v4338
    %4403 = vst.msk [vmem:[#allocation2 + $0x48] sm:$0xff] %vm1526, %v4339
    %4404 = vst.msk [vmem:[#allocation2 + $0x50] sm:$0xff] %vm1526, %v4340
    %4405 = vst.msk [vmem:[#allocation2 + $0x58] sm:$0xff] %vm1526, %v4341
    %4406 = vst.msk [vmem:[#allocation2 + $0x60] sm:$0xff] %vm1526, %v4342
    %4407 = vst.msk [vmem:[#allocation2 + $0x68] sm:$0xff] %vm1526, %v4343
    %4408 = vst.msk [vmem:[#allocation2 + $0x70] sm:$0xff] %vm1526, %v4344
    %4409 = vst.msk [vmem:[#allocation2 + $0x78] sm:$0xff] %vm1526, %v4345
    %4410 = vst.msk [vmem:[#allocation2 + $0x80] sm:$0xff] %vm1526, %v4346
    %4411 = vst.msk [vmem:[#allocation2 + $0x88] sm:$0xff] %vm1526, %v4347
    %4412 = vst.msk [vmem:[#allocation2 + $0x90] sm:$0xff] %vm1526, %v4348
    %4413 = vst.msk [vmem:[#allocation2 + $0x98] sm:$0xff] %vm1526, %v4349
    %4414 = vst.msk [vmem:[#allocation2 + $0xa0] sm:$0xff] %vm1526, %v4350
    %4415 = vst.msk [vmem:[#allocation2 + $0xa8] sm:$0xff] %vm1526, %v4351
    %4416 = vst.msk [vmem:[#allocation2 + $0xb0] sm:$0xff] %vm1526, %v4352
    %4417 = vst.msk [vmem:[#allocation2 + $0xb8] sm:$0xff] %vm1526, %v4353
    %4418 = vst.msk [vmem:[#allocation2 + $0xc0] sm:$0xff] %vm1526, %v4354
    %4419 = vst.msk [vmem:[#allocation2 + $0xc8] sm:$0xff] %vm1526, %v4355
    %4420 = vst.msk [vmem:[#allocation2 + $0xd0] sm:$0xff] %vm1526, %v4356
    %4421 = vst.msk [vmem:[#allocation2 + $0xd8] sm:$0xff] %vm1526, %v4357
    %4422 = vst.msk [vmem:[#allocation2 + $0xe0] sm:$0xff] %vm1526, %v4358
    %4423 = vst.msk [vmem:[#allocation2 + $0xe8] sm:$0xff] %vm1526, %v4359
    %4424 = vst.msk [vmem:[#allocation2 + $0xf0] sm:$0xff] %vm1526, %v4360
    %4425 = vst.msk [vmem:[#allocation2 + $0xf8] sm:$0xff] %vm1526, %v4361
    %4426 = vst.msk [vmem:[#allocation2 + $0x100] sm:$0xff] %vm1526, %v4362
    %4427 = vst.msk [vmem:[#allocation2 + $0x108] sm:$0xff] %vm1526, %v4363
    %4428 = vst.msk [vmem:[#allocation2 + $0x110] sm:$0xff] %vm1526, %v4364
    %4429 = vst.msk [vmem:[#allocation2 + $0x118] sm:$0xff] %vm1526, %v4365
    %4430 = vst.msk [vmem:[#allocation2 + $0x120] sm:$0xff] %vm1526, %v4366
    %4431 = vst.msk [vmem:[#allocation2 + $0x128] sm:$0xff] %vm1526, %v4367
    %4432 = vst.msk [vmem:[#allocation2 + $0x130] sm:$0xff] %vm1526, %v4368
    %4433 = vst.msk [vmem:[#allocation2 + $0x138] sm:$0xff] %vm1526, %v4369
    %4434 = vst.msk [vmem:[#allocation2 + $0x140] sm:$0xff] %vm1526, %v4370
    %4435 = vst.msk [vmem:[#allocation2 + $0x148] sm:$0xff] %vm1526, %v4371
    %4436 = vst.msk [vmem:[#allocation2 + $0x150] sm:$0xff] %vm1526, %v4372
    %4437 = vst.msk [vmem:[#allocation2 + $0x158] sm:$0xff] %vm1526, %v4373
    %4438 = vst.msk [vmem:[#allocation2 + $0x160] sm:$0xff] %vm1526, %v4374
    %4439 = vst.msk [vmem:[#allocation2 + $0x168] sm:$0xff] %vm1526, %v4375
    %4440 = vst.msk [vmem:[#allocation2 + $0x170] sm:$0xff] %vm1526, %v4376
    %4441 = vst.msk [vmem:[#allocation2 + $0x178] sm:$0xff] %vm1526, %v4377
    %4442 = vst.msk [vmem:[#allocation2 + $0x180] sm:$0xff] %vm1526, %v4378
    %4443 = vst.msk [vmem:[#allocation2 + $0x188] sm:$0xff] %vm1526, %v4379
    %4444 = vst.msk [vmem:[#allocation2 + $0x190] sm:$0xff] %vm1526, %v4380
    %4445 = vst.msk [vmem:[#allocation2 + $0x198] sm:$0xff] %vm1526, %v4381
    %4446 = vst.msk [vmem:[#allocation2 + $0x1a0] sm:$0xff] %vm1526, %v4382
    %4447 = vst.msk [vmem:[#allocation2 + $0x1a8] sm:$0xff] %vm1526, %v4383
    %4448 = vst.msk [vmem:[#allocation2 + $0x1b0] sm:$0xff] %vm1526, %v4384
    %4449 = vst.msk [vmem:[#allocation2 + $0x1b8] sm:$0xff] %vm1526, %v4385
    %4450 = vst.msk [vmem:[#allocation2 + $0x1c0] sm:$0xff] %vm1526, %v4386
    %4451 = vst.msk [vmem:[#allocation2 + $0x1c8] sm:$0xff] %vm1526, %v4387
    %4452 = vst.msk [vmem:[#allocation2 + $0x1d0] sm:$0xff] %vm1526, %v4388
    %4453 = vst.msk [vmem:[#allocation2 + $0x1d8] sm:$0xff] %vm1526, %v4389
    %4454 = vst.msk [vmem:[#allocation2 + $0x1e0] sm:$0xff] %vm1526, %v4390
    %4455 = vst.msk [vmem:[#allocation2 + $0x1e8] sm:$0xff] %vm1526, %v4391
    %4456 = vst.msk [vmem:[#allocation2 + $0x1f0] sm:$0xff] %vm1526, %v4392
    %4457 = vst.msk [vmem:[#allocation2 + $0x1f8] sm:$0xff] %vm1526, %v4393
    // Predicated region
    $region26: #{edge_embedder_forward.1} parent=1 // pred_check
      _
    $region27: #{edge_embedder_forward.1} parent=1 // pred_check_branch
      %4459 = sbr.rel (0) target = $region29
    $region28: #{edge_embedder_forward.1} parent=1 // pred_region
      %s4461 = ssub.s32 8192, 8192
      %4462 = vsyncadd [#allocation3], %s4461
      %s4463 = sshll.u32 [#allocation2], 4
      %s4464 = int_to_ptr.vmem [resolvable:$true] %s4463
      %4469 = dma.vmem_to_hbm [thread:$0]  %s4464, 8192, %s6, [#allocation3], 128, 128, 8
    $region29: #{edge_embedder_forward.1} parent=1 // pred_fallthru
      _
    // Predicated region
    $region30: #{edge_embedder_forward.1} parent=1 // pred_check
      _
    $region31: #{edge_embedder_forward.1} parent=1 // pred_check_branch
      %4471 = sbr.rel (0) target = $region33
    $region32: #{edge_embedder_forward.1} parent=1 // pred_region
      %4472 = dma.done [#allocation3], 8192
    $region33: #{edge_embedder_forward.1} parent=1 // pred_fallthru
      _
    %4473 = vsyncpa [#allocation3], 1

</llo_original>
